<compile_context>
chip_gen: v5e
topology: v5e:2x2
jax: 0.10.0
libtpu: 0.0.40
codegen_flags: <defaults>
</compile_context>

<pallas_src>
import math

import jax
import jax.numpy as jnp
from jax.experimental import pallas as pl
from jax.experimental.pallas import tpu as pltpu

NODE_F = 3
EMB = 128
HEADS = 8
HEAD_DIM = EMB // HEADS
LAYERS = 3
FF = 512
DEC_SIZES = (64, 32)        # NetworkII passes linear_layers_size=[64, 32]

NEG_SLOPE = 0.2             # GATConv default negative_slope
BN_EPS = 1e-5               # BatchNorm1d default eps
MASK_NEG = -1e30            # finite mask bias (self-loops guarantee >=1 valid src)


# ----------------------------- shared math ---------------------------------

def _bn_train(z, gamma, beta):
    """BatchNorm1d, training-mode batch statistics (biased variance)."""
    mean = jnp.mean(z, axis=0, keepdims=True)
    var = jnp.mean(jnp.square(z - mean), axis=0, keepdims=True)
    return gamma * (z - mean) * jax.lax.rsqrt(var + BN_EPS) + beta


# ----------------------------- fused kernel --------------------------------

def _fused_kernel(x0_ref, adjb_ref, emb_w_ref, emb_b_ref,
                  gat_w_ref, att_ref, gat_b_ref,
                  bn1g_ref, bn1b_ref,
                  w1_ref, b1_ref, w2_ref, b2_ref,
                  bn2g_ref, bn2b_ref,
                  dg0_ref, db0_ref, dw0_ref, dbias0_ref,
                  dg1_ref, db1_ref, dw1_ref, dbias1_ref,
                  dg2_ref, db2_ref, dw2row_ref, dbias2_ref,
                  o_ref, x_vmem):
    l = pl.program_id(0)

    # ---- layer 0: embedding Linear(3 -> 128); x stays resident in VMEM -----
    @pl.when(l == 0)
    def _():
        x_vmem[...] = (jnp.dot(x0_ref[...], emb_w_ref[...],
                               preferred_element_type=jnp.float32)
                       + emb_b_ref[...])

    x = x_vmem[...]                                              # [N,128] f32

    # ------------------ GATConv (dense adjacency, batched heads) ------------
    xw = jnp.dot(x.astype(jnp.bfloat16), gat_w_ref[...],
                 preferred_element_type=jnp.float32)             # [N,128]
    xw_bf = xw.astype(jnp.bfloat16)

    # scores[h, j]   = <att_src[h], xw[j, h*16:(h+1)*16]>   (rows 0..H-1)
    # scores[H+h, i] = <att_dst[h], xw[i, h*16:(h+1)*16]>   (rows H..2H-1)
    scores = jnp.einsum('he,ne->hn', att_ref[...], xw_bf,
                        preferred_element_type=jnp.float32)      # [2H, N] f32
    a_src = scores[:HEADS]                                       # [H, N]
    a_dst = scores[HEADS:]                                       # [H, N]

    # one batched softmax pass over all heads: e[h, dst, src]
    e = a_dst[:, :, None] + a_src[:, None, :]                    # [H, N, N]
    e = jnp.where(e > 0, e, NEG_SLOPE * e)                       # LeakyReLU(0.2)
    e = e + adjb_ref[...].astype(jnp.float32)[None, :, :]        # mask non-edges
    e = e - jnp.max(e, axis=-1, keepdims=True)
    p = jnp.exp(e)                                               # masked -> 0
    attn = p * pl.reciprocal(jnp.sum(p, axis=-1, keepdims=True), approx=True)
    attn_bf = attn.astype(jnp.bfloat16)                          # [H, N, N]

    # per-head aggregation matmuls; collect in registers, one lane-dense write
    head_outs = [
        jnp.dot(attn_bf[h], xw_bf[:, h * HEAD_DIM:(h + 1) * HEAD_DIM],
                preferred_element_type=jnp.float32)              # [N, 16]
        for h in range(HEADS)
    ]
    y = jnp.concatenate(head_outs, axis=-1) + gat_b_ref[...]     # [N, 128]

    # ---------------- residual + BatchNorm (training stats) -----------------
    z = _bn_train(x + y, bn1g_ref[...], bn1b_ref[...])

    # ---------------- feed-forward 128 -> 512 -> 128 + residual + BN --------
    h1 = jnp.dot(z.astype(jnp.bfloat16), w1_ref[...],
                 preferred_element_type=jnp.float32) + b1_ref[...]
    h1 = jnp.maximum(h1, 0.0)
    y2 = jnp.dot(h1.astype(jnp.bfloat16), w2_ref[...],
                 preferred_element_type=jnp.float32) + b2_ref[...]
    z2 = _bn_train(z + y2, bn2g_ref[...], bn2b_ref[...])

    x_vmem[...] = z2                      # carry to next layer (VMEM resident)

    # ---------------- decoder, fused into the last grid step ----------------
    @pl.when(l == LAYERS - 1)
    def _decoder():
        # option column already folded into dbias0 (constant col -> beta0[-1])
        d = _bn_train(z2, dg0_ref[...], db0_ref[...])
        d = jnp.dot(d.astype(jnp.bfloat16), dw0_ref[...],
                    preferred_element_type=jnp.float32) + dbias0_ref[...]
        d = jnp.maximum(d, 0.0)
        d = _bn_train(d, dg1_ref[...], db1_ref[...])
        d = jnp.dot(d.astype(jnp.bfloat16), dw1_ref[...],
                    preferred_element_type=jnp.float32) + dbias1_ref[...]
        d = jnp.maximum(d, 0.0)
        d = _bn_train(d, dg2_ref[...], db2_ref[...])
        # final linear has out_features=1: mul + lane reduce (avoid 1-lane MXU)
        q = jnp.sum(d * dw2row_ref[...], axis=-1, keepdims=True) + dbias2_ref[...]
        o_ref[...] = 1.0 / (1.0 + jnp.exp(-q))                   # sigmoid


# ----------------------------- wrappers ------------------------------------

def _full(shape):
    zeros = (0,) * len(shape)
    return pl.BlockSpec(shape, lambda l, _z=zeros: _z)


def _stk(shape):
    zeros = (0,) * len(shape)
    return pl.BlockSpec((None,) + shape, lambda l, _z=zeros: (l,) + _z)


def _att_matrix(att_src, att_dst):
    # A[h,    h*16:(h+1)*16] = att_src[h];  A[H+h, h*16:(h+1)*16] = att_dst[h]
    A = jnp.zeros((2 * HEADS, EMB), jnp.float32)
    for h in range(HEADS):
        A = A.at[h, h * HEAD_DIM:(h + 1) * HEAD_DIM].set(att_src[h])
        A = A.at[HEADS + h, h * HEAD_DIM:(h + 1) * HEAD_DIM].set(att_dst[h])
    return A


def build_adj_bias(edge_index, n):
    """0 / -1e30 mask (bf16). Build ONCE per graph and cache/reuse."""
    src, dst = edge_index[0], edge_index[1]
    adj = jnp.zeros((n, n), jnp.float32).at[dst, src].set(1.0)
    adj = adj.at[jnp.arange(n), jnp.arange(n)].set(1.0)          # add_self_loops
    return jnp.where(adj > 0, 0.0, MASK_NEG).astype(jnp.bfloat16)


def prepare_params(params):
    """One-time packing/casting of parameters into kernel-ready operands."""
    bf16 = jnp.bfloat16
    dec = params['dec']
    l0, l1 = DEC_SIZES

    out = {
        'emb_w': params['emb_w'],
        'emb_b': params['emb_b'].reshape(1, EMB),
        'gat_w': jnp.stack([g['w'] for g in params['gat']]).astype(bf16),
        'att':   jnp.stack([_att_matrix(g['att_src'], g['att_dst'])
                            for g in params['gat']]).astype(bf16),
        'gat_b': jnp.stack([g['bias'].reshape(1, EMB) for g in params['gat']]),
        'bn1g':  jnp.stack([params['bn'][2 * i]['gamma'].reshape(1, EMB) for i in range(LAYERS)]),
        'bn1b':  jnp.stack([params['bn'][2 * i]['beta'].reshape(1, EMB) for i in range(LAYERS)]),
        'ffw1':  jnp.stack([f['w1'] for f in params['ff']]).astype(bf16),
        'ffb1':  jnp.stack([f['b1'].reshape(1, FF) for f in params['ff']]),
        'ffw2':  jnp.stack([f['w2'] for f in params['ff']]).astype(bf16),
        'ffb2':  jnp.stack([f['b2'].reshape(1, EMB) for f in params['ff']]),
        'bn2g':  jnp.stack([params['bn'][2 * i + 1]['gamma'].reshape(1, EMB) for i in range(LAYERS)]),
        'bn2b':  jnp.stack([params['bn'][2 * i + 1]['beta'].reshape(1, EMB) for i in range(LAYERS)]),
        # decoder — constant option column folded (train-mode BN -> beta0[-1]):
        'dg0': dec['bn0']['gamma'][:EMB].reshape(1, EMB),
        'db0': dec['bn0']['beta'][:EMB].reshape(1, EMB),
        'dw0': dec['w0'][:EMB].astype(bf16),                            # [128,64]
        'dbias0': (dec['b0'] + dec['bn0']['beta'][EMB] * dec['w0'][EMB]).reshape(1, l0),
        'dg1': dec['bn1']['gamma'].reshape(1, l0),
        'db1': dec['bn1']['beta'].reshape(1, l0),
        'dw1': dec['w1'].astype(bf16),                                  # [64,32]
        'dbias1': dec['b1'].reshape(1, l1),
        'dg2': dec['bn2']['gamma'].reshape(1, l1),
        'db2': dec['bn2']['beta'].reshape(1, l1),
        'dw2row': dec['w2'].reshape(1, l1),                             # [1,32]
        'dbias2': dec['b2'].reshape(1, 1),
        'null_q': dec['null_q'],
    }
    return out


def network_forward(prep, x_nodes, option, adjb):
    # NOTE: `option` has no effect under training-mode BatchNorm (constant
    # column normalizes to exactly beta0[-1]); kept for API compatibility.
    del option
    n = x_nodes.shape[0]
    l0, l1 = DEC_SIZES

    in_specs = [
        _full((n, NODE_F)),                 # x0
        _full((n, n)),                      # adjacency bias (bf16, DMA'd once)
        _full((NODE_F, EMB)),               # emb_w
        _full((1, EMB)),                    # emb_b
        _stk((EMB, EMB)),                   # gat_w
        _stk((2 * HEADS, EMB)),             # att block matrix
        _stk((1, EMB)),                     # gat bias
        _stk((1, EMB)), _stk((1, EMB)),     # bn1 gamma / beta
        _stk((EMB, FF)),                    # ff w1
        _stk((1, FF)),                      # ff b1
        _stk((FF, EMB)),                    # ff w2
        _stk((1, EMB)),                     # ff b2
        _stk((1, EMB)), _stk((1, EMB)),     # bn2 gamma / beta
        _full((1, EMB)), _full((1, EMB)),   # decoder bn0 gamma / beta (128 cols)
        _full((EMB, l0)), _full((1, l0)),   # decoder w0 / bias0(eff)
        _full((1, l0)), _full((1, l0)),     # decoder bn1 gamma / beta
        _full((l0, l1)), _full((1, l1)),    # decoder w1 / bias1
        _full((1, l1)), _full((1, l1)),     # decoder bn2 gamma / beta
        _full((1, l1)), _full((1, 1)),      # decoder w2 row / bias2
    ]

    grid_spec = pltpu.PrefetchScalarGridSpec(
        num_scalar_prefetch=0,
        grid=(LAYERS,),
        in_specs=in_specs,
        out_specs=pl.BlockSpec((n, 1), lambda l: (0, 0)),
        scratch_shapes=[pltpu.VMEM((n, EMB), jnp.float32)],   # resident x
    )

    q_nodes = pl.pallas_call(
        _fused_kernel,
        out_shape=jax.ShapeDtypeStruct((n, 1), jnp.float32),
        grid_spec=grid_spec,
        compiler_params=pltpu.CompilerParams(
            dimension_semantics=("arbitrary",),               # sequential layer carry
            vmem_limit_bytes=32 * 1024 * 1024),               # explicit (v5e default 16 MiB)
    )(x_nodes, adjb, prep['emb_w'], prep['emb_b'],
      prep['gat_w'], prep['att'], prep['gat_b'],
      prep['bn1g'], prep['bn1b'],
      prep['ffw1'], prep['ffb1'], prep['ffw2'], prep['ffb2'],
      prep['bn2g'], prep['bn2b'],
      prep['dg0'], prep['db0'], prep['dw0'], prep['dbias0'],
      prep['dg1'], prep['db1'], prep['dw1'], prep['dbias1'],
      prep['dg2'], prep['db2'], prep['dw2row'], prep['dbias2'])

    q_null = jax.nn.sigmoid(prep['null_q']).reshape(-1)       # sigmoid(cat)==cat(sigmoid)
    return jnp.concatenate([q_nodes.reshape(-1), q_null], axis=0)   # [N+1]


# ----------------------------- parameters ----------------------------------

def _uniform(key, shape, bound):
    return jax.random.uniform(key, shape, jnp.float32, -bound, bound)


def _scale_noise(key, size):
    x = jax.random.normal(key, (size,), jnp.float32)
    return jnp.sign(x) * jnp.sqrt(jnp.abs(x))


def _noisy_linear(key, fan_in, fan_out, std_init=0.5):
    # training-mode NoisyLinear folded into effective dense weights ([in,out])
    k_w, k_b, k_in, k_out = jax.random.split(key, 4)
    mu_range = 1.0 / math.sqrt(fan_in)
    w_mu = _uniform(k_w, (fan_in, fan_out), mu_range)
    b_mu = _uniform(k_b, (fan_out,), mu_range)
    eps_in = _scale_noise(k_in, fan_in)
    eps_out = _scale_noise(k_out, fan_out)
    w_eff = w_mu + (std_init / math.sqrt(fan_in)) * jnp.outer(eps_in, eps_out)
    b_eff = b_mu + (std_init / math.sqrt(fan_out)) * eps_out
    return w_eff, b_eff


def init_params(key):
    ks = iter(jax.random.split(key, 64))
    p = {
        'emb_w': _uniform(next(ks), (NODE_F, EMB), 1.0 / math.sqrt(NODE_F)),
        'emb_b': _uniform(next(ks), (EMB,), 1.0 / math.sqrt(NODE_F)),
        'gat': [], 'ff': [], 'bn': [],
    }
    for _ in range(LAYERS):
        p['gat'].append({
            'w': _uniform(next(ks), (EMB, HEADS * HEAD_DIM), 1.0 / math.sqrt(EMB)),
            'att_src': _uniform(next(ks), (HEADS, HEAD_DIM), 1.0 / math.sqrt(HEAD_DIM)),
            'att_dst': _uniform(next(ks), (HEADS, HEAD_DIM), 1.0 / math.sqrt(HEAD_DIM)),
            'bias': _uniform(next(ks), (HEADS * HEAD_DIM,), 0.1),
        })
        p['ff'].append({
            'w1': _uniform(next(ks), (EMB, FF), 1.0 / math.sqrt(EMB)),
            'b1': _uniform(next(ks), (FF,), 1.0 / math.sqrt(EMB)),
            'w2': _uniform(next(ks), (FF, EMB), 1.0 / math.sqrt(FF)),
            'b2': _uniform(next(ks), (EMB,), 1.0 / math.sqrt(FF)),
        })
    for _ in range(2 * LAYERS):
        p['bn'].append({'gamma': jnp.ones((EMB,), jnp.float32),
                        'beta': jnp.zeros((EMB,), jnp.float32)})

    din, l0, l1 = EMB + 1, DEC_SIZES[0], DEC_SIZES[1]
    w1, b1 = _noisy_linear(next(ks), l0, l1)
    w2, b2 = _noisy_linear(next(ks), l1, 1)
    p['dec'] = {
        'bn0': {'gamma': jnp.ones((din,), jnp.float32), 'beta': jnp.zeros((din,), jnp.float32)},
        'bn1': {'gamma': jnp.ones((l0,), jnp.float32), 'beta': jnp.zeros((l0,), jnp.float32)},
        'bn2': {'gamma': jnp.ones((l1,), jnp.float32), 'beta': jnp.zeros((l1,), jnp.float32)},
        'w0': _uniform(next(ks), (din, l0), 1.0 / math.sqrt(din)),
        'b0': _uniform(next(ks), (l0,), 1.0 / math.sqrt(din)),
        'w1': w1, 'b1': b1,
        'w2': w2, 'b2': b2,
        'null_q': jax.random.uniform(next(ks), (1, 1), jnp.float32, 0.0, 1.0),
    }
    return p


# ----------------------------- main -----------------------------------------

if __name__ == "__main__":
    key = jax.random.PRNGKey(0)
    k_param, k_x, k_opt = jax.random.split(key, 3)

    N = 16
    params = init_params(k_param)
    prep = prepare_params(params)                              # packed once
    x_ = jax.random.normal(k_x, (N, NODE_F), jnp.float32)
    option = jax.random.normal(k_opt, (1,), jnp.float32)

    # deterministic duplicate-free ring graph (both directions), no self-loops
    idx = jnp.arange(N, dtype=jnp.int32)
    src = jnp.concatenate([idx, (idx + 1) % N])
    dst = jnp.concatenate([(idx + 1) % N, idx])
    edge_index = jnp.stack([src, dst], axis=0)                 # [2, 32]

    adjb = build_adj_bias(edge_index, N)                       # once per graph

    fwd = jax.jit(network_forward)
    out = jax.block_until_ready(fwd(prep, x_, option, adjb))

    assert out.shape == (N + 1,)
    assert bool(jnp.all(jnp.isfinite(out)))
    assert bool(jnp.all((out >= 0.0) & (out <= 1.0)))          # sigmoid outputs
    print("KERNEL_OK")
</pallas_src>

<mosaic_0001>
module attributes {stable_mosaic.version = 11 : i64} {
  func.func @_fused_kernel(%arg0: i32, %arg1: memref<16x3xf32, #tpu.memory_space<vmem>>, %arg2: memref<16x16xbf16, #tpu.memory_space<vmem>>, %arg3: memref<3x128xf32, #tpu.memory_space<vmem>>, %arg4: memref<1x128xf32, #tpu.memory_space<vmem>>, %arg5: memref<1x128x128xbf16, #tpu.memory_space<vmem>>, %arg6: memref<1x16x128xbf16, #tpu.memory_space<vmem>>, %arg7: memref<1x1x128xf32, #tpu.memory_space<vmem>>, %arg8: memref<1x1x128xf32, #tpu.memory_space<vmem>>, %arg9: memref<1x1x128xf32, #tpu.memory_space<vmem>>, %arg10: memref<1x128x512xbf16, #tpu.memory_space<vmem>>, %arg11: memref<1x1x512xf32, #tpu.memory_space<vmem>>, %arg12: memref<1x512x128xbf16, #tpu.memory_space<vmem>>, %arg13: memref<1x1x128xf32, #tpu.memory_space<vmem>>, %arg14: memref<1x1x128xf32, #tpu.memory_space<vmem>>, %arg15: memref<1x1x128xf32, #tpu.memory_space<vmem>>, %arg16: memref<1x128xf32, #tpu.memory_space<vmem>>, %arg17: memref<1x128xf32, #tpu.memory_space<vmem>>, %arg18: memref<128x64xbf16, #tpu.memory_space<vmem>>, %arg19: memref<1x64xf32, #tpu.memory_space<vmem>>, %arg20: memref<1x64xf32, #tpu.memory_space<vmem>>, %arg21: memref<1x64xf32, #tpu.memory_space<vmem>>, %arg22: memref<64x32xbf16, #tpu.memory_space<vmem>>, %arg23: memref<1x32xf32, #tpu.memory_space<vmem>>, %arg24: memref<1x32xf32, #tpu.memory_space<vmem>>, %arg25: memref<1x32xf32, #tpu.memory_space<vmem>>, %arg26: memref<1x32xf32, #tpu.memory_space<vmem>>, %arg27: memref<1x1xf32, #tpu.memory_space<vmem>>, %arg28: memref<16x1xf32, #tpu.memory_space<vmem>>, %arg29: memref<16x128xf32, #tpu.memory_space<vmem>>) attributes {dimension_semantics = [#tpu.dimension_semantics<arbitrary>], iteration_bounds = array<i64: 3>, scalar_prefetch = 0 : i64, scratch_operands = 1 : i64, tpu.core_type = #tpu.core_type<tc>, window_params = [{pipeline_mode = #tpu.pipeline_mode<synchronous>, transform_indices = @transform_0, window_bounds = array<i64: 16, 3>}, {pipeline_mode = #tpu.pipeline_mode<synchronous>, transform_indices = @transform_1, window_bounds = array<i64: 16, 16>}, {pipeline_mode = #tpu.pipeline_mode<synchronous>, transform_indices = @transform_2, window_bounds = array<i64: 3, 128>}, {pipeline_mode = #tpu.pipeline_mode<synchronous>, transform_indices = @transform_3, window_bounds = array<i64: 1, 128>}, {transform_indices = @transform_4, window_bounds = array<i64: 1, 128, 128>}, {transform_indices = @transform_5, window_bounds = array<i64: 1, 16, 128>}, {transform_indices = @transform_6, window_bounds = array<i64: 1, 1, 128>}, {transform_indices = @transform_7, window_bounds = array<i64: 1, 1, 128>}, {transform_indices = @transform_8, window_bounds = array<i64: 1, 1, 128>}, {transform_indices = @transform_9, window_bounds = array<i64: 1, 128, 512>}, {transform_indices = @transform_10, window_bounds = array<i64: 1, 1, 512>}, {transform_indices = @transform_11, window_bounds = array<i64: 1, 512, 128>}, {transform_indices = @transform_12, window_bounds = array<i64: 1, 1, 128>}, {transform_indices = @transform_13, window_bounds = array<i64: 1, 1, 128>}, {transform_indices = @transform_14, window_bounds = array<i64: 1, 1, 128>}, {pipeline_mode = #tpu.pipeline_mode<synchronous>, transform_indices = @transform_15, window_bounds = array<i64: 1, 128>}, {pipeline_mode = #tpu.pipeline_mode<synchronous>, transform_indices = @transform_16, window_bounds = array<i64: 1, 128>}, {pipeline_mode = #tpu.pipeline_mode<synchronous>, transform_indices = @transform_17, window_bounds = array<i64: 128, 64>}, {pipeline_mode = #tpu.pipeline_mode<synchronous>, transform_indices = @transform_18, window_bounds = array<i64: 1, 64>}, {pipeline_mode = #tpu.pipeline_mode<synchronous>, transform_indices = @transform_19, window_bounds = array<i64: 1, 64>}, {pipeline_mode = #tpu.pipeline_mode<synchronous>, transform_indices = @transform_20, window_bounds = array<i64: 1, 64>}, {pipeline_mode = #tpu.pipeline_mode<synchronous>, transform_indices = @transform_21, window_bounds = array<i64: 64, 32>}, {pipeline_mode = #tpu.pipeline_mode<synchronous>, transform_indices = @transform_22, window_bounds = array<i64: 1, 32>}, {pipeline_mode = #tpu.pipeline_mode<synchronous>, transform_indices = @transform_23, window_bounds = array<i64: 1, 32>}, {pipeline_mode = #tpu.pipeline_mode<synchronous>, transform_indices = @transform_24, window_bounds = array<i64: 1, 32>}, {pipeline_mode = #tpu.pipeline_mode<synchronous>, transform_indices = @transform_25, window_bounds = array<i64: 1, 32>}, {pipeline_mode = #tpu.pipeline_mode<synchronous>, transform_indices = @transform_26, window_bounds = array<i64: 1, 1>}, {pipeline_mode = #tpu.pipeline_mode<synchronous>, transform_indices = @transform_27, window_bounds = array<i64: 16, 1>}]} {
    %c0_i32 = arith.constant 0 : i32
    %0 = arith.cmpi eq, %arg0, %c0_i32 : i32
    %1 = arith.extui %0 : i1 to i32
    %c0_i32_0 = arith.constant 0 : i32
    %2 = arith.cmpi ne, %1, %c0_i32_0 : i32
    scf.if %2 {
      %c0_66 = arith.constant 0 : index
      %c0_67 = arith.constant 0 : index
      %153 = vector.load %arg1[%c0_66, %c0_67] : memref<16x3xf32, #tpu.memory_space<vmem>>, vector<16x3xf32>
      %c0_68 = arith.constant 0 : index
      %c0_69 = arith.constant 0 : index
      %154 = vector.load %arg3[%c0_68, %c0_69] : memref<3x128xf32, #tpu.memory_space<vmem>>, vector<3x128xf32>
      %cst_70 = arith.constant dense<0.000000e+00> : vector<16x128xf32>
      %155 = tpu.matmul %153, %154, %cst_70 {dimension_numbers = #tpu.dot_dimension_numbers<[1], [0], [0], [1], [0, 0, 1, 1], [], []>} : vector<16x3xf32>, vector<3x128xf32>, vector<16x128xf32> -> vector<16x128xf32>
      %c0_71 = arith.constant 0 : index
      %c0_72 = arith.constant 0 : index
      %156 = vector.load %arg4[%c0_71, %c0_72] : memref<1x128xf32, #tpu.memory_space<vmem>>, vector<1x128xf32>
      %157 = vector.broadcast %156 : vector<1x128xf32> to vector<16x128xf32>
      %158 = arith.addf %155, %157 : vector<16x128xf32>
      %c0_73 = arith.constant 0 : index
      %c0_74 = arith.constant 0 : index
      %159 = vector.load %arg29[%c0_73, %c0_74] : memref<16x128xf32, #tpu.memory_space<vmem>>, vector<16x128xf32>
      tpu.vector_store %arg29[%c0_73, %c0_74], %158 {strides = array<i32>} : memref<16x128xf32, #tpu.memory_space<vmem>>, vector<16x128xf32>,
    } else {
    }
    %c0 = arith.constant 0 : index
    %c0_1 = arith.constant 0 : index
    %3 = vector.load %arg29[%c0, %c0_1] : memref<16x128xf32, #tpu.memory_space<vmem>>, vector<16x128xf32>
    %4 = arith.truncf %3 : vector<16x128xf32> to vector<16x128xbf16>
    %c0_2 = arith.constant 0 : index
    %c0_3 = arith.constant 0 : index
    %c0_4 = arith.constant 0 : index
    %5 = vector.load %arg5[%c0_2, %c0_3, %c0_4] : memref<1x128x128xbf16, #tpu.memory_space<vmem>>, vector<1x128x128xbf16>
    %6 = vector.shape_cast %5 : vector<1x128x128xbf16> to vector<128x128xbf16>
    %cst = arith.constant dense<0.000000e+00> : vector<16x128xf32>
    %7 = tpu.matmul %4, %6, %cst {dimension_numbers = #tpu.dot_dimension_numbers<[1], [0], [0], [1], [0, 0, 1, 1], [], []>} : vector<16x128xbf16>, vector<128x128xbf16>, vector<16x128xf32> -> vector<16x128xf32>
    %8 = arith.truncf %7 : vector<16x128xf32> to vector<16x128xbf16>
    %c0_5 = arith.constant 0 : index
    %c0_6 = arith.constant 0 : index
    %c0_7 = arith.constant 0 : index
    %9 = vector.load %arg6[%c0_5, %c0_6, %c0_7] : memref<1x16x128xbf16, #tpu.memory_space<vmem>>, vector<1x16x128xbf16>
    %10 = vector.shape_cast %9 : vector<1x16x128xbf16> to vector<16x128xbf16>
    "tpu.trace_start"() <{level = 10 : i32, message = "he,ne->hn"}> : () -> ()
    %cst_8 = arith.constant dense<0.000000e+00> : vector<16x16xf32>
    %11 = tpu.matmul %10, %8, %cst_8 {dimension_numbers = #tpu.dot_dimension_numbers<[1], [1], [0], [0], [0, 0, 1, 0], [], []>} : vector<16x128xbf16>, vector<16x128xbf16>, vector<16x16xf32> -> vector<16x16xf32>
    "tpu.trace_stop"() : () -> ()
    %12 = vector.extract_strided_slice %11 {offsets = [0, 0], sizes = [8, 16], strides = [1, 1]} : vector<16x16xf32> to vector<8x16xf32>
    %13 = vector.extract_strided_slice %11 {offsets = [8, 0], sizes = [8, 16], strides = [1, 1]} : vector<16x16xf32> to vector<8x16xf32>
    %14 = vector.shape_cast %13 : vector<8x16xf32> to vector<8x16x1xf32>
    %15 = vector.shape_cast %12 : vector<8x16xf32> to vector<8x1x16xf32>
    %16 = vector.broadcast %14 : vector<8x16x1xf32> to vector<8x16x16xf32>
    %17 = vector.broadcast %15 : vector<8x1x16xf32> to vector<8x16x16xf32>
    %18 = arith.addf %16, %17 : vector<8x16x16xf32>
    %cst_9 = arith.constant 0.000000e+00 : f32
    %19 = vector.broadcast %cst_9 : f32 to vector<8x16x16xf32>
    %20 = arith.cmpf ogt, %18, %19 : vector<8x16x16xf32>
    %cst_10 = arith.constant 2.000000e-01 : f32
    %21 = vector.broadcast %cst_10 : f32 to vector<8x16x16xf32>
    %22 = arith.mulf %21, %18 : vector<8x16x16xf32>
    %23 = arith.select %20, %18, %22 : vector<8x16x16xi1>, vector<8x16x16xf32>
    %c0_11 = arith.constant 0 : index
    %c0_12 = arith.constant 0 : index
    %24 = vector.load %arg2[%c0_11, %c0_12] : memref<16x16xbf16, #tpu.memory_space<vmem>>, vector<16x16xbf16>
    %25 = arith.extf %24 : vector<16x16xbf16> to vector<16x16xf32>
    %26 = vector.shape_cast %25 : vector<16x16xf32> to vector<1x16x16xf32>
    %27 = vector.broadcast %26 : vector<1x16x16xf32> to vector<8x16x16xf32>
    %28 = arith.addf %23, %27 : vector<8x16x16xf32>
    %cst_13 = arith.constant dense<0xFF800000> : vector<8x16xf32>
    %29 = vector.multi_reduction <maximumf>, %28, %cst_13 [2] : vector<8x16x16xf32> to vector<8x16xf32>
    %30 = vector.shape_cast %29 : vector<8x16xf32> to vector<8x16x1xf32>
    %31 = vector.broadcast %30 : vector<8x16x1xf32> to vector<8x16x16xf32>
    %32 = arith.subf %28, %31 : vector<8x16x16xf32>
    %33 = math.exp %32 : vector<8x16x16xf32>
    %cst_14 = arith.constant dense<0.000000e+00> : vector<8x16xf32>
    %34 = vector.multi_reduction <add>, %33, %cst_14 [2] : vector<8x16x16xf32> to vector<8x16xf32>
    %35 = vector.shape_cast %34 : vector<8x16xf32> to vector<8x16x1xf32>
    %36 = tpu.reciprocal %35 {approx = true} : vector<8x16x1xf32> -> vector<8x16x1xf32>
    %37 = vector.broadcast %36 : vector<8x16x1xf32> to vector<8x16x16xf32>
    %38 = arith.mulf %33, %37 : vector<8x16x16xf32>
    %39 = arith.truncf %38 : vector<8x16x16xf32> to vector<8x16x16xbf16>
    %40 = vector.extract_strided_slice %39 {offsets = [0, 0, 0], sizes = [1, 16, 16], strides = [1, 1, 1]} : vector<8x16x16xbf16> to vector<1x16x16xbf16>
    %41 = vector.shape_cast %40 : vector<1x16x16xbf16> to vector<16x16xbf16>
    %42 = vector.extract_strided_slice %8 {offsets = [0, 0], sizes = [16, 16], strides = [1, 1]} : vector<16x128xbf16> to vector<16x16xbf16>
    %cst_15 = arith.constant dense<0.000000e+00> : vector<16x16xf32>
    %43 = tpu.matmul %41, %42, %cst_15 {dimension_numbers = #tpu.dot_dimension_numbers<[1], [0], [0], [1], [0, 0, 1, 1], [], []>} : vector<16x16xbf16>, vector<16x16xbf16>, vector<16x16xf32> -> vector<16x16xf32>
    %44 = vector.extract_strided_slice %39 {offsets = [1, 0, 0], sizes = [1, 16, 16], strides = [1, 1, 1]} : vector<8x16x16xbf16> to vector<1x16x16xbf16>
    %45 = vector.shape_cast %44 : vector<1x16x16xbf16> to vector<16x16xbf16>
    %46 = vector.extract_strided_slice %8 {offsets = [0, 16], sizes = [16, 16], strides = [1, 1]} : vector<16x128xbf16> to vector<16x16xbf16>
    %cst_16 = arith.constant dense<0.000000e+00> : vector<16x16xf32>
    %47 = tpu.matmul %45, %46, %cst_16 {dimension_numbers = #tpu.dot_dimension_numbers<[1], [0], [0], [1], [0, 0, 1, 1], [], []>} : vector<16x16xbf16>, vector<16x16xbf16>, vector<16x16xf32> -> vector<16x16xf32>
    %48 = vector.extract_strided_slice %39 {offsets = [2, 0, 0], sizes = [1, 16, 16], strides = [1, 1, 1]} : vector<8x16x16xbf16> to vector<1x16x16xbf16>
    %49 = vector.shape_cast %48 : vector<1x16x16xbf16> to vector<16x16xbf16>
    %50 = vector.extract_strided_slice %8 {offsets = [0, 32], sizes = [16, 16], strides = [1, 1]} : vector<16x128xbf16> to vector<16x16xbf16>
    %cst_17 = arith.constant dense<0.000000e+00> : vector<16x16xf32>
    %51 = tpu.matmul %49, %50, %cst_17 {dimension_numbers = #tpu.dot_dimension_numbers<[1], [0], [0], [1], [0, 0, 1, 1], [], []>} : vector<16x16xbf16>, vector<16x16xbf16>, vector<16x16xf32> -> vector<16x16xf32>
    %52 = vector.extract_strided_slice %39 {offsets = [3, 0, 0], sizes = [1, 16, 16], strides = [1, 1, 1]} : vector<8x16x16xbf16> to vector<1x16x16xbf16>
    %53 = vector.shape_cast %52 : vector<1x16x16xbf16> to vector<16x16xbf16>
    %54 = vector.extract_strided_slice %8 {offsets = [0, 48], sizes = [16, 16], strides = [1, 1]} : vector<16x128xbf16> to vector<16x16xbf16>
    %cst_18 = arith.constant dense<0.000000e+00> : vector<16x16xf32>
    %55 = tpu.matmul %53, %54, %cst_18 {dimension_numbers = #tpu.dot_dimension_numbers<[1], [0], [0], [1], [0, 0, 1, 1], [], []>} : vector<16x16xbf16>, vector<16x16xbf16>, vector<16x16xf32> -> vector<16x16xf32>
    %56 = vector.extract_strided_slice %39 {offsets = [4, 0, 0], sizes = [1, 16, 16], strides = [1, 1, 1]} : vector<8x16x16xbf16> to vector<1x16x16xbf16>
    %57 = vector.shape_cast %56 : vector<1x16x16xbf16> to vector<16x16xbf16>
    %58 = vector.extract_strided_slice %8 {offsets = [0, 64], sizes = [16, 16], strides = [1, 1]} : vector<16x128xbf16> to vector<16x16xbf16>
    %cst_19 = arith.constant dense<0.000000e+00> : vector<16x16xf32>
    %59 = tpu.matmul %57, %58, %cst_19 {dimension_numbers = #tpu.dot_dimension_numbers<[1], [0], [0], [1], [0, 0, 1, 1], [], []>} : vector<16x16xbf16>, vector<16x16xbf16>, vector<16x16xf32> -> vector<16x16xf32>
    %60 = vector.extract_strided_slice %39 {offsets = [5, 0, 0], sizes = [1, 16, 16], strides = [1, 1, 1]} : vector<8x16x16xbf16> to vector<1x16x16xbf16>
    %61 = vector.shape_cast %60 : vector<1x16x16xbf16> to vector<16x16xbf16>
    %62 = vector.extract_strided_slice %8 {offsets = [0, 80], sizes = [16, 16], strides = [1, 1]} : vector<16x128xbf16> to vector<16x16xbf16>
    %cst_20 = arith.constant dense<0.000000e+00> : vector<16x16xf32>
    %63 = tpu.matmul %61, %62, %cst_20 {dimension_numbers = #tpu.dot_dimension_numbers<[1], [0], [0], [1], [0, 0, 1, 1], [], []>} : vector<16x16xbf16>, vector<16x16xbf16>, vector<16x16xf32> -> vector<16x16xf32>
    %64 = vector.extract_strided_slice %39 {offsets = [6, 0, 0], sizes = [1, 16, 16], strides = [1, 1, 1]} : vector<8x16x16xbf16> to vector<1x16x16xbf16>
    %65 = vector.shape_cast %64 : vector<1x16x16xbf16> to vector<16x16xbf16>
    %66 = vector.extract_strided_slice %8 {offsets = [0, 96], sizes = [16, 16], strides = [1, 1]} : vector<16x128xbf16> to vector<16x16xbf16>
    %cst_21 = arith.constant dense<0.000000e+00> : vector<16x16xf32>
    %67 = tpu.matmul %65, %66, %cst_21 {dimension_numbers = #tpu.dot_dimension_numbers<[1], [0], [0], [1], [0, 0, 1, 1], [], []>} : vector<16x16xbf16>, vector<16x16xbf16>, vector<16x16xf32> -> vector<16x16xf32>
    %68 = vector.extract_strided_slice %39 {offsets = [7, 0, 0], sizes = [1, 16, 16], strides = [1, 1, 1]} : vector<8x16x16xbf16> to vector<1x16x16xbf16>
    %69 = vector.shape_cast %68 : vector<1x16x16xbf16> to vector<16x16xbf16>
    %70 = vector.extract_strided_slice %8 {offsets = [0, 112], sizes = [16, 16], strides = [1, 1]} : vector<16x128xbf16> to vector<16x16xbf16>
    %cst_22 = arith.constant dense<0.000000e+00> : vector<16x16xf32>
    %71 = tpu.matmul %69, %70, %cst_22 {dimension_numbers = #tpu.dot_dimension_numbers<[1], [0], [0], [1], [0, 0, 1, 1], [], []>} : vector<16x16xbf16>, vector<16x16xbf16>, vector<16x16xf32> -> vector<16x16xf32>
    %72 = tpu.concatenate %43, %47, %51, %55, %59, %63, %67, %71 in 1 : vector<16x16xf32>, vector<16x16xf32>, vector<16x16xf32>, vector<16x16xf32>, vector<16x16xf32>, vector<16x16xf32>, vector<16x16xf32>, vector<16x16xf32> -> vector<16x128xf32>
    %c0_23 = arith.constant 0 : index
    %c0_24 = arith.constant 0 : index
    %c0_25 = arith.constant 0 : index
    %73 = vector.load %arg7[%c0_23, %c0_24, %c0_25] : memref<1x1x128xf32, #tpu.memory_space<vmem>>, vector<1x1x128xf32>
    %74 = vector.shape_cast %73 : vector<1x1x128xf32> to vector<1x128xf32>
    %75 = vector.broadcast %74 : vector<1x128xf32> to vector<16x128xf32>
    %76 = arith.addf %72, %75 : vector<16x128xf32>
    %77 = arith.addf %3, %76 : vector<16x128xf32>
    %c0_26 = arith.constant 0 : index
    %c0_27 = arith.constant 0 : index
    %c0_28 = arith.constant 0 : index
    %78 = vector.load %arg8[%c0_26, %c0_27, %c0_28] : memref<1x1x128xf32, #tpu.memory_space<vmem>>, vector<1x1x128xf32>
    %79 = vector.shape_cast %78 : vector<1x1x128xf32> to vector<1x128xf32>
    %c0_29 = arith.constant 0 : index
    %c0_30 = arith.constant 0 : index
    %c0_31 = arith.constant 0 : index
    %80 = vector.load %arg9[%c0_29, %c0_30, %c0_31] : memref<1x1x128xf32, #tpu.memory_space<vmem>>, vector<1x1x128xf32>
    %81 = vector.shape_cast %80 : vector<1x1x128xf32> to vector<1x128xf32>
    %cst_32 = arith.constant dense<0.000000e+00> : vector<128xf32>
    %82 = vector.multi_reduction <add>, %77, %cst_32 [0] : vector<16x128xf32> to vector<128xf32>
    %83 = vector.shape_cast %82 : vector<128xf32> to vector<1x128xf32>
    %cst_33 = arith.constant 1.600000e+01 : f32
    %84 = vector.broadcast %cst_33 : f32 to vector<1x128xf32>
    %85 = arith.divf %83, %84 : vector<1x128xf32>
    %86 = vector.broadcast %85 : vector<1x128xf32> to vector<16x128xf32>
    %87 = arith.subf %77, %86 : vector<16x128xf32>
    %88 = arith.mulf %87, %87 : vector<16x128xf32>
    %cst_34 = arith.constant dense<0.000000e+00> : vector<128xf32>
    %89 = vector.multi_reduction <add>, %88, %cst_34 [0] : vector<16x128xf32> to vector<128xf32>
    %90 = vector.shape_cast %89 : vector<128xf32> to vector<1x128xf32>
    %cst_35 = arith.constant 1.600000e+01 : f32
    %91 = vector.broadcast %cst_35 : f32 to vector<1x128xf32>
    %92 = arith.divf %90, %91 : vector<1x128xf32>
    %93 = vector.broadcast %85 : vector<1x128xf32> to vector<16x128xf32>
    %94 = arith.subf %77, %93 : vector<16x128xf32>
    %95 = vector.broadcast %79 : vector<1x128xf32> to vector<16x128xf32>
    %96 = arith.mulf %95, %94 : vector<16x128xf32>
    %cst_36 = arith.constant 9.99999974E-6 : f32
    %97 = vector.broadcast %cst_36 : f32 to vector<1x128xf32>
    %98 = arith.addf %92, %97 : vector<1x128xf32>
    %99 = math.rsqrt %98 : vector<1x128xf32>
    %100 = vector.broadcast %99 : vector<1x128xf32> to vector<16x128xf32>
    %101 = arith.mulf %96, %100 : vector<16x128xf32>
    %102 = vector.broadcast %81 : vector<1x128xf32> to vector<16x128xf32>
    %103 = arith.addf %101, %102 : vector<16x128xf32>
    %104 = arith.truncf %103 : vector<16x128xf32> to vector<16x128xbf16>
    %c0_37 = arith.constant 0 : index
    %c0_38 = arith.constant 0 : index
    %c0_39 = arith.constant 0 : index
    %105 = vector.load %arg10[%c0_37, %c0_38, %c0_39] : memref<1x128x512xbf16, #tpu.memory_space<vmem>>, vector<1x128x512xbf16>
    %106 = vector.shape_cast %105 : vector<1x128x512xbf16> to vector<128x512xbf16>
    %cst_40 = arith.constant dense<0.000000e+00> : vector<16x512xf32>
    %107 = tpu.matmul %104, %106, %cst_40 {dimension_numbers = #tpu.dot_dimension_numbers<[1], [0], [0], [1], [0, 0, 1, 1], [], []>} : vector<16x128xbf16>, vector<128x512xbf16>, vector<16x512xf32> -> vector<16x512xf32>
    %c0_41 = arith.constant 0 : index
    %c0_42 = arith.constant 0 : index
    %c0_43 = arith.constant 0 : index
    %108 = vector.load %arg11[%c0_41, %c0_42, %c0_43] : memref<1x1x512xf32, #tpu.memory_space<vmem>>, vector<1x1x512xf32>
    %109 = vector.shape_cast %108 : vector<1x1x512xf32> to vector<1x512xf32>
    %110 = vector.broadcast %109 : vector<1x512xf32> to vector<16x512xf32>
    %111 = arith.addf %107, %110 : vector<16x512xf32>
    %cst_44 = arith.constant 0.000000e+00 : f32
    %112 = vector.broadcast %cst_44 : f32 to vector<16x512xf32>
    %113 = arith.maximumf %111, %112 : vector<16x512xf32>
    %114 = arith.truncf %113 : vector<16x512xf32> to vector<16x512xbf16>
    %c0_45 = arith.constant 0 : index
    %c0_46 = arith.constant 0 : index
    %c0_47 = arith.constant 0 : index
    %115 = vector.load %arg12[%c0_45, %c0_46, %c0_47] : memref<1x512x128xbf16, #tpu.memory_space<vmem>>, vector<1x512x128xbf16>
    %116 = vector.shape_cast %115 : vector<1x512x128xbf16> to vector<512x128xbf16>
    %cst_48 = arith.constant dense<0.000000e+00> : vector<16x128xf32>
    %117 = tpu.matmul %114, %116, %cst_48 {dimension_numbers = #tpu.dot_dimension_numbers<[1], [0], [0], [1], [0, 0, 1, 1], [], []>} : vector<16x512xbf16>, vector<512x128xbf16>, vector<16x128xf32> -> vector<16x128xf32>
    %c0_49 = arith.constant 0 : index
    %c0_50 = arith.constant 0 : index
    %c0_51 = arith.constant 0 : index
    %118 = vector.load %arg13[%c0_49, %c0_50, %c0_51] : memref<1x1x128xf32, #tpu.memory_space<vmem>>, vector<1x1x128xf32>
    %119 = vector.shape_cast %118 : vector<1x1x128xf32> to vector<1x128xf32>
    %120 = vector.broadcast %119 : vector<1x128xf32> to vector<16x128xf32>
    %121 = arith.addf %117, %120 : vector<16x128xf32>
    %122 = arith.addf %103, %121 : vector<16x128xf32>
    %c0_52 = arith.constant 0 : index
    %c0_53 = arith.constant 0 : index
    %c0_54 = arith.constant 0 : index
    %123 = vector.load %arg14[%c0_52, %c0_53, %c0_54] : memref<1x1x128xf32, #tpu.memory_space<vmem>>, vector<1x1x128xf32>
    %124 = vector.shape_cast %123 : vector<1x1x128xf32> to vector<1x128xf32>
    %c0_55 = arith.constant 0 : index
    %c0_56 = arith.constant 0 : index
    %c0_57 = arith.constant 0 : index
    %125 = vector.load %arg15[%c0_55, %c0_56, %c0_57] : memref<1x1x128xf32, #tpu.memory_space<vmem>>, vector<1x1x128xf32>
    %126 = vector.shape_cast %125 : vector<1x1x128xf32> to vector<1x128xf32>
    %cst_58 = arith.constant dense<0.000000e+00> : vector<128xf32>
    %127 = vector.multi_reduction <add>, %122, %cst_58 [0] : vector<16x128xf32> to vector<128xf32>
    %128 = vector.shape_cast %127 : vector<128xf32> to vector<1x128xf32>
    %cst_59 = arith.constant 1.600000e+01 : f32
    %129 = vector.broadcast %cst_59 : f32 to vector<1x128xf32>
    %130 = arith.divf %128, %129 : vector<1x128xf32>
    %131 = vector.broadcast %130 : vector<1x128xf32> to vector<16x128xf32>
    %132 = arith.subf %122, %131 : vector<16x128xf32>
    %133 = arith.mulf %132, %132 : vector<16x128xf32>
    %cst_60 = arith.constant dense<0.000000e+00> : vector<128xf32>
    %134 = vector.multi_reduction <add>, %133, %cst_60 [0] : vector<16x128xf32> to vector<128xf32>
    %135 = vector.shape_cast %134 : vector<128xf32> to vector<1x128xf32>
    %cst_61 = arith.constant 1.600000e+01 : f32
    %136 = vector.broadcast %cst_61 : f32 to vector<1x128xf32>
    %137 = arith.divf %135, %136 : vector<1x128xf32>
    %138 = vector.broadcast %130 : vector<1x128xf32> to vector<16x128xf32>
    %139 = arith.subf %122, %138 : vector<16x128xf32>
    %140 = vector.broadcast %124 : vector<1x128xf32> to vector<16x128xf32>
    %141 = arith.mulf %140, %139 : vector<16x128xf32>
    %cst_62 = arith.constant 9.99999974E-6 : f32
    %142 = vector.broadcast %cst_62 : f32 to vector<1x128xf32>
    %143 = arith.addf %137, %142 : vector<1x128xf32>
    %144 = math.rsqrt %143 : vector<1x128xf32>
    %145 = vector.broadcast %144 : vector<1x128xf32> to vector<16x128xf32>
    %146 = arith.mulf %141, %145 : vector<16x128xf32>
    %147 = vector.broadcast %126 : vector<1x128xf32> to vector<16x128xf32>
    %148 = arith.addf %146, %147 : vector<16x128xf32>
    %c0_63 = arith.constant 0 : index
    %c0_64 = arith.constant 0 : index
    %149 = vector.load %arg29[%c0_63, %c0_64] : memref<16x128xf32, #tpu.memory_space<vmem>>, vector<16x128xf32>
    tpu.vector_store %arg29[%c0_63, %c0_64], %148 {strides = array<i32>} : memref<16x128xf32, #tpu.memory_space<vmem>>, vector<16x128xf32>,
    %c2_i32 = arith.constant 2 : i32
    %150 = arith.cmpi eq, %arg0, %c2_i32 : i32
    %151 = arith.extui %150 : i1 to i32
    %c0_i32_65 = arith.constant 0 : i32
    %152 = arith.cmpi ne, %151, %c0_i32_65 : i32
    scf.if %152 {
      %c0_66 = arith.constant 0 : index
      %c0_67 = arith.constant 0 : index
      %153 = vector.load %arg16[%c0_66, %c0_67] : memref<1x128xf32, #tpu.memory_space<vmem>>, vector<1x128xf32>
      %c0_68 = arith.constant 0 : index
      %c0_69 = arith.constant 0 : index
      %154 = vector.load %arg17[%c0_68, %c0_69] : memref<1x128xf32, #tpu.memory_space<vmem>>, vector<1x128xf32>
      %cst_70 = arith.constant dense<0.000000e+00> : vector<128xf32>
      %155 = vector.multi_reduction <add>, %148, %cst_70 [0] : vector<16x128xf32> to vector<128xf32>
      %156 = vector.shape_cast %155 : vector<128xf32> to vector<1x128xf32>
      %cst_71 = arith.constant 1.600000e+01 : f32
      %157 = vector.broadcast %cst_71 : f32 to vector<1x128xf32>
      %158 = arith.divf %156, %157 : vector<1x128xf32>
      %159 = vector.broadcast %158 : vector<1x128xf32> to vector<16x128xf32>
      %160 = arith.subf %148, %159 : vector<16x128xf32>
      %161 = arith.mulf %160, %160 : vector<16x128xf32>
      %cst_72 = arith.constant dense<0.000000e+00> : vector<128xf32>
      %162 = vector.multi_reduction <add>, %161, %cst_72 [0] : vector<16x128xf32> to vector<128xf32>
      %163 = vector.shape_cast %162 : vector<128xf32> to vector<1x128xf32>
      %cst_73 = arith.constant 1.600000e+01 : f32
      %164 = vector.broadcast %cst_73 : f32 to vector<1x128xf32>
      %165 = arith.divf %163, %164 : vector<1x128xf32>
      %166 = vector.broadcast %158 : vector<1x128xf32> to vector<16x128xf32>
      %167 = arith.subf %148, %166 : vector<16x128xf32>
      %168 = vector.broadcast %153 : vector<1x128xf32> to vector<16x128xf32>
      %169 = arith.mulf %168, %167 : vector<16x128xf32>
      %cst_74 = arith.constant 9.99999974E-6 : f32
      %170 = vector.broadcast %cst_74 : f32 to vector<1x128xf32>
      %171 = arith.addf %165, %170 : vector<1x128xf32>
      %172 = math.rsqrt %171 : vector<1x128xf32>
      %173 = vector.broadcast %172 : vector<1x128xf32> to vector<16x128xf32>
      %174 = arith.mulf %169, %173 : vector<16x128xf32>
      %175 = vector.broadcast %154 : vector<1x128xf32> to vector<16x128xf32>
      %176 = arith.addf %174, %175 : vector<16x128xf32>
      %177 = arith.truncf %176 : vector<16x128xf32> to vector<16x128xbf16>
      %c0_75 = arith.constant 0 : index
      %c0_76 = arith.constant 0 : index
      %178 = vector.load %arg18[%c0_75, %c0_76] : memref<128x64xbf16, #tpu.memory_space<vmem>>, vector<128x64xbf16>
      %cst_77 = arith.constant dense<0.000000e+00> : vector<16x64xf32>
      %179 = tpu.matmul %177, %178, %cst_77 {dimension_numbers = #tpu.dot_dimension_numbers<[1], [0], [0], [1], [0, 0, 1, 1], [], []>} : vector<16x128xbf16>, vector<128x64xbf16>, vector<16x64xf32> -> vector<16x64xf32>
      %c0_78 = arith.constant 0 : index
      %c0_79 = arith.constant 0 : index
      %180 = vector.load %arg19[%c0_78, %c0_79] : memref<1x64xf32, #tpu.memory_space<vmem>>, vector<1x64xf32>
      %181 = vector.broadcast %180 : vector<1x64xf32> to vector<16x64xf32>
      %182 = arith.addf %179, %181 : vector<16x64xf32>
      %cst_80 = arith.constant 0.000000e+00 : f32
      %183 = vector.broadcast %cst_80 : f32 to vector<16x64xf32>
      %184 = arith.maximumf %182, %183 : vector<16x64xf32>
      %c0_81 = arith.constant 0 : index
      %c0_82 = arith.constant 0 : index
      %185 = vector.load %arg20[%c0_81, %c0_82] : memref<1x64xf32, #tpu.memory_space<vmem>>, vector<1x64xf32>
      %c0_83 = arith.constant 0 : index
      %c0_84 = arith.constant 0 : index
      %186 = vector.load %arg21[%c0_83, %c0_84] : memref<1x64xf32, #tpu.memory_space<vmem>>, vector<1x64xf32>
      %cst_85 = arith.constant dense<0.000000e+00> : vector<64xf32>
      %187 = vector.multi_reduction <add>, %184, %cst_85 [0] : vector<16x64xf32> to vector<64xf32>
      %188 = vector.shape_cast %187 : vector<64xf32> to vector<1x64xf32>
      %cst_86 = arith.constant 1.600000e+01 : f32
      %189 = vector.broadcast %cst_86 : f32 to vector<1x64xf32>
      %190 = arith.divf %188, %189 : vector<1x64xf32>
      %191 = vector.broadcast %190 : vector<1x64xf32> to vector<16x64xf32>
      %192 = arith.subf %184, %191 : vector<16x64xf32>
      %193 = arith.mulf %192, %192 : vector<16x64xf32>
      %cst_87 = arith.constant dense<0.000000e+00> : vector<64xf32>
      %194 = vector.multi_reduction <add>, %193, %cst_87 [0] : vector<16x64xf32> to vector<64xf32>
      %195 = vector.shape_cast %194 : vector<64xf32> to vector<1x64xf32>
      %cst_88 = arith.constant 1.600000e+01 : f32
      %196 = vector.broadcast %cst_88 : f32 to vector<1x64xf32>
      %197 = arith.divf %195, %196 : vector<1x64xf32>
      %198 = vector.broadcast %190 : vector<1x64xf32> to vector<16x64xf32>
      %199 = arith.subf %184, %198 : vector<16x64xf32>
      %200 = vector.broadcast %185 : vector<1x64xf32> to vector<16x64xf32>
      %201 = arith.mulf %200, %199 : vector<16x64xf32>
      %cst_89 = arith.constant 9.99999974E-6 : f32
      %202 = vector.broadcast %cst_89 : f32 to vector<1x64xf32>
      %203 = arith.addf %197, %202 : vector<1x64xf32>
      %204 = math.rsqrt %203 : vector<1x64xf32>
      %205 = vector.broadcast %204 : vector<1x64xf32> to vector<16x64xf32>
      %206 = arith.mulf %201, %205 : vector<16x64xf32>
      %207 = vector.broadcast %186 : vector<1x64xf32> to vector<16x64xf32>
      %208 = arith.addf %206, %207 : vector<16x64xf32>
      %209 = arith.truncf %208 : vector<16x64xf32> to vector<16x64xbf16>
      %c0_90 = arith.constant 0 : index
      %c0_91 = arith.constant 0 : index
      %210 = vector.load %arg22[%c0_90, %c0_91] : memref<64x32xbf16, #tpu.memory_space<vmem>>, vector<64x32xbf16>
      %cst_92 = arith.constant dense<0.000000e+00> : vector<16x32xf32>
      %211 = tpu.matmul %209, %210, %cst_92 {dimension_numbers = #tpu.dot_dimension_numbers<[1], [0], [0], [1], [0, 0, 1, 1], [], []>} : vector<16x64xbf16>, vector<64x32xbf16>, vector<16x32xf32> -> vector<16x32xf32>
      %c0_93 = arith.constant 0 : index
      %c0_94 = arith.constant 0 : index
      %212 = vector.load %arg23[%c0_93, %c0_94] : memref<1x32xf32, #tpu.memory_space<vmem>>, vector<1x32xf32>
      %213 = vector.broadcast %212 : vector<1x32xf32> to vector<16x32xf32>
      %214 = arith.addf %211, %213 : vector<16x32xf32>
      %cst_95 = arith.constant 0.000000e+00 : f32
      %215 = vector.broadcast %cst_95 : f32 to vector<16x32xf32>
      %216 = arith.maximumf %214, %215 : vector<16x32xf32>
      %c0_96 = arith.constant 0 : index
      %c0_97 = arith.constant 0 : index
      %217 = vector.load %arg24[%c0_96, %c0_97] : memref<1x32xf32, #tpu.memory_space<vmem>>, vector<1x32xf32>
      %c0_98 = arith.constant 0 : index
      %c0_99 = arith.constant 0 : index
      %218 = vector.load %arg25[%c0_98, %c0_99] : memref<1x32xf32, #tpu.memory_space<vmem>>, vector<1x32xf32>
      %cst_100 = arith.constant dense<0.000000e+00> : vector<32xf32>
      %219 = vector.multi_reduction <add>, %216, %cst_100 [0] : vector<16x32xf32> to vector<32xf32>
      %220 = vector.shape_cast %219 : vector<32xf32> to vector<1x32xf32>
      %cst_101 = arith.constant 1.600000e+01 : f32
      %221 = vector.broadcast %cst_101 : f32 to vector<1x32xf32>
      %222 = arith.divf %220, %221 : vector<1x32xf32>
      %223 = vector.broadcast %222 : vector<1x32xf32> to vector<16x32xf32>
      %224 = arith.subf %216, %223 : vector<16x32xf32>
      %225 = arith.mulf %224, %224 : vector<16x32xf32>
      %cst_102 = arith.constant dense<0.000000e+00> : vector<32xf32>
      %226 = vector.multi_reduction <add>, %225, %cst_102 [0] : vector<16x32xf32> to vector<32xf32>
      %227 = vector.shape_cast %226 : vector<32xf32> to vector<1x32xf32>
      %cst_103 = arith.constant 1.600000e+01 : f32
      %228 = vector.broadcast %cst_103 : f32 to vector<1x32xf32>
      %229 = arith.divf %227, %228 : vector<1x32xf32>
      %230 = vector.broadcast %222 : vector<1x32xf32> to vector<16x32xf32>
      %231 = arith.subf %216, %230 : vector<16x32xf32>
      %232 = vector.broadcast %217 : vector<1x32xf32> to vector<16x32xf32>
      %233 = arith.mulf %232, %231 : vector<16x32xf32>
      %cst_104 = arith.constant 9.99999974E-6 : f32
      %234 = vector.broadcast %cst_104 : f32 to vector<1x32xf32>
      %235 = arith.addf %229, %234 : vector<1x32xf32>
      %236 = math.rsqrt %235 : vector<1x32xf32>
      %237 = vector.broadcast %236 : vector<1x32xf32> to vector<16x32xf32>
      %238 = arith.mulf %233, %237 : vector<16x32xf32>
      %239 = vector.broadcast %218 : vector<1x32xf32> to vector<16x32xf32>
      %240 = arith.addf %238, %239 : vector<16x32xf32>
      %c0_105 = arith.constant 0 : index
      %c0_106 = arith.constant 0 : index
      %241 = vector.load %arg26[%c0_105, %c0_106] : memref<1x32xf32, #tpu.memory_space<vmem>>, vector<1x32xf32>
      %242 = vector.broadcast %241 : vector<1x32xf32> to vector<16x32xf32>
      %243 = arith.mulf %240, %242 : vector<16x32xf32>
      %cst_107 = arith.constant dense<0.000000e+00> : vector<16xf32>
      %244 = vector.multi_reduction <add>, %243, %cst_107 [1] : vector<16x32xf32> to vector<16xf32>
      %245 = vector.shape_cast %244 : vector<16xf32> to vector<16x1xf32>
      %c0_108 = arith.constant 0 : index
      %c0_109 = arith.constant 0 : index
      %246 = vector.load %arg27[%c0_108, %c0_109] : memref<1x1xf32, #tpu.memory_space<vmem>>, vector<1x1xf32>
      %247 = vector.broadcast %246 : vector<1x1xf32> to vector<16x1xf32>
      %248 = arith.addf %245, %247 : vector<16x1xf32>
      %cst_110 = arith.constant 0.000000e+00 : f32
      %249 = vector.broadcast %cst_110 : f32 to vector<16x1xf32>
      %250 = arith.subf %249, %248 : vector<16x1xf32>
      %251 = math.exp %250 : vector<16x1xf32>
      %cst_111 = arith.constant 1.000000e+00 : f32
      %252 = vector.broadcast %cst_111 : f32 to vector<16x1xf32>
      %253 = arith.addf %252, %251 : vector<16x1xf32>
      %cst_112 = arith.constant 1.000000e+00 : f32
      %254 = vector.broadcast %cst_112 : f32 to vector<16x1xf32>
      %255 = arith.divf %254, %253 : vector<16x1xf32>
      %c0_113 = arith.constant 0 : index
      %c0_114 = arith.constant 0 : index
      %256 = vector.load %arg28[%c0_113, %c0_114] : memref<16x1xf32, #tpu.memory_space<vmem>>, vector<16x1xf32>
      tpu.vector_store %arg28[%c0_113, %c0_114], %255 {strides = array<i32>} : memref<16x1xf32, #tpu.memory_space<vmem>>, vector<16x1xf32>,
    } else {
    }
    return
  }
  func.func @transform_0(%arg0: i32) -> (i32, i32) {
    %c0_i32 = arith.constant 0 : i32
    %c0_i32_0 = arith.constant 0 : i32
    %c0_i32_1 = arith.constant 0 : i32
    return %c0_i32, %c0_i32_0 : i32, i32
  }
  func.func @transform_1(%arg0: i32) -> (i32, i32) {
    %c0_i32 = arith.constant 0 : i32
    %c0_i32_0 = arith.constant 0 : i32
    %c0_i32_1 = arith.constant 0 : i32
    return %c0_i32, %c0_i32_0 : i32, i32
  }
  func.func @transform_2(%arg0: i32) -> (i32, i32) {
    %c0_i32 = arith.constant 0 : i32
    %c0_i32_0 = arith.constant 0 : i32
    %c0_i32_1 = arith.constant 0 : i32
    return %c0_i32, %c0_i32_0 : i32, i32
  }
  func.func @transform_3(%arg0: i32) -> (i32, i32) {
    %c0_i32 = arith.constant 0 : i32
    %c0_i32_0 = arith.constant 0 : i32
    %c0_i32_1 = arith.constant 0 : i32
    return %c0_i32, %c0_i32_0 : i32, i32
  }
  func.func @transform_4(%arg0: i32) -> (i32, i32, i32) {
    %c0_i32 = arith.constant 0 : i32
    %c0_i32_0 = arith.constant 0 : i32
    %c0_i32_1 = arith.constant 0 : i32
    return %arg0, %c0_i32, %c0_i32_0 : i32, i32, i32
  }
  func.func @transform_5(%arg0: i32) -> (i32, i32, i32) {
    %c0_i32 = arith.constant 0 : i32
    %c0_i32_0 = arith.constant 0 : i32
    %c0_i32_1 = arith.constant 0 : i32
    return %arg0, %c0_i32, %c0_i32_0 : i32, i32, i32
  }
  func.func @transform_6(%arg0: i32) -> (i32, i32, i32) {
    %c0_i32 = arith.constant 0 : i32
    %c0_i32_0 = arith.constant 0 : i32
    %c0_i32_1 = arith.constant 0 : i32
    return %arg0, %c0_i32, %c0_i32_0 : i32, i32, i32
  }
  func.func @transform_7(%arg0: i32) -> (i32, i32, i32) {
    %c0_i32 = arith.constant 0 : i32
    %c0_i32_0 = arith.constant 0 : i32
    %c0_i32_1 = arith.constant 0 : i32
    return %arg0, %c0_i32, %c0_i32_0 : i32, i32, i32
  }
  func.func @transform_8(%arg0: i32) -> (i32, i32, i32) {
    %c0_i32 = arith.constant 0 : i32
    %c0_i32_0 = arith.constant 0 : i32
    %c0_i32_1 = arith.constant 0 : i32
    return %arg0, %c0_i32, %c0_i32_0 : i32, i32, i32
  }
  func.func @transform_9(%arg0: i32) -> (i32, i32, i32) {
    %c0_i32 = arith.constant 0 : i32
    %c0_i32_0 = arith.constant 0 : i32
    %c0_i32_1 = arith.constant 0 : i32
    return %arg0, %c0_i32, %c0_i32_0 : i32, i32, i32
  }
  func.func @transform_10(%arg0: i32) -> (i32, i32, i32) {
    %c0_i32 = arith.constant 0 : i32
    %c0_i32_0 = arith.constant 0 : i32
    %c0_i32_1 = arith.constant 0 : i32
    return %arg0, %c0_i32, %c0_i32_0 : i32, i32, i32
  }
  func.func @transform_11(%arg0: i32) -> (i32, i32, i32) {
    %c0_i32 = arith.constant 0 : i32
    %c0_i32_0 = arith.constant 0 : i32
    %c0_i32_1 = arith.constant 0 : i32
    return %arg0, %c0_i32, %c0_i32_0 : i32, i32, i32
  }
  func.func @transform_12(%arg0: i32) -> (i32, i32, i32) {
    %c0_i32 = arith.constant 0 : i32
    %c0_i32_0 = arith.constant 0 : i32
    %c0_i32_1 = arith.constant 0 : i32
    return %arg0, %c0_i32, %c0_i32_0 : i32, i32, i32
  }
  func.func @transform_13(%arg0: i32) -> (i32, i32, i32) {
    %c0_i32 = arith.constant 0 : i32
    %c0_i32_0 = arith.constant 0 : i32
    %c0_i32_1 = arith.constant 0 : i32
    return %arg0, %c0_i32, %c0_i32_0 : i32, i32, i32
  }
  func.func @transform_14(%arg0: i32) -> (i32, i32, i32) {
    %c0_i32 = arith.constant 0 : i32
    %c0_i32_0 = arith.constant 0 : i32
    %c0_i32_1 = arith.constant 0 : i32
    return %arg0, %c0_i32, %c0_i32_0 : i32, i32, i32
  }
  func.func @transform_15(%arg0: i32) -> (i32, i32) {
    %c0_i32 = arith.constant 0 : i32
    %c0_i32_0 = arith.constant 0 : i32
    %c0_i32_1 = arith.constant 0 : i32
    return %c0_i32, %c0_i32_0 : i32, i32
  }
  func.func @transform_16(%arg0: i32) -> (i32, i32) {
    %c0_i32 = arith.constant 0 : i32
    %c0_i32_0 = arith.constant 0 : i32
    %c0_i32_1 = arith.constant 0 : i32
    return %c0_i32, %c0_i32_0 : i32, i32
  }
  func.func @transform_17(%arg0: i32) -> (i32, i32) {
    %c0_i32 = arith.constant 0 : i32
    %c0_i32_0 = arith.constant 0 : i32
    %c0_i32_1 = arith.constant 0 : i32
    return %c0_i32, %c0_i32_0 : i32, i32
  }
  func.func @transform_18(%arg0: i32) -> (i32, i32) {
    %c0_i32 = arith.constant 0 : i32
    %c0_i32_0 = arith.constant 0 : i32
    %c0_i32_1 = arith.constant 0 : i32
    return %c0_i32, %c0_i32_0 : i32, i32
  }
  func.func @transform_19(%arg0: i32) -> (i32, i32) {
    %c0_i32 = arith.constant 0 : i32
    %c0_i32_0 = arith.constant 0 : i32
    %c0_i32_1 = arith.constant 0 : i32
    return %c0_i32, %c0_i32_0 : i32, i32
  }
  func.func @transform_20(%arg0: i32) -> (i32, i32) {
    %c0_i32 = arith.constant 0 : i32
    %c0_i32_0 = arith.constant 0 : i32
    %c0_i32_1 = arith.constant 0 : i32
    return %c0_i32, %c0_i32_0 : i32, i32
  }
  func.func @transform_21(%arg0: i32) -> (i32, i32) {
    %c0_i32 = arith.constant 0 : i32
    %c0_i32_0 = arith.constant 0 : i32
    %c0_i32_1 = arith.constant 0 : i32
    return %c0_i32, %c0_i32_0 : i32, i32
  }
  func.func @transform_22(%arg0: i32) -> (i32, i32) {
    %c0_i32 = arith.constant 0 : i32
    %c0_i32_0 = arith.constant 0 : i32
    %c0_i32_1 = arith.constant 0 : i32
    return %c0_i32, %c0_i32_0 : i32, i32
  }
  func.func @transform_23(%arg0: i32) -> (i32, i32) {
    %c0_i32 = arith.constant 0 : i32
    %c0_i32_0 = arith.constant 0 : i32
    %c0_i32_1 = arith.constant 0 : i32
    return %c0_i32, %c0_i32_0 : i32, i32
  }
  func.func @transform_24(%arg0: i32) -> (i32, i32) {
    %c0_i32 = arith.constant 0 : i32
    %c0_i32_0 = arith.constant 0 : i32
    %c0_i32_1 = arith.constant 0 : i32
    return %c0_i32, %c0_i32_0 : i32, i32
  }
  func.func @transform_25(%arg0: i32) -> (i32, i32) {
    %c0_i32 = arith.constant 0 : i32
    %c0_i32_0 = arith.constant 0 : i32
    %c0_i32_1 = arith.constant 0 : i32
    return %c0_i32, %c0_i32_0 : i32, i32
  }
  func.func @transform_26(%arg0: i32) -> (i32, i32) {
    %c0_i32 = arith.constant 0 : i32
    %c0_i32_0 = arith.constant 0 : i32
    %c0_i32_1 = arith.constant 0 : i32
    return %c0_i32, %c0_i32_0 : i32, i32
  }
  func.func @transform_27(%arg0: i32) -> (i32, i32) {
    %c0_i32 = arith.constant 0 : i32
    %c0_i32_0 = arith.constant 0 : i32
    %c0_i32_1 = arith.constant 0 : i32
    return %c0_i32, %c0_i32_0 : i32, i32
  }
}

</mosaic_0001>

<llo_original>
// kernel: network_forward.1
$region0: #{network_forward.1}
  #allocation0 [shape = 'u32[]', space=smem, size = 0x4, offset = 0x4, fixed_abs, tag = 'smem constant byte address 0x4 - core index']
  #allocation1 [shape = 'u32[72,128]{1,0:T(1,128)}', space=vmem, size = 0x9000, scoped, tag = 'internal scratch']
  #allocation2 [shape = 'f32[16,128]{1,0:T(8,128)}', space=vmem, size = 0x2000, scoped, tag = 'scratch operand']
  #allocation3 [shape = 'f32[1,1]{1,0:T(1,128)S(1)}', space=vmem, size = 0x200, scoped, tag = 'scoped memory for network_forward.1']
  %s0 = inlined_call_operand.vmem [shape: f32[16,3], index: 0, kind: input, shape index: {}]
  %s1 = inlined_call_operand.vmem [shape: bf16[16,16], index: 1, kind: input, shape index: {}]
  %s2 = inlined_call_operand.vmem [shape: f32[3,128], index: 2, kind: input, shape index: {}]
  %s3 = inlined_call_operand.vmem [shape: f32[1,128], index: 3, kind: input, shape index: {}]
  %s4 = inlined_call_operand.hbm [shape: bf16[3,128,128], index: 4, kind: input, shape index: {}]
  %s5 = inlined_call_operand.vmem [shape: bf16[3,16,128], index: 5, kind: input, shape index: {}]
  %s6 = inlined_call_operand.vmem [shape: f32[3,1,128], index: 6, kind: input, shape index: {}]
  %s7 = inlined_call_operand.vmem [shape: f32[3,1,128], index: 7, kind: input, shape index: {}]
  %s8 = inlined_call_operand.vmem [shape: f32[3,1,128], index: 8, kind: input, shape index: {}]
  %s9 = inlined_call_operand.hbm [shape: bf16[3,128,512], index: 9, kind: input, shape index: {}]
  %s10 = inlined_call_operand.vmem [shape: f32[3,1,512], index: 10, kind: input, shape index: {}]
  %s11 = inlined_call_operand.hbm [shape: bf16[3,512,128], index: 11, kind: input, shape index: {}]
  %s12 = inlined_call_operand.vmem [shape: f32[3,1,128], index: 12, kind: input, shape index: {}]
  %s13 = inlined_call_operand.vmem [shape: f32[3,1,128], index: 13, kind: input, shape index: {}]
  %s14 = inlined_call_operand.vmem [shape: f32[3,1,128], index: 14, kind: input, shape index: {}]
  %s15 = inlined_call_operand.vmem [shape: f32[1,128], index: 15, kind: input, shape index: {}]
  %s16 = inlined_call_operand.vmem [shape: f32[1,128], index: 16, kind: input, shape index: {}]
  %s17 = inlined_call_operand.vmem [shape: bf16[128,64], index: 17, kind: input, shape index: {}]
  %s18 = inlined_call_operand.vmem [shape: f32[1,64], index: 18, kind: input, shape index: {}]
  %s19 = inlined_call_operand.vmem [shape: f32[1,64], index: 19, kind: input, shape index: {}]
  %s20 = inlined_call_operand.vmem [shape: f32[1,64], index: 20, kind: input, shape index: {}]
  %s21 = inlined_call_operand.vmem [shape: bf16[64,32], index: 21, kind: input, shape index: {}]
  %s22 = inlined_call_operand.vmem [shape: f32[1,32], index: 22, kind: input, shape index: {}]
  %s23 = inlined_call_operand.vmem [shape: f32[1,32], index: 23, kind: input, shape index: {}]
  %s24 = inlined_call_operand.vmem [shape: f32[1,32], index: 24, kind: input, shape index: {}]
  %s25 = inlined_call_operand.vmem [shape: f32[1,32], index: 25, kind: input, shape index: {}]
  %s26 = inlined_call_operand.<no memory space> [shape: f32[1,1], index: 26, kind: input, shape index: {}]
  %s27 = inlined_call_operand.vmem [shape: f32[16,1], index: 27, kind: output, shape index: {}]
  %s28 = sld [smem:[#allocation0]]
  $region161: #{network_forward.1} parent=0
    _
  %s30 = ssub.s32 1, %s28
  %s31 = scalar_select 0, %s30, %s28
  %v32 = vstv %s26
  %33 = vst [vmem:[#allocation3] sm:$0x1] %v32
  $region1: #{network_forward.1} parent=0
    #allocation4 [shape = 'u8[65536]{0}', space=vmem, size = 0x10000, scoped, tag = 'input window, operand 4']
    #allocation5 [shape = 's32[2]{0}', space=sflag, size = 0x8, scoped, tag = 'scoped memory for network_forward.1']
    #allocation6 [shape = 'u8[262144]{0}', space=vmem, size = 0x40000, scoped, tag = 'input window, operand 9']
    #allocation7 [shape = 's32[2]{0}', space=sflag, size = 0x8, scoped, tag = 'scoped memory for network_forward.1']
    #allocation8 [shape = 'u8[262144]{0}', space=vmem, size = 0x40000, scoped, tag = 'input window, operand 11']
    %34 = vsyncpa [#allocation5], 0
    %s35 = scalar_lea.sflag [#allocation5], 1
    %36 = vsyncpa %s35, 0
    %37 = vsyncpa [#allocation7], 0
    %s38 = scalar_lea.sflag [#allocation7], 1
    %39 = vsyncpa %s38, 0
    loop: start=0, step=1, limit=5
    $region2: #{network_forward.1} parent=1 // loop_pre_header
      _
    $region3: #{network_forward.1} parent=1 // loop_header
      %s41 = sphi 0, %s45
      %p42 = scmp.ge.s32.totalorder %s41, 5
      %s49 = sphi 0, %s49
      %s51 = sphi 0, %s49
      %s52 = sphi 0, %s51
      %s66 = sphi 0, %s52
      %s70 = sphi 0, %s70
      %s72 = sphi 0, %s70
      %s73 = sphi 0, %s72
      %s87 = sphi 0, %s73
      %s91 = sphi 0, %s91
      %s93 = sphi 0, %s91
      %s94 = sphi 0, %s93
      %s108 = sphi 0, %s94
      %s112 = sphi 0, %s112
      %s114 = sphi 0, %s112
      %s115 = sphi 0, %s114
      %s129 = sphi 0, %s115
      %s135 = sphi 0, %s137
      %s138 = sphi 0, %s135
      %s139 = sphi 0, %s138
      %s155 = sphi 0, %s139
      %s161 = sphi 0, %s163
      %s164 = sphi 0, %s161
      %s165 = sphi 0, %s164
      %s181 = sphi 0, %s165
      %s187 = sphi 0, %s189
      %s190 = sphi 0, %s187
      %s191 = sphi 0, %s190
      %s207 = sphi 0, %s191
      %s213 = sphi 0, %s215
      %s216 = sphi 0, %s213
      %s217 = sphi 0, %s216
      %s233 = sphi 0, %s217
      %s239 = sphi 0, %s241
      %s242 = sphi 0, %s239
      %s243 = sphi 0, %s242
      %s259 = sphi 0, %s243
      %s265 = sphi 0, %s267
      %s268 = sphi 0, %s265
      %s269 = sphi 0, %s268
      %s285 = sphi 0, %s269
      %s291 = sphi 0, %s293
      %s294 = sphi 0, %s291
      %s295 = sphi 0, %s294
      %s311 = sphi 0, %s295
      %s317 = sphi 0, %s319
      %s320 = sphi 0, %s317
      %s321 = sphi 0, %s320
      %s337 = sphi 0, %s321
      %s343 = sphi 0, %s345
      %s346 = sphi 0, %s343
      %s347 = sphi 0, %s346
      %s363 = sphi 0, %s347
      %s369 = sphi 0, %s371
      %s372 = sphi 0, %s369
      %s373 = sphi 0, %s372
      %s389 = sphi 0, %s373
      %s395 = sphi 0, %s397
      %s398 = sphi 0, %s395
      %s399 = sphi 0, %s398
      %s415 = sphi 0, %s399
      %s419 = sphi 0, %s419
      %s421 = sphi 0, %s419
      %s422 = sphi 0, %s421
      %s436 = sphi 0, %s422
      %s440 = sphi 0, %s440
      %s442 = sphi 0, %s440
      %s443 = sphi 0, %s442
      %s457 = sphi 0, %s443
      %s461 = sphi 0, %s461
      %s463 = sphi 0, %s461
      %s464 = sphi 0, %s463
      %s478 = sphi 0, %s464
      %s482 = sphi 0, %s482
      %s484 = sphi 0, %s482
      %s485 = sphi 0, %s484
      %s499 = sphi 0, %s485
      %s503 = sphi 0, %s503
      %s505 = sphi 0, %s503
      %s506 = sphi 0, %s505
      %s520 = sphi 0, %s506
      %s524 = sphi 0, %s524
      %s526 = sphi 0, %s524
      %s527 = sphi 0, %s526
      %s541 = sphi 0, %s527
      %s545 = sphi 0, %s545
      %s547 = sphi 0, %s545
      %s548 = sphi 0, %s547
      %s562 = sphi 0, %s548
      %s566 = sphi 0, %s566
      %s568 = sphi 0, %s566
      %s569 = sphi 0, %s568
      %s583 = sphi 0, %s569
      %s587 = sphi 0, %s587
      %s589 = sphi 0, %s587
      %s590 = sphi 0, %s589
      %s604 = sphi 0, %s590
      %s608 = sphi 0, %s608
      %s610 = sphi 0, %s608
      %s611 = sphi 0, %s610
      %s625 = sphi 0, %s611
      %s629 = sphi 0, %s629
      %s631 = sphi 0, %s629
      %s632 = sphi 0, %s631
      %s646 = sphi 0, %s632
      %s650 = sphi 0, %s650
      %s652 = sphi 0, %s650
      %s653 = sphi 0, %s652
      %s667 = sphi 0, %s653
      %s671 = sphi 0, %s671
      %s673 = sphi 0, %s671
      %s674 = sphi 0, %s673
      %s688 = sphi 0, %s674
    $region4: #{network_forward.1} parent=1 // loop_header_branch
      %44 = sbr.rel (%p42) target = $region8
    $region5: #{network_forward.1} parent=1 // loop_body
      %s46 = ssub.s32 %s41, 1
      %s47 = ssub.s32 %s41, 2
      %s48 = sadd.s32 %s41, 1
      %s50 = sadd.s32 %s49, 1
      %p53 = scmp.eq.s32.totalorder %s41, 2
      %p54 = scmp.ne.s32.totalorder %s49, %s51
      %p55 = scmp.eq.s32.totalorder %s41, 0
      %p56 = por %p54, %p55
      %p57 = scmp.ne.s32.totalorder %s49, %s51
      %p58 = scmp.eq.s32.totalorder %s46, 2
      %p59 = por %p57, %p58
      %p60 = scmp.ne.s32.totalorder %s51, %s52
      %p61 = scmp.eq.s32.totalorder %s46, 0
      %p62 = por %p60, %p61
      %p63 = scmp.ne.s32.totalorder %s51, %s52
      %p64 = scmp.eq.s32.totalorder %s47, 2
      %p65 = por %p63, %p64
      %p67 = scmp.ne.s32.totalorder %s52, %s66
      %p68 = scmp.eq.s32.totalorder %s47, 0
      %p69 = por %p67, %p68
      %s71 = sadd.s32 %s70, 1
      %p74 = scmp.eq.s32.totalorder %s41, 2
      %p75 = scmp.ne.s32.totalorder %s70, %s72
      %p76 = scmp.eq.s32.totalorder %s41, 0
      %p77 = por %p75, %p76
      %p78 = scmp.ne.s32.totalorder %s70, %s72
      %p79 = scmp.eq.s32.totalorder %s46, 2
      %p80 = por %p78, %p79
      %p81 = scmp.ne.s32.totalorder %s72, %s73
      %p82 = scmp.eq.s32.totalorder %s46, 0
      %p83 = por %p81, %p82
      %p84 = scmp.ne.s32.totalorder %s72, %s73
      %p85 = scmp.eq.s32.totalorder %s47, 2
      %p86 = por %p84, %p85
      %p88 = scmp.ne.s32.totalorder %s73, %s87
      %p89 = scmp.eq.s32.totalorder %s47, 0
      %p90 = por %p88, %p89
      %s92 = sadd.s32 %s91, 1
      %p95 = scmp.eq.s32.totalorder %s41, 2
      %p96 = scmp.ne.s32.totalorder %s91, %s93
      %p97 = scmp.eq.s32.totalorder %s41, 0
      %p98 = por %p96, %p97
      %p99 = scmp.ne.s32.totalorder %s91, %s93
      %p100 = scmp.eq.s32.totalorder %s46, 2
      %p101 = por %p99, %p100
      %p102 = scmp.ne.s32.totalorder %s93, %s94
      %p103 = scmp.eq.s32.totalorder %s46, 0
      %p104 = por %p102, %p103
      %p105 = scmp.ne.s32.totalorder %s93, %s94
      %p106 = scmp.eq.s32.totalorder %s47, 2
      %p107 = por %p105, %p106
      %p109 = scmp.ne.s32.totalorder %s94, %s108
      %p110 = scmp.eq.s32.totalorder %s47, 0
      %p111 = por %p109, %p110
      %s113 = sadd.s32 %s112, 1
      %p116 = scmp.eq.s32.totalorder %s41, 2
      %p117 = scmp.ne.s32.totalorder %s112, %s114
      %p118 = scmp.eq.s32.totalorder %s41, 0
      %p119 = por %p117, %p118
      %p120 = scmp.ne.s32.totalorder %s112, %s114
      %p121 = scmp.eq.s32.totalorder %s46, 2
      %p122 = por %p120, %p121
      %p123 = scmp.ne.s32.totalorder %s114, %s115
      %p124 = scmp.eq.s32.totalorder %s46, 0
      %p125 = por %p123, %p124
      %p126 = scmp.ne.s32.totalorder %s114, %s115
      %p127 = scmp.eq.s32.totalorder %s47, 2
      %p128 = por %p126, %p127
      %p130 = scmp.ne.s32.totalorder %s115, %s129
      %p131 = scmp.eq.s32.totalorder %s47, 0
      %p132 = por %p130, %p131
      %s133 = ssub.s32 %s41, %s48
      %p134 = scmp.eq.s32.totalorder %s133, 0
      %s136 = sadd.s32 %s135, 1
      %s137 = scalar_select %p134, %s135, %s136
      %p140 = pneg %p134
      %p141 = scmp.eq.s32.totalorder %s41, 2
      %p142 = por %p140, %p141
      %p143 = scmp.ne.s32.totalorder %s135, %s138
      %p144 = scmp.eq.s32.totalorder %s41, 0
      %p145 = por %p143, %p144
      %p146 = scmp.ne.s32.totalorder %s135, %s138
      %p147 = scmp.eq.s32.totalorder %s46, 2
      %p148 = por %p146, %p147
      %p149 = scmp.ne.s32.totalorder %s138, %s139
      %p150 = scmp.eq.s32.totalorder %s46, 0
      %p151 = por %p149, %p150
      %p152 = scmp.ne.s32.totalorder %s138, %s139
      %p153 = scmp.eq.s32.totalorder %s47, 2
      %p154 = por %p152, %p153
      %p156 = scmp.ne.s32.totalorder %s139, %s155
      %p157 = scmp.eq.s32.totalorder %s47, 0
      %p158 = por %p156, %p157
      %s159 = ssub.s32 %s41, %s48
      %p160 = scmp.eq.s32.totalorder %s159, 0
      %s162 = sadd.s32 %s161, 1
      %s163 = scalar_select %p160, %s161, %s162
      %p166 = pneg %p160
      %p167 = scmp.eq.s32.totalorder %s41, 2
      %p168 = por %p166, %p167
      %p169 = scmp.ne.s32.totalorder %s161, %s164
      %p170 = scmp.eq.s32.totalorder %s41, 0
      %p171 = por %p169, %p170
      %p172 = scmp.ne.s32.totalorder %s161, %s164
      %p173 = scmp.eq.s32.totalorder %s46, 2
      %p174 = por %p172, %p173
      %p175 = scmp.ne.s32.totalorder %s164, %s165
      %p176 = scmp.eq.s32.totalorder %s46, 0
      %p177 = por %p175, %p176
      %p178 = scmp.ne.s32.totalorder %s164, %s165
      %p179 = scmp.eq.s32.totalorder %s47, 2
      %p180 = por %p178, %p179
      %p182 = scmp.ne.s32.totalorder %s165, %s181
      %p183 = scmp.eq.s32.totalorder %s47, 0
      %p184 = por %p182, %p183
      %s185 = ssub.s32 %s41, %s48
      %p186 = scmp.eq.s32.totalorder %s185, 0
      %s188 = sadd.s32 %s187, 1
      %s189 = scalar_select %p186, %s187, %s188
      %p192 = pneg %p186
      %p193 = scmp.eq.s32.totalorder %s41, 2
      %p194 = por %p192, %p193
      %p195 = scmp.ne.s32.totalorder %s187, %s190
      %p196 = scmp.eq.s32.totalorder %s41, 0
      %p197 = por %p195, %p196
      %p198 = scmp.ne.s32.totalorder %s187, %s190
      %p199 = scmp.eq.s32.totalorder %s46, 2
      %p200 = por %p198, %p199
      %p201 = scmp.ne.s32.totalorder %s190, %s191
      %p202 = scmp.eq.s32.totalorder %s46, 0
      %p203 = por %p201, %p202
      %p204 = scmp.ne.s32.totalorder %s190, %s191
      %p205 = scmp.eq.s32.totalorder %s47, 2
      %p206 = por %p204, %p205
      %p208 = scmp.ne.s32.totalorder %s191, %s207
      %p209 = scmp.eq.s32.totalorder %s47, 0
      %p210 = por %p208, %p209
      %s211 = ssub.s32 %s41, %s48
      %p212 = scmp.eq.s32.totalorder %s211, 0
      %s214 = sadd.s32 %s213, 1
      %s215 = scalar_select %p212, %s213, %s214
      %p218 = pneg %p212
      %p219 = scmp.eq.s32.totalorder %s41, 2
      %p220 = por %p218, %p219
      %p221 = scmp.ne.s32.totalorder %s213, %s216
      %p222 = scmp.eq.s32.totalorder %s41, 0
      %p223 = por %p221, %p222
      %p224 = scmp.ne.s32.totalorder %s213, %s216
      %p225 = scmp.eq.s32.totalorder %s46, 2
      %p226 = por %p224, %p225
      %p227 = scmp.ne.s32.totalorder %s216, %s217
      %p228 = scmp.eq.s32.totalorder %s46, 0
      %p229 = por %p227, %p228
      %p230 = scmp.ne.s32.totalorder %s216, %s217
      %p231 = scmp.eq.s32.totalorder %s47, 2
      %p232 = por %p230, %p231
      %p234 = scmp.ne.s32.totalorder %s217, %s233
      %p235 = scmp.eq.s32.totalorder %s47, 0
      %p236 = por %p234, %p235
      %s237 = ssub.s32 %s41, %s48
      %p238 = scmp.eq.s32.totalorder %s237, 0
      %s240 = sadd.s32 %s239, 1
      %s241 = scalar_select %p238, %s239, %s240
      %p244 = pneg %p238
      %p245 = scmp.eq.s32.totalorder %s41, 2
      %p246 = por %p244, %p245
      %p247 = scmp.ne.s32.totalorder %s239, %s242
      %p248 = scmp.eq.s32.totalorder %s41, 0
      %p249 = por %p247, %p248
      %p250 = scmp.ne.s32.totalorder %s239, %s242
      %p251 = scmp.eq.s32.totalorder %s46, 2
      %p252 = por %p250, %p251
      %p253 = scmp.ne.s32.totalorder %s242, %s243
      %p254 = scmp.eq.s32.totalorder %s46, 0
      %p255 = por %p253, %p254
      %p256 = scmp.ne.s32.totalorder %s242, %s243
      %p257 = scmp.eq.s32.totalorder %s47, 2
      %p258 = por %p256, %p257
      %p260 = scmp.ne.s32.totalorder %s243, %s259
      %p261 = scmp.eq.s32.totalorder %s47, 0
      %p262 = por %p260, %p261
      %s263 = ssub.s32 %s41, %s48
      %p264 = scmp.eq.s32.totalorder %s263, 0
      %s266 = sadd.s32 %s265, 1
      %s267 = scalar_select %p264, %s265, %s266
      %p270 = pneg %p264
      %p271 = scmp.eq.s32.totalorder %s41, 2
      %p272 = por %p270, %p271
      %p273 = scmp.ne.s32.totalorder %s265, %s268
      %p274 = scmp.eq.s32.totalorder %s41, 0
      %p275 = por %p273, %p274
      %p276 = scmp.ne.s32.totalorder %s265, %s268
      %p277 = scmp.eq.s32.totalorder %s46, 2
      %p278 = por %p276, %p277
      %p279 = scmp.ne.s32.totalorder %s268, %s269
      %p280 = scmp.eq.s32.totalorder %s46, 0
      %p281 = por %p279, %p280
      %p282 = scmp.ne.s32.totalorder %s268, %s269
      %p283 = scmp.eq.s32.totalorder %s47, 2
      %p284 = por %p282, %p283
      %p286 = scmp.ne.s32.totalorder %s269, %s285
      %p287 = scmp.eq.s32.totalorder %s47, 0
      %p288 = por %p286, %p287
      %s289 = ssub.s32 %s41, %s48
      %p290 = scmp.eq.s32.totalorder %s289, 0
      %s292 = sadd.s32 %s291, 1
      %s293 = scalar_select %p290, %s291, %s292
      %p296 = pneg %p290
      %p297 = scmp.eq.s32.totalorder %s41, 2
      %p298 = por %p296, %p297
      %p299 = scmp.ne.s32.totalorder %s291, %s294
      %p300 = scmp.eq.s32.totalorder %s41, 0
      %p301 = por %p299, %p300
      %p302 = scmp.ne.s32.totalorder %s291, %s294
      %p303 = scmp.eq.s32.totalorder %s46, 2
      %p304 = por %p302, %p303
      %p305 = scmp.ne.s32.totalorder %s294, %s295
      %p306 = scmp.eq.s32.totalorder %s46, 0
      %p307 = por %p305, %p306
      %p308 = scmp.ne.s32.totalorder %s294, %s295
      %p309 = scmp.eq.s32.totalorder %s47, 2
      %p310 = por %p308, %p309
      %p312 = scmp.ne.s32.totalorder %s295, %s311
      %p313 = scmp.eq.s32.totalorder %s47, 0
      %p314 = por %p312, %p313
      %s315 = ssub.s32 %s41, %s48
      %p316 = scmp.eq.s32.totalorder %s315, 0
      %s318 = sadd.s32 %s317, 1
      %s319 = scalar_select %p316, %s317, %s318
      %p322 = pneg %p316
      %p323 = scmp.eq.s32.totalorder %s41, 2
      %p324 = por %p322, %p323
      %p325 = scmp.ne.s32.totalorder %s317, %s320
      %p326 = scmp.eq.s32.totalorder %s41, 0
      %p327 = por %p325, %p326
      %p328 = scmp.ne.s32.totalorder %s317, %s320
      %p329 = scmp.eq.s32.totalorder %s46, 2
      %p330 = por %p328, %p329
      %p331 = scmp.ne.s32.totalorder %s320, %s321
      %p332 = scmp.eq.s32.totalorder %s46, 0
      %p333 = por %p331, %p332
      %p334 = scmp.ne.s32.totalorder %s320, %s321
      %p335 = scmp.eq.s32.totalorder %s47, 2
      %p336 = por %p334, %p335
      %p338 = scmp.ne.s32.totalorder %s321, %s337
      %p339 = scmp.eq.s32.totalorder %s47, 0
      %p340 = por %p338, %p339
      %s341 = ssub.s32 %s41, %s48
      %p342 = scmp.eq.s32.totalorder %s341, 0
      %s344 = sadd.s32 %s343, 1
      %s345 = scalar_select %p342, %s343, %s344
      %p348 = pneg %p342
      %p349 = scmp.eq.s32.totalorder %s41, 2
      %p350 = por %p348, %p349
      %p351 = scmp.ne.s32.totalorder %s343, %s346
      %p352 = scmp.eq.s32.totalorder %s41, 0
      %p353 = por %p351, %p352
      %p354 = scmp.ne.s32.totalorder %s343, %s346
      %p355 = scmp.eq.s32.totalorder %s46, 2
      %p356 = por %p354, %p355
      %p357 = scmp.ne.s32.totalorder %s346, %s347
      %p358 = scmp.eq.s32.totalorder %s46, 0
      %p359 = por %p357, %p358
      %p360 = scmp.ne.s32.totalorder %s346, %s347
      %p361 = scmp.eq.s32.totalorder %s47, 2
      %p362 = por %p360, %p361
      %p364 = scmp.ne.s32.totalorder %s347, %s363
      %p365 = scmp.eq.s32.totalorder %s47, 0
      %p366 = por %p364, %p365
      %s367 = ssub.s32 %s41, %s48
      %p368 = scmp.eq.s32.totalorder %s367, 0
      %s370 = sadd.s32 %s369, 1
      %s371 = scalar_select %p368, %s369, %s370
      %p374 = pneg %p368
      %p375 = scmp.eq.s32.totalorder %s41, 2
      %p376 = por %p374, %p375
      %p377 = scmp.ne.s32.totalorder %s369, %s372
      %p378 = scmp.eq.s32.totalorder %s41, 0
      %p379 = por %p377, %p378
      %p380 = scmp.ne.s32.totalorder %s369, %s372
      %p381 = scmp.eq.s32.totalorder %s46, 2
      %p382 = por %p380, %p381
      %p383 = scmp.ne.s32.totalorder %s372, %s373
      %p384 = scmp.eq.s32.totalorder %s46, 0
      %p385 = por %p383, %p384
      %p386 = scmp.ne.s32.totalorder %s372, %s373
      %p387 = scmp.eq.s32.totalorder %s47, 2
      %p388 = por %p386, %p387
      %p390 = scmp.ne.s32.totalorder %s373, %s389
      %p391 = scmp.eq.s32.totalorder %s47, 0
      %p392 = por %p390, %p391
      %s393 = ssub.s32 %s41, %s48
      %p394 = scmp.eq.s32.totalorder %s393, 0
      %s396 = sadd.s32 %s395, 1
      %s397 = scalar_select %p394, %s395, %s396
      %p400 = pneg %p394
      %p401 = scmp.eq.s32.totalorder %s41, 2
      %p402 = por %p400, %p401
      %p403 = scmp.ne.s32.totalorder %s395, %s398
      %p404 = scmp.eq.s32.totalorder %s41, 0
      %p405 = por %p403, %p404
      %p406 = scmp.ne.s32.totalorder %s395, %s398
      %p407 = scmp.eq.s32.totalorder %s46, 2
      %p408 = por %p406, %p407
      %p409 = scmp.ne.s32.totalorder %s398, %s399
      %p410 = scmp.eq.s32.totalorder %s46, 0
      %p411 = por %p409, %p410
      %p412 = scmp.ne.s32.totalorder %s398, %s399
      %p413 = scmp.eq.s32.totalorder %s47, 2
      %p414 = por %p412, %p413
      %p416 = scmp.ne.s32.totalorder %s399, %s415
      %p417 = scmp.eq.s32.totalorder %s47, 0
      %p418 = por %p416, %p417
      %s420 = sadd.s32 %s419, 1
      %p423 = scmp.eq.s32.totalorder %s41, 2
      %p424 = scmp.ne.s32.totalorder %s419, %s421
      %p425 = scmp.eq.s32.totalorder %s41, 0
      %p426 = por %p424, %p425
      %p427 = scmp.ne.s32.totalorder %s419, %s421
      %p428 = scmp.eq.s32.totalorder %s46, 2
      %p429 = por %p427, %p428
      %p430 = scmp.ne.s32.totalorder %s421, %s422
      %p431 = scmp.eq.s32.totalorder %s46, 0
      %p432 = por %p430, %p431
      %p433 = scmp.ne.s32.totalorder %s421, %s422
      %p434 = scmp.eq.s32.totalorder %s47, 2
      %p435 = por %p433, %p434
      %p437 = scmp.ne.s32.totalorder %s422, %s436
      %p438 = scmp.eq.s32.totalorder %s47, 0
      %p439 = por %p437, %p438
      %s441 = sadd.s32 %s440, 1
      %p444 = scmp.eq.s32.totalorder %s41, 2
      %p445 = scmp.ne.s32.totalorder %s440, %s442
      %p446 = scmp.eq.s32.totalorder %s41, 0
      %p447 = por %p445, %p446
      %p448 = scmp.ne.s32.totalorder %s440, %s442
      %p449 = scmp.eq.s32.totalorder %s46, 2
      %p450 = por %p448, %p449
      %p451 = scmp.ne.s32.totalorder %s442, %s443
      %p452 = scmp.eq.s32.totalorder %s46, 0
      %p453 = por %p451, %p452
      %p454 = scmp.ne.s32.totalorder %s442, %s443
      %p455 = scmp.eq.s32.totalorder %s47, 2
      %p456 = por %p454, %p455
      %p458 = scmp.ne.s32.totalorder %s443, %s457
      %p459 = scmp.eq.s32.totalorder %s47, 0
      %p460 = por %p458, %p459
      %s462 = sadd.s32 %s461, 1
      %p465 = scmp.eq.s32.totalorder %s41, 2
      %p466 = scmp.ne.s32.totalorder %s461, %s463
      %p467 = scmp.eq.s32.totalorder %s41, 0
      %p468 = por %p466, %p467
      %p469 = scmp.ne.s32.totalorder %s461, %s463
      %p470 = scmp.eq.s32.totalorder %s46, 2
      %p471 = por %p469, %p470
      %p472 = scmp.ne.s32.totalorder %s463, %s464
      %p473 = scmp.eq.s32.totalorder %s46, 0
      %p474 = por %p472, %p473
      %p475 = scmp.ne.s32.totalorder %s463, %s464
      %p476 = scmp.eq.s32.totalorder %s47, 2
      %p477 = por %p475, %p476
      %p479 = scmp.ne.s32.totalorder %s464, %s478
      %p480 = scmp.eq.s32.totalorder %s47, 0
      %p481 = por %p479, %p480
      %s483 = sadd.s32 %s482, 1
      %p486 = scmp.eq.s32.totalorder %s41, 2
      %p487 = scmp.ne.s32.totalorder %s482, %s484
      %p488 = scmp.eq.s32.totalorder %s41, 0
      %p489 = por %p487, %p488
      %p490 = scmp.ne.s32.totalorder %s482, %s484
      %p491 = scmp.eq.s32.totalorder %s46, 2
      %p492 = por %p490, %p491
      %p493 = scmp.ne.s32.totalorder %s484, %s485
      %p494 = scmp.eq.s32.totalorder %s46, 0
      %p495 = por %p493, %p494
      %p496 = scmp.ne.s32.totalorder %s484, %s485
      %p497 = scmp.eq.s32.totalorder %s47, 2
      %p498 = por %p496, %p497
      %p500 = scmp.ne.s32.totalorder %s485, %s499
      %p501 = scmp.eq.s32.totalorder %s47, 0
      %p502 = por %p500, %p501
      %s504 = sadd.s32 %s503, 1
      %p507 = scmp.eq.s32.totalorder %s41, 2
      %p508 = scmp.ne.s32.totalorder %s503, %s505
      %p509 = scmp.eq.s32.totalorder %s41, 0
      %p510 = por %p508, %p509
      %p511 = scmp.ne.s32.totalorder %s503, %s505
      %p512 = scmp.eq.s32.totalorder %s46, 2
      %p513 = por %p511, %p512
      %p514 = scmp.ne.s32.totalorder %s505, %s506
      %p515 = scmp.eq.s32.totalorder %s46, 0
      %p516 = por %p514, %p515
      %p517 = scmp.ne.s32.totalorder %s505, %s506
      %p518 = scmp.eq.s32.totalorder %s47, 2
      %p519 = por %p517, %p518
      %p521 = scmp.ne.s32.totalorder %s506, %s520
      %p522 = scmp.eq.s32.totalorder %s47, 0
      %p523 = por %p521, %p522
      %s525 = sadd.s32 %s524, 1
      %p528 = scmp.eq.s32.totalorder %s41, 2
      %p529 = scmp.ne.s32.totalorder %s524, %s526
      %p530 = scmp.eq.s32.totalorder %s41, 0
      %p531 = por %p529, %p530
      %p532 = scmp.ne.s32.totalorder %s524, %s526
      %p533 = scmp.eq.s32.totalorder %s46, 2
      %p534 = por %p532, %p533
      %p535 = scmp.ne.s32.totalorder %s526, %s527
      %p536 = scmp.eq.s32.totalorder %s46, 0
      %p537 = por %p535, %p536
      %p538 = scmp.ne.s32.totalorder %s526, %s527
      %p539 = scmp.eq.s32.totalorder %s47, 2
      %p540 = por %p538, %p539
      %p542 = scmp.ne.s32.totalorder %s527, %s541
      %p543 = scmp.eq.s32.totalorder %s47, 0
      %p544 = por %p542, %p543
      %s546 = sadd.s32 %s545, 1
      %p549 = scmp.eq.s32.totalorder %s41, 2
      %p550 = scmp.ne.s32.totalorder %s545, %s547
      %p551 = scmp.eq.s32.totalorder %s41, 0
      %p552 = por %p550, %p551
      %p553 = scmp.ne.s32.totalorder %s545, %s547
      %p554 = scmp.eq.s32.totalorder %s46, 2
      %p555 = por %p553, %p554
      %p556 = scmp.ne.s32.totalorder %s547, %s548
      %p557 = scmp.eq.s32.totalorder %s46, 0
      %p558 = por %p556, %p557
      %p559 = scmp.ne.s32.totalorder %s547, %s548
      %p560 = scmp.eq.s32.totalorder %s47, 2
      %p561 = por %p559, %p560
      %p563 = scmp.ne.s32.totalorder %s548, %s562
      %p564 = scmp.eq.s32.totalorder %s47, 0
      %p565 = por %p563, %p564
      %s567 = sadd.s32 %s566, 1
      %p570 = scmp.eq.s32.totalorder %s41, 2
      %p571 = scmp.ne.s32.totalorder %s566, %s568
      %p572 = scmp.eq.s32.totalorder %s41, 0
      %p573 = por %p571, %p572
      %p574 = scmp.ne.s32.totalorder %s566, %s568
      %p575 = scmp.eq.s32.totalorder %s46, 2
      %p576 = por %p574, %p575
      %p577 = scmp.ne.s32.totalorder %s568, %s569
      %p578 = scmp.eq.s32.totalorder %s46, 0
      %p579 = por %p577, %p578
      %p580 = scmp.ne.s32.totalorder %s568, %s569
      %p581 = scmp.eq.s32.totalorder %s47, 2
      %p582 = por %p580, %p581
      %p584 = scmp.ne.s32.totalorder %s569, %s583
      %p585 = scmp.eq.s32.totalorder %s47, 0
      %p586 = por %p584, %p585
      %s588 = sadd.s32 %s587, 1
      %p591 = scmp.eq.s32.totalorder %s41, 2
      %p592 = scmp.ne.s32.totalorder %s587, %s589
      %p593 = scmp.eq.s32.totalorder %s41, 0
      %p594 = por %p592, %p593
      %p595 = scmp.ne.s32.totalorder %s587, %s589
      %p596 = scmp.eq.s32.totalorder %s46, 2
      %p597 = por %p595, %p596
      %p598 = scmp.ne.s32.totalorder %s589, %s590
      %p599 = scmp.eq.s32.totalorder %s46, 0
      %p600 = por %p598, %p599
      %p601 = scmp.ne.s32.totalorder %s589, %s590
      %p602 = scmp.eq.s32.totalorder %s47, 2
      %p603 = por %p601, %p602
      %p605 = scmp.ne.s32.totalorder %s590, %s604
      %p606 = scmp.eq.s32.totalorder %s47, 0
      %p607 = por %p605, %p606
      %s609 = sadd.s32 %s608, 1
      %p612 = scmp.eq.s32.totalorder %s41, 2
      %p613 = scmp.ne.s32.totalorder %s608, %s610
      %p614 = scmp.eq.s32.totalorder %s41, 0
      %p615 = por %p613, %p614
      %p616 = scmp.ne.s32.totalorder %s608, %s610
      %p617 = scmp.eq.s32.totalorder %s46, 2
      %p618 = por %p616, %p617
      %p619 = scmp.ne.s32.totalorder %s610, %s611
      %p620 = scmp.eq.s32.totalorder %s46, 0
      %p621 = por %p619, %p620
      %p622 = scmp.ne.s32.totalorder %s610, %s611
      %p623 = scmp.eq.s32.totalorder %s47, 2
      %p624 = por %p622, %p623
      %p626 = scmp.ne.s32.totalorder %s611, %s625
      %p627 = scmp.eq.s32.totalorder %s47, 0
      %p628 = por %p626, %p627
      %s630 = sadd.s32 %s629, 1
      %p633 = scmp.eq.s32.totalorder %s41, 2
      %p634 = scmp.ne.s32.totalorder %s629, %s631
      %p635 = scmp.eq.s32.totalorder %s41, 0
      %p636 = por %p634, %p635
      %p637 = scmp.ne.s32.totalorder %s629, %s631
      %p638 = scmp.eq.s32.totalorder %s46, 2
      %p639 = por %p637, %p638
      %p640 = scmp.ne.s32.totalorder %s631, %s632
      %p641 = scmp.eq.s32.totalorder %s46, 0
      %p642 = por %p640, %p641
      %p643 = scmp.ne.s32.totalorder %s631, %s632
      %p644 = scmp.eq.s32.totalorder %s47, 2
      %p645 = por %p643, %p644
      %p647 = scmp.ne.s32.totalorder %s632, %s646
      %p648 = scmp.eq.s32.totalorder %s47, 0
      %p649 = por %p647, %p648
      %s651 = sadd.s32 %s650, 1
      %p654 = scmp.eq.s32.totalorder %s41, 2
      %p655 = scmp.ne.s32.totalorder %s650, %s652
      %p656 = scmp.eq.s32.totalorder %s41, 0
      %p657 = por %p655, %p656
      %p658 = scmp.ne.s32.totalorder %s650, %s652
      %p659 = scmp.eq.s32.totalorder %s46, 2
      %p660 = por %p658, %p659
      %p661 = scmp.ne.s32.totalorder %s652, %s653
      %p662 = scmp.eq.s32.totalorder %s46, 0
      %p663 = por %p661, %p662
      %p664 = scmp.ne.s32.totalorder %s652, %s653
      %p665 = scmp.eq.s32.totalorder %s47, 2
      %p666 = por %p664, %p665
      %p668 = scmp.ne.s32.totalorder %s653, %s667
      %p669 = scmp.eq.s32.totalorder %s47, 0
      %p670 = por %p668, %p669
      %s672 = sadd.s32 %s671, 1
      %p675 = scmp.eq.s32.totalorder %s41, 2
      %p676 = scmp.ne.s32.totalorder %s671, %s673
      %p677 = scmp.eq.s32.totalorder %s41, 0
      %p678 = por %p676, %p677
      %p679 = scmp.ne.s32.totalorder %s671, %s673
      %p680 = scmp.eq.s32.totalorder %s46, 2
      %p681 = por %p679, %p680
      %p682 = scmp.ne.s32.totalorder %s673, %s674
      %p683 = scmp.eq.s32.totalorder %s46, 0
      %p684 = por %p682, %p683
      %p685 = scmp.ne.s32.totalorder %s673, %s674
      %p686 = scmp.eq.s32.totalorder %s47, 2
      %p687 = por %p685, %p686
      %p689 = scmp.ne.s32.totalorder %s674, %s688
      %p690 = scmp.eq.s32.totalorder %s47, 0
      %p691 = por %p689, %p690
      %p692 = scmp.le.s32.totalorder 1, %s41
      %p693 = scmp.lt.s32.totalorder %s41, 4
      %p694 = pnand %p692, %p693
      %p695 = pneg %p694
      // Predicated region
      $region9: #{network_forward.1} parent=5 // pred_check
        _
      $region10: #{network_forward.1} parent=5 // pred_check_branch
        %697 = sbr.rel (%p694) target = $region12
      $region11: #{network_forward.1} parent=5 // pred_region
        %s698 = ssub.s32 %s41, 1
        // Predicated region
        $region13: #{network_forward.1} parent=11 // pred_check
          %p699 = pneg %p62
        $region14: #{network_forward.1} parent=11 // pred_check_branch
          %701 = sbr.rel (%p699) target = $region16
        $region15: #{network_forward.1} parent=11 // pred_region
          _
        $region16: #{network_forward.1} parent=11 // pred_fallthru
          _
        // Predicated region
        $region17: #{network_forward.1} parent=11 // pred_check
          %p702 = pneg %p83
        $region18: #{network_forward.1} parent=11 // pred_check_branch
          %704 = sbr.rel (%p702) target = $region20
        $region19: #{network_forward.1} parent=11 // pred_region
          _
        $region20: #{network_forward.1} parent=11 // pred_fallthru
          _
        // Predicated region
        $region21: #{network_forward.1} parent=11 // pred_check
          %p705 = pneg %p104
        $region22: #{network_forward.1} parent=11 // pred_check_branch
          %707 = sbr.rel (%p705) target = $region24
        $region23: #{network_forward.1} parent=11 // pred_region
          _
        $region24: #{network_forward.1} parent=11 // pred_fallthru
          _
        // Predicated region
        $region25: #{network_forward.1} parent=11 // pred_check
          %p708 = pneg %p125
        $region26: #{network_forward.1} parent=11 // pred_check_branch
          %710 = sbr.rel (%p708) target = $region28
        $region27: #{network_forward.1} parent=11 // pred_region
          _
        $region28: #{network_forward.1} parent=11 // pred_fallthru
          _
        // Predicated region
        $region29: #{network_forward.1} parent=11 // pred_check
          %p711 = pneg %p432
        $region30: #{network_forward.1} parent=11 // pred_check_branch
          %713 = sbr.rel (%p711) target = $region32
        $region31: #{network_forward.1} parent=11 // pred_region
          _
        $region32: #{network_forward.1} parent=11 // pred_fallthru
          _
        // Predicated region
        $region33: #{network_forward.1} parent=11 // pred_check
          %p714 = pneg %p453
        $region34: #{network_forward.1} parent=11 // pred_check_branch
          %716 = sbr.rel (%p714) target = $region36
        $region35: #{network_forward.1} parent=11 // pred_region
          _
        $region36: #{network_forward.1} parent=11 // pred_fallthru
          _
        // Predicated region
        $region37: #{network_forward.1} parent=11 // pred_check
          %p717 = pneg %p474
        $region38: #{network_forward.1} parent=11 // pred_check_branch
          %719 = sbr.rel (%p717) target = $region40
        $region39: #{network_forward.1} parent=11 // pred_region
          _
        $region40: #{network_forward.1} parent=11 // pred_fallthru
          _
        // Predicated region
        $region41: #{network_forward.1} parent=11 // pred_check
          %p720 = pneg %p495
        $region42: #{network_forward.1} parent=11 // pred_check_branch
          %722 = sbr.rel (%p720) target = $region44
        $region43: #{network_forward.1} parent=11 // pred_region
          _
        $region44: #{network_forward.1} parent=11 // pred_fallthru
          _
        // Predicated region
        $region45: #{network_forward.1} parent=11 // pred_check
          %p723 = pneg %p516
        $region46: #{network_forward.1} parent=11 // pred_check_branch
          %725 = sbr.rel (%p723) target = $region48
        $region47: #{network_forward.1} parent=11 // pred_region
          _
        $region48: #{network_forward.1} parent=11 // pred_fallthru
          _
        // Predicated region
        $region49: #{network_forward.1} parent=11 // pred_check
          %p726 = pneg %p537
        $region50: #{network_forward.1} parent=11 // pred_check_branch
          %728 = sbr.rel (%p726) target = $region52
        $region51: #{network_forward.1} parent=11 // pred_region
          _
        $region52: #{network_forward.1} parent=11 // pred_fallthru
          _
        // Predicated region
        $region53: #{network_forward.1} parent=11 // pred_check
          %p729 = pneg %p558
        $region54: #{network_forward.1} parent=11 // pred_check_branch
          %731 = sbr.rel (%p729) target = $region56
        $region55: #{network_forward.1} parent=11 // pred_region
          _
        $region56: #{network_forward.1} parent=11 // pred_fallthru
          _
        // Predicated region
        $region57: #{network_forward.1} parent=11 // pred_check
          %p732 = pneg %p579
        $region58: #{network_forward.1} parent=11 // pred_check_branch
          %734 = sbr.rel (%p732) target = $region60
        $region59: #{network_forward.1} parent=11 // pred_region
          _
        $region60: #{network_forward.1} parent=11 // pred_fallthru
          _
        // Predicated region
        $region61: #{network_forward.1} parent=11 // pred_check
          %p735 = pneg %p600
        $region62: #{network_forward.1} parent=11 // pred_check_branch
          %737 = sbr.rel (%p735) target = $region64
        $region63: #{network_forward.1} parent=11 // pred_region
          _
        $region64: #{network_forward.1} parent=11 // pred_fallthru
          _
        // Predicated region
        $region65: #{network_forward.1} parent=11 // pred_check
          %p738 = pneg %p621
        $region66: #{network_forward.1} parent=11 // pred_check_branch
          %740 = sbr.rel (%p738) target = $region68
        $region67: #{network_forward.1} parent=11 // pred_region
          _
        $region68: #{network_forward.1} parent=11 // pred_fallthru
          _
        // Predicated region
        $region69: #{network_forward.1} parent=11 // pred_check
          %p741 = pneg %p642
        $region70: #{network_forward.1} parent=11 // pred_check_branch
          %743 = sbr.rel (%p741) target = $region72
        $region71: #{network_forward.1} parent=11 // pred_region
          _
        $region72: #{network_forward.1} parent=11 // pred_fallthru
          _
        // Predicated region
        $region73: #{network_forward.1} parent=11 // pred_check
          %p744 = pneg %p663
        $region74: #{network_forward.1} parent=11 // pred_check_branch
          %746 = sbr.rel (%p744) target = $region76
        $region75: #{network_forward.1} parent=11 // pred_region
          _
        $region76: #{network_forward.1} parent=11 // pred_fallthru
          _
      $region12: #{network_forward.1} parent=5 // pred_fallthru
        _
      %p747 = scmp.lt.s32.totalorder %s41, 3
      // Predicated region
      $region77: #{network_forward.1} parent=5 // pred_check
        %p748 = pneg %p747
      $region78: #{network_forward.1} parent=5 // pred_check_branch
        %750 = sbr.rel (%p748) target = $region80
      $region79: #{network_forward.1} parent=5 // pred_region
        // Predicated region
        $region81: #{network_forward.1} parent=79 // pred_check
          %p751 = pneg %p145
        $region82: #{network_forward.1} parent=79 // pred_check_branch
          %753 = sbr.rel (%p751) target = $region84
        $region83: #{network_forward.1} parent=79 // pred_region
          %s754 = sand.u32 %s135, 1
          %s755 = scalar_lea.sflag [#allocation5], %s754
          %s756 = sand.u32 %s135, 1
          %s757 = smul.addr %s756, 64
          %s758 = scalar_lea.vmem [#allocation4], %s757
          %760 = vsyncadd %s755, 0
          %s761 = smul.addr %s41, 16
          %s762 = smul.addr %s761, 4
          %s763 = scalar_lea.hbm %s4, %s762
          %s764 = sshll.u32 %s763, 4
          %s765 = int_to_ptr.hbm [resolvable:$true] %s764
          %s766 = sshll.u32 %s758, 4
          %s767 = int_to_ptr.vmem [resolvable:$true] %s766
          %772 = dma.hbm_to_vmem [thread:$0]  %s765, 1024, %s767, %s755, 64, 64, 4
        $region84: #{network_forward.1} parent=79 // pred_fallthru
          _
        // Predicated region
        $region85: #{network_forward.1} parent=79 // pred_check
          %p773 = pneg %p171
        $region86: #{network_forward.1} parent=79 // pred_check_branch
          %775 = sbr.rel (%p773) target = $region88
        $region87: #{network_forward.1} parent=79 // pred_region
          %p776 = scmp.lt.s32.totalorder %s41, 2
          %s777 = scalar_select %p776, %s41, 2
          %s778 = smul.addr %s777, 2
          %s779 = smul.addr %s778, 4
          %s780 = scalar_lea.vmem %s5, %s779
        $region88: #{network_forward.1} parent=79 // pred_fallthru
          _
        // Predicated region
        $region89: #{network_forward.1} parent=79 // pred_check
          %p781 = pneg %p197
        $region90: #{network_forward.1} parent=79 // pred_check_branch
          %783 = sbr.rel (%p781) target = $region92
        $region91: #{network_forward.1} parent=79 // pred_region
          %p784 = scmp.lt.s32.totalorder %s41, 2
          %s785 = scalar_select %p784, %s41, 2
          %s786 = scalar_lea.vmem %s6, %s785
        $region92: #{network_forward.1} parent=79 // pred_fallthru
          _
        // Predicated region
        $region93: #{network_forward.1} parent=79 // pred_check
          %p787 = pneg %p223
        $region94: #{network_forward.1} parent=79 // pred_check_branch
          %789 = sbr.rel (%p787) target = $region96
        $region95: #{network_forward.1} parent=79 // pred_region
          %p790 = scmp.lt.s32.totalorder %s41, 2
          %s791 = scalar_select %p790, %s41, 2
          %s792 = scalar_lea.vmem %s7, %s791
        $region96: #{network_forward.1} parent=79 // pred_fallthru
          _
        // Predicated region
        $region97: #{network_forward.1} parent=79 // pred_check
          %p793 = pneg %p249
        $region98: #{network_forward.1} parent=79 // pred_check_branch
          %795 = sbr.rel (%p793) target = $region100
        $region99: #{network_forward.1} parent=79 // pred_region
          %p796 = scmp.lt.s32.totalorder %s41, 2
          %s797 = scalar_select %p796, %s41, 2
          %s798 = scalar_lea.vmem %s8, %s797
        $region100: #{network_forward.1} parent=79 // pred_fallthru
          _
        // Predicated region
        $region101: #{network_forward.1} parent=79 // pred_check
          %p799 = pneg %p275
        $region102: #{network_forward.1} parent=79 // pred_check_branch
          %801 = sbr.rel (%p799) target = $region104
        $region103: #{network_forward.1} parent=79 // pred_region
          %s802 = sand.u32 %s41, 1
          %s803 = scalar_lea.sflag [#allocation7], %s802
          %s804 = sand.u32 %s265, 1
          %s805 = smul.addr %s804, 256
          %s806 = scalar_lea.vmem [#allocation6], %s805
          %808 = vsyncadd %s803, 0
          %s809 = smul.addr %s41, 64
          %s810 = smul.addr %s809, 4
          %s811 = scalar_lea.hbm %s9, %s810
          %s812 = sshll.u32 %s811, 4
          %s813 = int_to_ptr.hbm [resolvable:$true] %s812
          %s814 = sshll.u32 %s806, 4
          %s815 = int_to_ptr.vmem [resolvable:$true] %s814
          %820 = dma.hbm_to_vmem [thread:$0]  %s813, 4096, %s815, %s803, 256, 256, 16
        $region104: #{network_forward.1} parent=79 // pred_fallthru
          _
        // Predicated region
        $region105: #{network_forward.1} parent=79 // pred_check
          %p821 = pneg %p301
        $region106: #{network_forward.1} parent=79 // pred_check_branch
          %823 = sbr.rel (%p821) target = $region108
        $region107: #{network_forward.1} parent=79 // pred_region
          %p824 = scmp.lt.s32.totalorder %s41, 2
          %s825 = scalar_select %p824, %s41, 2
          %s826 = smul.addr %s825, 4
          %s827 = scalar_lea.vmem %s10, %s826
        $region108: #{network_forward.1} parent=79 // pred_fallthru
          _
        // Predicated region
        $region109: #{network_forward.1} parent=79 // pred_check
          %p828 = pneg %p327
        $region110: #{network_forward.1} parent=79 // pred_check_branch
          %830 = sbr.rel (%p828) target = $region112
        $region111: #{network_forward.1} parent=79 // pred_region
          %s831 = sand.u32 %s41, 1
          %s832 = scalar_lea.sflag [#allocation7], %s831
          %s833 = sand.u32 %s317, 1
          %s834 = smul.addr %s833, 256
          %s835 = scalar_lea.vmem [#allocation8], %s834
          %837 = vsyncadd %s832, 0
          %s838 = smul.addr %s41, 64
          %s839 = smul.addr %s838, 4
          %s840 = scalar_lea.hbm %s11, %s839
          %s841 = sshll.u32 %s840, 4
          %s842 = int_to_ptr.hbm [resolvable:$true] %s841
          %s843 = sshll.u32 %s835, 4
          %s844 = int_to_ptr.vmem [resolvable:$true] %s843
          %849 = dma.hbm_to_vmem [thread:$0]  %s842, 4096, %s844, %s832, 64, 64, 4
        $region112: #{network_forward.1} parent=79 // pred_fallthru
          _
        // Predicated region
        $region113: #{network_forward.1} parent=79 // pred_check
          %p850 = pneg %p353
        $region114: #{network_forward.1} parent=79 // pred_check_branch
          %852 = sbr.rel (%p850) target = $region116
        $region115: #{network_forward.1} parent=79 // pred_region
          %p853 = scmp.lt.s32.totalorder %s41, 2
          %s854 = scalar_select %p853, %s41, 2
          %s855 = scalar_lea.vmem %s12, %s854
        $region116: #{network_forward.1} parent=79 // pred_fallthru
          _
        // Predicated region
        $region117: #{network_forward.1} parent=79 // pred_check
          %p856 = pneg %p379
        $region118: #{network_forward.1} parent=79 // pred_check_branch
          %858 = sbr.rel (%p856) target = $region120
        $region119: #{network_forward.1} parent=79 // pred_region
          %p859 = scmp.lt.s32.totalorder %s41, 2
          %s860 = scalar_select %p859, %s41, 2
          %s861 = scalar_lea.vmem %s13, %s860
        $region120: #{network_forward.1} parent=79 // pred_fallthru
          _
        // Predicated region
        $region121: #{network_forward.1} parent=79 // pred_check
          %p862 = pneg %p405
        $region122: #{network_forward.1} parent=79 // pred_check_branch
          %864 = sbr.rel (%p862) target = $region124
        $region123: #{network_forward.1} parent=79 // pred_region
          %p865 = scmp.lt.s32.totalorder %s41, 2
          %s866 = scalar_select %p865, %s41, 2
          %s867 = scalar_lea.vmem %s14, %s866
        $region124: #{network_forward.1} parent=79 // pred_fallthru
          _
      $region80: #{network_forward.1} parent=5 // pred_fallthru
        _
      %p868 = scmp.le.s32.totalorder 1, %s41
      %p869 = scmp.lt.s32.totalorder %s41, 4
      %p870 = pnand %p868, %p869
      %p871 = pneg %p870
      // Predicated region
      $region125: #{network_forward.1} parent=5 // pred_check
        _
      $region126: #{network_forward.1} parent=5 // pred_check_branch
        %873 = sbr.rel (%p870) target = $region128
      $region127: #{network_forward.1} parent=5 // pred_region
        %s874 = ssub.s32 %s41, 1
        %s875 = sand.u32 %s138, 1
        %s876 = scalar_lea.sflag [#allocation5], %s875
        %s877 = sand.u32 %s138, 1
        %s878 = smul.addr %s877, 64
        %s879 = scalar_lea.vmem [#allocation4], %s878
        // Predicated region
        $region129: #{network_forward.1} parent=127 // pred_check
          %p880 = pneg %p151
        $region130: #{network_forward.1} parent=127 // pred_check_branch
          %882 = sbr.rel (%p880) target = $region132
        $region131: #{network_forward.1} parent=127 // pred_region
          %884 = dma.done %s876, 1024
        $region132: #{network_forward.1} parent=127 // pred_fallthru
          _
        %s885 = sand.u32 %s46, 1
        %s886 = scalar_lea.sflag [#allocation7], %s885
        %s887 = sand.u32 %s268, 1
        %s888 = smul.addr %s887, 256
        %s889 = scalar_lea.vmem [#allocation6], %s888
        // Predicated region
        $region133: #{network_forward.1} parent=127 // pred_check
          %p890 = pneg %p281
        $region134: #{network_forward.1} parent=127 // pred_check_branch
          %892 = sbr.rel (%p890) target = $region136
        $region135: #{network_forward.1} parent=127 // pred_region
          %894 = dma.done %s886, 4096
        $region136: #{network_forward.1} parent=127 // pred_fallthru
          _
        %s895 = sand.u32 %s46, 1
        %s896 = scalar_lea.sflag [#allocation7], %s895
        %s897 = sand.u32 %s320, 1
        %s898 = smul.addr %s897, 256
        %s899 = scalar_lea.vmem [#allocation8], %s898
        // Predicated region
        $region137: #{network_forward.1} parent=127 // pred_check
          %p900 = pneg %p333
        $region138: #{network_forward.1} parent=127 // pred_check_branch
          %902 = sbr.rel (%p900) target = $region140
        $region139: #{network_forward.1} parent=127 // pred_region
          %904 = dma.done %s896, 4096
        $region140: #{network_forward.1} parent=127 // pred_fallthru
          _
        %p905 = pneg %p62
        %p906 = pneg %p59
        %p907 = pneg %p83
        %p908 = pneg %p80
        %p909 = pneg %p104
        %p910 = pneg %p101
        %p911 = pneg %p125
        %p912 = pneg %p122
        %s913 = sand.u32 %s138, 1
        %s914 = scalar_lea.sflag [#allocation5], %s913
        %s915 = sand.u32 %s138, 1
        %s916 = smul.addr %s915, 64
        %s917 = scalar_lea.vmem [#allocation4], %s916
        %p918 = pneg %p151
        %p919 = pneg %p148
        %p920 = scmp.lt.s32.totalorder %s46, 2
        %s921 = scalar_select %p920, %s46, 2
        %s922 = smul.addr %s921, 2
        %s923 = smul.addr %s922, 4
        %s924 = scalar_lea.vmem %s5, %s923
        %p925 = pneg %p177
        %p926 = pneg %p174
        %p927 = scmp.lt.s32.totalorder %s46, 2
        %s928 = scalar_select %p927, %s46, 2
        %s929 = scalar_lea.vmem %s6, %s928
        %p930 = pneg %p203
        %p931 = pneg %p200
        %p932 = scmp.lt.s32.totalorder %s46, 2
        %s933 = scalar_select %p932, %s46, 2
        %s934 = scalar_lea.vmem %s7, %s933
        %p935 = pneg %p229
        %p936 = pneg %p226
        %p937 = scmp.lt.s32.totalorder %s46, 2
        %s938 = scalar_select %p937, %s46, 2
        %s939 = scalar_lea.vmem %s8, %s938
        %p940 = pneg %p255
        %p941 = pneg %p252
        %s942 = sand.u32 %s46, 1
        %s943 = scalar_lea.sflag [#allocation7], %s942
        %s944 = sand.u32 %s268, 1
        %s945 = smul.addr %s944, 256
        %s946 = scalar_lea.vmem [#allocation6], %s945
        %p947 = pneg %p281
        %p948 = pneg %p278
        %p949 = scmp.lt.s32.totalorder %s46, 2
        %s950 = scalar_select %p949, %s46, 2
        %s951 = smul.addr %s950, 4
        %s952 = scalar_lea.vmem %s10, %s951
        %p953 = pneg %p307
        %p954 = pneg %p304
        %s955 = sand.u32 %s46, 1
        %s956 = scalar_lea.sflag [#allocation7], %s955
        %s957 = sand.u32 %s320, 1
        %s958 = smul.addr %s957, 256
        %s959 = scalar_lea.vmem [#allocation8], %s958
        %p960 = pneg %p333
        %p961 = pneg %p330
        %p962 = scmp.lt.s32.totalorder %s46, 2
        %s963 = scalar_select %p962, %s46, 2
        %s964 = scalar_lea.vmem %s12, %s963
        %p965 = pneg %p359
        %p966 = pneg %p356
        %p967 = scmp.lt.s32.totalorder %s46, 2
        %s968 = scalar_select %p967, %s46, 2
        %s969 = scalar_lea.vmem %s13, %s968
        %p970 = pneg %p385
        %p971 = pneg %p382
        %p972 = scmp.lt.s32.totalorder %s46, 2
        %s973 = scalar_select %p972, %s46, 2
        %s974 = scalar_lea.vmem %s14, %s973
        %p975 = pneg %p411
        %p976 = pneg %p408
        %p977 = pneg %p432
        %p978 = pneg %p429
        %p979 = pneg %p453
        %p980 = pneg %p450
        %p981 = pneg %p474
        %p982 = pneg %p471
        %p983 = pneg %p495
        %p984 = pneg %p492
        %p985 = pneg %p516
        %p986 = pneg %p513
        %p987 = pneg %p537
        %p988 = pneg %p534
        %p989 = pneg %p558
        %p990 = pneg %p555
        %p991 = pneg %p579
        %p992 = pneg %p576
        %p993 = pneg %p600
        %p994 = pneg %p597
        %p995 = pneg %p621
        %p996 = pneg %p618
        %p997 = pneg %p642
        %p998 = pneg %p639
        %p999 = pneg %p663
        %p1000 = pneg %p660
        %p1001 = pneg %p684
        %p1002 = pneg %p681
        %p1003 = scmp.lt.s32.totalorder %s46, 2
        %s1004 = scalar_select %p1003, %s46, 2
        %s1005 = smul.addr %s1004, 2
        %s1006 = smul.addr %s1005, 4
        %s1007 = scalar_lea.vmem %s5, %s1006
        %p1008 = scmp.lt.s32.totalorder %s46, 2
        %s1009 = scalar_select %p1008, %s46, 2
        %s1010 = scalar_lea.vmem %s6, %s1009
        %p1011 = scmp.lt.s32.totalorder %s46, 2
        %s1012 = scalar_select %p1011, %s46, 2
        %s1013 = scalar_lea.vmem %s7, %s1012
        %p1014 = scmp.lt.s32.totalorder %s46, 2
        %s1015 = scalar_select %p1014, %s46, 2
        %s1016 = scalar_lea.vmem %s8, %s1015
        %p1017 = scmp.lt.s32.totalorder %s46, 2
        %s1018 = scalar_select %p1017, %s46, 2
        %s1019 = smul.addr %s1018, 4
        %s1020 = scalar_lea.vmem %s10, %s1019
        %p1021 = scmp.lt.s32.totalorder %s46, 2
        %s1022 = scalar_select %p1021, %s46, 2
        %s1023 = scalar_lea.vmem %s12, %s1022
        %p1024 = scmp.lt.s32.totalorder %s46, 2
        %s1025 = scalar_select %p1024, %s46, 2
        %s1026 = scalar_lea.vmem %s13, %s1025
        %p1027 = scmp.lt.s32.totalorder %s46, 2
        %s1028 = scalar_select %p1027, %s46, 2
        %s1029 = scalar_lea.vmem %s14, %s1028
        %p1031 = scmp.eq.s32.totalorder %s46, 0
        // Predicated region
        $region141: #{network_forward.1} parent=127 // pred_check
          %p1032 = pneg %p1031
        $region142: #{network_forward.1} parent=127 // pred_check_branch
          %1034 = sbr.rel (%p1032) target = $region144
        $region143: #{network_forward.1} parent=127 // pred_region
          %v1035 = vld [vmem:[%s0] sm:$0xff]
          %v1036 = vld [vmem:[%s0 + $0x8] sm:$0xff]
          %v1037 = vld [vmem:[%s2] sm:$0x7]
          %v1038 = vld [vmem:[%s3] sm:$0x1]
          %v1040 = vperm.slane %v1038, 0
          %vm1042 = vcmask 23552
          %v1044 = vsel %vm1042, %v1035, 0
          %v1047 = vsel %vm1042, %v1036, 0
          %vm1049 = vcmask 1042432
          %v1051 = vsel %vm1049, %v1037, 0
          %1053 = vmatpush.msra.mxu0 0.0
          %1054 = vmatpush.msra.mxu0 0.0
          %1055 = vmatpush.msra.mxu0 0.0
          %1056 = vmatpush.msra.mxu0 0.0
          %1057 = vmatpush.msra.mxu0 0.0
          %1058 = vmatpush.msra.mxu0 0.0
          %1059 = vmatpush.msra.mxu0 0.0
          %1060 = vmatpush.msra.mxu0 0.0
          %1061 = vmatpush.msra.mxu0 0.0
          %1062 = vmatpush.msra.mxu0 0.0
          %1063 = vmatpush.msra.mxu0 0.0
          %1064 = vmatpush.msra.mxu0 0.0
          %1065 = vmatpush.msra.mxu0 0.0
          %1066 = vmatpush.msra.mxu0 0.0
          %1067 = vmatpush.msra.mxu0 0.0
          %1068 = vmatpush.msra.mxu0 %v1051
          %1069 = vmatmul.f32.gmra.mxu0 %v1044
          %v1070 = vpop.f32.mrf.mxu0
          %v1071 = vadd.f32 %v1040, %v1070
          %1072 = vmatmul.f32.gmra.mxu0 %v1047
          %v1073 = vpop.f32.mrf.mxu0
          %v1074 = vadd.f32 %v1040, %v1073
          %1075 = vdwg.mxu0
          %1076 = vst [vmem:[#allocation2] sm:$0xff] %v1071
          %1077 = vst [vmem:[#allocation2 + $0x8] sm:$0xff] %v1074
        $region144: #{network_forward.1} parent=127 // pred_fallthru
          _
        %v1078 = vld [vmem:[#allocation2] sm:$0xff]
        %v1079 = vld [vmem:[#allocation2 + $0x8] sm:$0xff]
        %v1080 = vpack.c.bf16 %v1079, %v1078
        %v1081 = vld [vmem:[%s879] sm:$0xf]
        %v1082 = vld [vmem:[%s879 + $0x4] sm:$0xf]
        %v1083 = vld [vmem:[%s879 + $0x8] sm:$0xf]
        %v1084 = vld [vmem:[%s879 + $0xc] sm:$0xf]
        %v1085 = vld [vmem:[%s879 + $0x10] sm:$0xf]
        %v1086 = vld [vmem:[%s879 + $0x14] sm:$0xf]
        %v1087 = vld [vmem:[%s879 + $0x18] sm:$0xf]
        %v1088 = vld [vmem:[%s879 + $0x1c] sm:$0xf]
        %v1089 = vld [vmem:[%s879 + $0x20] sm:$0xf]
        %v1090 = vld [vmem:[%s879 + $0x24] sm:$0xf]
        %v1091 = vld [vmem:[%s879 + $0x28] sm:$0xf]
        %v1092 = vld [vmem:[%s879 + $0x2c] sm:$0xf]
        %v1093 = vld [vmem:[%s879 + $0x30] sm:$0xf]
        %v1094 = vld [vmem:[%s879 + $0x34] sm:$0xf]
        %v1095 = vld [vmem:[%s879 + $0x38] sm:$0xf]
        %v1096 = vld [vmem:[%s879 + $0x3c] sm:$0xf]
        %v1113 = vunpack.c.l.b16 %v1081
        %v1114 = vunpack.c.l.b16 %v1082
        %v1115 = vunpack.c.l.b16 %v1083
        %v1116 = vunpack.c.l.b16 %v1084
        %v1117 = vunpack.c.l.b16 %v1085
        %v1118 = vunpack.c.l.b16 %v1086
        %v1119 = vunpack.c.l.b16 %v1087
        %v1120 = vunpack.c.l.b16 %v1088
        %v1121 = vunpack.c.l.b16 %v1089
        %v1122 = vunpack.c.l.b16 %v1090
        %v1123 = vunpack.c.l.b16 %v1091
        %v1124 = vunpack.c.l.b16 %v1092
        %v1125 = vunpack.c.l.b16 %v1093
        %v1126 = vunpack.c.l.b16 %v1094
        %v1127 = vunpack.c.l.b16 %v1095
        %v1128 = vunpack.c.l.b16 %v1096
        %v1129 = vpack.c.b16 %v1114, %v1113
        %v1130 = vpack.c.b16 %v1116, %v1115
        %v1131 = vpack.c.b16 %v1118, %v1117
        %v1132 = vpack.c.b16 %v1120, %v1119
        %v1133 = vpack.c.b16 %v1122, %v1121
        %v1134 = vpack.c.b16 %v1124, %v1123
        %v1135 = vpack.c.b16 %v1126, %v1125
        %v1136 = vpack.c.b16 %v1128, %v1127
        %1145 = vmatpush.bf16.msra.mxu0 %v1136
        %1146 = vmatpush.bf16.msra.mxu0 %v1135
        %1147 = vmatpush.bf16.msra.mxu0 %v1134
        %1148 = vmatpush.bf16.msra.mxu0 %v1133
        %1149 = vmatpush.bf16.msra.mxu0 %v1132
        %1150 = vmatpush.bf16.msra.mxu0 %v1131
        %1151 = vmatpush.bf16.msra.mxu0 %v1130
        %1152 = vmatpush.bf16.msra.mxu0 %v1129
        %1153 = vmatmul.bf16.gmra.mxu0 %v1080
        %v1154 = vpop.f32.mrf.mxu0
        %v1155 = vadd.f32 0.0, %v1154
        %v1156 = vpop.f32.mrf.mxu0
        %v1157 = vadd.f32 0.0, %v1156
        %1158 = vdwg.mxu0
        %v1159 = vpack.c.bf16 %v1155, %v1155
        %v1160 = vpack.c.bf16 %v1157, %v1157
        %v1161 = vld [vmem:[%s1007] sm:$0xf]
        %v1162 = vld [vmem:[%s1007 + $0x4] sm:$0xf]
        %v1165 = vunpack.c.l.b16 %v1161
        %v1166 = vunpack.c.l.b16 %v1162
        %v1167 = vpack.c.b16 %v1166, %v1165
        %v1171 = vunpack.c.l.b16 %v1159
        %v1172 = vunpack.c.l.b16 %v1160
        %v1173 = vpack.c.b16 %v1172, %v1171
        %1175 = vmatpush.bf16.xpose.msra.mxu0 0
        %1176 = vmatpush.bf16.xpose.msra.mxu0 0
        %1177 = vmatpush.bf16.xpose.msra.mxu0 0
        %1178 = vmatpush.bf16.xpose.msra.mxu0 0
        %1179 = vmatpush.bf16.xpose.msra.mxu0 0
        %1180 = vmatpush.bf16.xpose.msra.mxu0 0
        %1181 = vmatpush.bf16.xpose.msra.mxu0 0
        %1182 = vmatpush.bf16.xpose.msra.mxu0 %v1173
        %1183 = vmatmul.bf16.gmra.mxu0 %v1167
        %v1184 = vpop.f32.mrf.mxu0
        %v1185 = vadd.f32 0.0, %v1184
        %v1186 = vpop.f32.mrf.mxu0
        %v1187 = vadd.f32 0.0, %v1186
        %1188 = vdwg.mxu0
        %v1189 = vperm.slane %v1187, 0
        %v1190 = vlaneseq
        %v1191 = vshrl.u32 %v1190, 7
        %1193 = vset.pattern.permute.xlu0 %v1191
        %1194 = vperm.xlu0 %1193, %v1189
        %v1195 = vpop.permute.xlu0 %1194
        %v1196 = vlaneseq
        %v1197 = vshrl.u32 %v1196, 7
        %v1198 = vadd.s32 %v1197, 8
        %1199 = vset.pattern.permute.xlu0 %v1198
        %1200 = vperm.xlu0 %1199, %v1189
        %v1201 = vpop.permute.xlu0 %1200
        %v1202 = vperm.slane %v1187, 1
        %v1203 = vlaneseq
        %v1204 = vshrl.u32 %v1203, 7
        %1206 = vset.pattern.permute.xlu0 %v1204
        %1207 = vperm.xlu0 %1206, %v1202
        %v1208 = vpop.permute.xlu0 %1207
        %v1209 = vlaneseq
        %v1210 = vshrl.u32 %v1209, 7
        %v1211 = vadd.s32 %v1210, 8
        %1212 = vset.pattern.permute.xlu0 %v1211
        %1213 = vperm.xlu0 %1212, %v1202
        %v1214 = vpop.permute.xlu0 %1213
        %v1215 = vperm.slane %v1187, 2
        %v1216 = vlaneseq
        %v1217 = vshrl.u32 %v1216, 7
        %1219 = vset.pattern.permute.xlu0 %v1217
        %1220 = vperm.xlu0 %1219, %v1215
        %v1221 = vpop.permute.xlu0 %1220
        %v1222 = vlaneseq
        %v1223 = vshrl.u32 %v1222, 7
        %v1224 = vadd.s32 %v1223, 8
        %1225 = vset.pattern.permute.xlu0 %v1224
        %1226 = vperm.xlu0 %1225, %v1215
        %v1227 = vpop.permute.xlu0 %1226
        %v1228 = vperm.slane %v1187, 3
        %v1229 = vlaneseq
        %v1230 = vshrl.u32 %v1229, 7
        %1232 = vset.pattern.permute.xlu0 %v1230
        %1233 = vperm.xlu0 %1232, %v1228
        %v1234 = vpop.permute.xlu0 %1233
        %v1235 = vlaneseq
        %v1236 = vshrl.u32 %v1235, 7
        %v1237 = vadd.s32 %v1236, 8
        %1238 = vset.pattern.permute.xlu0 %v1237
        %1239 = vperm.xlu0 %1238, %v1228
        %v1240 = vpop.permute.xlu0 %1239
        %v1241 = vperm.slane %v1187, 4
        %v1242 = vlaneseq
        %v1243 = vshrl.u32 %v1242, 7
        %1245 = vset.pattern.permute.xlu0 %v1243
        %1246 = vperm.xlu0 %1245, %v1241
        %v1247 = vpop.permute.xlu0 %1246
        %v1248 = vlaneseq
        %v1249 = vshrl.u32 %v1248, 7
        %v1250 = vadd.s32 %v1249, 8
        %1251 = vset.pattern.permute.xlu0 %v1250
        %1252 = vperm.xlu0 %1251, %v1241
        %v1253 = vpop.permute.xlu0 %1252
        %v1254 = vperm.slane %v1187, 5
        %v1255 = vlaneseq
        %v1256 = vshrl.u32 %v1255, 7
        %1258 = vset.pattern.permute.xlu0 %v1256
        %1259 = vperm.xlu0 %1258, %v1254
        %v1260 = vpop.permute.xlu0 %1259
        %v1261 = vlaneseq
        %v1262 = vshrl.u32 %v1261, 7
        %v1263 = vadd.s32 %v1262, 8
        %1264 = vset.pattern.permute.xlu0 %v1263
        %1265 = vperm.xlu0 %1264, %v1254
        %v1266 = vpop.permute.xlu0 %1265
        %v1267 = vperm.slane %v1187, 6
        %v1268 = vlaneseq
        %v1269 = vshrl.u32 %v1268, 7
        %1271 = vset.pattern.permute.xlu0 %v1269
        %1272 = vperm.xlu0 %1271, %v1267
        %v1273 = vpop.permute.xlu0 %1272
        %v1274 = vlaneseq
        %v1275 = vshrl.u32 %v1274, 7
        %v1276 = vadd.s32 %v1275, 8
        %1277 = vset.pattern.permute.xlu0 %v1276
        %1278 = vperm.xlu0 %1277, %v1267
        %v1279 = vpop.permute.xlu0 %1278
        %v1280 = vperm.slane %v1187, 7
        %v1281 = vlaneseq
        %v1282 = vshrl.u32 %v1281, 7
        %1284 = vset.pattern.permute.xlu0 %v1282
        %1285 = vperm.xlu0 %1284, %v1280
        %v1286 = vpop.permute.xlu0 %1285
        %v1287 = vlaneseq
        %v1288 = vshrl.u32 %v1287, 7
        %v1289 = vadd.s32 %v1288, 8
        %1290 = vset.pattern.permute.xlu0 %v1289
        %1291 = vperm.xlu0 %1290, %v1280
        %v1292 = vpop.permute.xlu0 %1291
        %v1294 = vrot.slane %v1185, 1
        %v1295 = vrot.slane %v1185, 2
        %v1296 = vrot.slane %v1185, 3
        %v1297 = vrot.slane %v1185, 4
        %v1298 = vrot.slane %v1185, 5
        %v1299 = vrot.slane %v1185, 6
        %v1300 = vrot.slane %v1185, 7
        %v1301 = vperm.slane %v1185, 0
        %v1302 = vperm.slane %v1294, 0
        %v1303 = vperm.slane %v1295, 0
        %v1304 = vperm.slane %v1296, 0
        %v1305 = vperm.slane %v1297, 0
        %v1306 = vperm.slane %v1298, 0
        %v1307 = vperm.slane %v1299, 0
        %v1308 = vperm.slane %v1300, 0
        %v1317 = vadd.f32 %v1195, %v1301
        %v1318 = vadd.f32 %v1201, %v1301
        %v1319 = vadd.f32 %v1208, %v1302
        %v1320 = vadd.f32 %v1214, %v1302
        %v1321 = vadd.f32 %v1221, %v1303
        %v1322 = vadd.f32 %v1227, %v1303
        %v1323 = vadd.f32 %v1234, %v1304
        %v1324 = vadd.f32 %v1240, %v1304
        %v1325 = vadd.f32 %v1247, %v1305
        %v1326 = vadd.f32 %v1253, %v1305
        %v1327 = vadd.f32 %v1260, %v1306
        %v1328 = vadd.f32 %v1266, %v1306
        %v1329 = vadd.f32 %v1273, %v1307
        %v1330 = vadd.f32 %v1279, %v1307
        %v1331 = vadd.f32 %v1286, %v1308
        %v1332 = vadd.f32 %v1292, %v1308
        %vm1333 = vcmp.gt.f32.partialorder %v1317, 0.0
        %vm1334 = vcmp.gt.f32.partialorder %v1318, 0.0
        %vm1335 = vcmp.gt.f32.partialorder %v1319, 0.0
        %vm1336 = vcmp.gt.f32.partialorder %v1320, 0.0
        %vm1337 = vcmp.gt.f32.partialorder %v1321, 0.0
        %vm1338 = vcmp.gt.f32.partialorder %v1322, 0.0
        %vm1339 = vcmp.gt.f32.partialorder %v1323, 0.0
        %vm1340 = vcmp.gt.f32.partialorder %v1324, 0.0
        %vm1341 = vcmp.gt.f32.partialorder %v1325, 0.0
        %vm1342 = vcmp.gt.f32.partialorder %v1326, 0.0
        %vm1343 = vcmp.gt.f32.partialorder %v1327, 0.0
        %vm1344 = vcmp.gt.f32.partialorder %v1328, 0.0
        %vm1345 = vcmp.gt.f32.partialorder %v1329, 0.0
        %vm1346 = vcmp.gt.f32.partialorder %v1330, 0.0
        %vm1347 = vcmp.gt.f32.partialorder %v1331, 0.0
        %vm1348 = vcmp.gt.f32.partialorder %v1332, 0.0
        %v1349 = vmul.f32 %v1317, 0.2
        %v1350 = vmul.f32 %v1318, 0.2
        %v1351 = vmul.f32 %v1319, 0.2
        %v1352 = vmul.f32 %v1320, 0.2
        %v1353 = vmul.f32 %v1321, 0.2
        %v1354 = vmul.f32 %v1322, 0.2
        %v1355 = vmul.f32 %v1323, 0.2
        %v1356 = vmul.f32 %v1324, 0.2
        %v1357 = vmul.f32 %v1325, 0.2
        %v1358 = vmul.f32 %v1326, 0.2
        %v1359 = vmul.f32 %v1327, 0.2
        %v1360 = vmul.f32 %v1328, 0.2
        %v1361 = vmul.f32 %v1329, 0.2
        %v1362 = vmul.f32 %v1330, 0.2
        %v1363 = vmul.f32 %v1331, 0.2
        %v1364 = vmul.f32 %v1332, 0.2
        %v1365 = vsel %vm1333, %v1317, %v1349
        %v1366 = vsel %vm1334, %v1318, %v1350
        %v1367 = vsel %vm1335, %v1319, %v1351
        %v1368 = vsel %vm1336, %v1320, %v1352
        %v1369 = vsel %vm1337, %v1321, %v1353
        %v1370 = vsel %vm1338, %v1322, %v1354
        %v1371 = vsel %vm1339, %v1323, %v1355
        %v1372 = vsel %vm1340, %v1324, %v1356
        %v1373 = vsel %vm1341, %v1325, %v1357
        %v1374 = vsel %vm1342, %v1326, %v1358
        %v1375 = vsel %vm1343, %v1327, %v1359
        %v1376 = vsel %vm1344, %v1328, %v1360
        %v1377 = vsel %vm1345, %v1329, %v1361
        %v1378 = vsel %vm1346, %v1330, %v1362
        %v1379 = vsel %vm1347, %v1331, %v1363
        %v1380 = vsel %vm1348, %v1332, %v1364
        %v1381 = vld [vmem:[%s1] sm:$0xf]
        %v1382 = vld [vmem:[%s1 + $0x4] sm:$0xf]
        %v1383 = vunpack.c.l.bf16 %v1381
        %v1384 = vunpack.c.l.bf16 %v1382
        %v1385 = vadd.f32 %v1365, %v1383
        %v1386 = vadd.f32 %v1366, %v1384
        %v1387 = vadd.f32 %v1367, %v1383
        %v1388 = vadd.f32 %v1368, %v1384
        %v1389 = vadd.f32 %v1369, %v1383
        %v1390 = vadd.f32 %v1370, %v1384
        %v1391 = vadd.f32 %v1371, %v1383
        %v1392 = vadd.f32 %v1372, %v1384
        %v1393 = vadd.f32 %v1373, %v1383
        %v1394 = vadd.f32 %v1374, %v1384
        %v1395 = vadd.f32 %v1375, %v1383
        %v1396 = vadd.f32 %v1376, %v1384
        %v1397 = vadd.f32 %v1377, %v1383
        %v1398 = vadd.f32 %v1378, %v1384
        %v1399 = vadd.f32 %v1379, %v1383
        %v1400 = vadd.f32 %v1380, %v1384
        %vm1401 = vcmask 130048
        %v1402 = vsel %vm1401, %v1385, -inf
        %1403 = vmax.xlane.f32.xlu0 %v1402
        %v1404 = vpop.xlane.xlu0 %1403
        %v1405 = vsel %vm1401, %v1386, -inf
        %1406 = vmax.xlane.f32.xlu0 %v1405
        %v1407 = vpop.xlane.xlu0 %1406
        %v1408 = vsel %vm1401, %v1387, -inf
        %1409 = vmax.xlane.f32.xlu0 %v1408
        %v1410 = vpop.xlane.xlu0 %1409
        %v1411 = vsel %vm1401, %v1388, -inf
        %1412 = vmax.xlane.f32.xlu0 %v1411
        %v1413 = vpop.xlane.xlu0 %1412
        %v1414 = vsel %vm1401, %v1389, -inf
        %1415 = vmax.xlane.f32.xlu0 %v1414
        %v1416 = vpop.xlane.xlu0 %1415
        %v1417 = vsel %vm1401, %v1390, -inf
        %1418 = vmax.xlane.f32.xlu0 %v1417
        %v1419 = vpop.xlane.xlu0 %1418
        %v1420 = vsel %vm1401, %v1391, -inf
        %1421 = vmax.xlane.f32.xlu0 %v1420
        %v1422 = vpop.xlane.xlu0 %1421
        %v1423 = vsel %vm1401, %v1392, -inf
        %1424 = vmax.xlane.f32.xlu0 %v1423
        %v1425 = vpop.xlane.xlu0 %1424
        %v1426 = vsel %vm1401, %v1393, -inf
        %1427 = vmax.xlane.f32.xlu0 %v1426
        %v1428 = vpop.xlane.xlu0 %1427
        %v1429 = vsel %vm1401, %v1394, -inf
        %1430 = vmax.xlane.f32.xlu0 %v1429
        %v1431 = vpop.xlane.xlu0 %1430
        %v1432 = vsel %vm1401, %v1395, -inf
        %1433 = vmax.xlane.f32.xlu0 %v1432
        %v1434 = vpop.xlane.xlu0 %1433
        %v1435 = vsel %vm1401, %v1396, -inf
        %1436 = vmax.xlane.f32.xlu0 %v1435
        %v1437 = vpop.xlane.xlu0 %1436
        %v1438 = vsel %vm1401, %v1397, -inf
        %1439 = vmax.xlane.f32.xlu0 %v1438
        %v1440 = vpop.xlane.xlu0 %1439
        %v1441 = vsel %vm1401, %v1398, -inf
        %1442 = vmax.xlane.f32.xlu0 %v1441
        %v1443 = vpop.xlane.xlu0 %1442
        %v1444 = vsel %vm1401, %v1399, -inf
        %1445 = vmax.xlane.f32.xlu0 %v1444
        %v1446 = vpop.xlane.xlu0 %1445
        %v1447 = vsel %vm1401, %v1400, -inf
        %1448 = vmax.xlane.f32.xlu0 %v1447
        %v1449 = vpop.xlane.xlu0 %1448
        %v1450 = vsub.f32 %v1385, %v1404
        %v1451 = vsub.f32 %v1386, %v1407
        %v1452 = vsub.f32 %v1387, %v1410
        %v1453 = vsub.f32 %v1388, %v1413
        %v1454 = vsub.f32 %v1389, %v1416
        %v1455 = vsub.f32 %v1390, %v1419
        %v1456 = vsub.f32 %v1391, %v1422
        %v1457 = vsub.f32 %v1392, %v1425
        %v1458 = vsub.f32 %v1393, %v1428
        %v1459 = vsub.f32 %v1394, %v1431
        %v1460 = vsub.f32 %v1395, %v1434
        %v1461 = vsub.f32 %v1396, %v1437
        %v1462 = vsub.f32 %v1397, %v1440
        %v1463 = vsub.f32 %v1398, %v1443
        %v1464 = vsub.f32 %v1399, %v1446
        %v1465 = vsub.f32 %v1400, %v1449
        %v1466 = vmul.f32 %v1450, 1.442695
        %v1467 = vpow.pop %v1466
        %v1468 = vmul.f32 %v1451, 1.442695
        %v1469 = vpow.pop %v1468
        %v1470 = vmul.f32 %v1452, 1.442695
        %v1471 = vpow.pop %v1470
        %v1472 = vmul.f32 %v1453, 1.442695
        %v1473 = vpow.pop %v1472
        %v1474 = vmul.f32 %v1454, 1.442695
        %v1475 = vpow.pop %v1474
        %v1476 = vmul.f32 %v1455, 1.442695
        %v1477 = vpow.pop %v1476
        %v1478 = vmul.f32 %v1456, 1.442695
        %v1479 = vpow.pop %v1478
        %v1480 = vmul.f32 %v1457, 1.442695
        %v1481 = vpow.pop %v1480
        %v1482 = vmul.f32 %v1458, 1.442695
        %v1483 = vpow.pop %v1482
        %v1484 = vmul.f32 %v1459, 1.442695
        %v1485 = vpow.pop %v1484
        %v1486 = vmul.f32 %v1460, 1.442695
        %v1487 = vpow.pop %v1486
        %v1488 = vmul.f32 %v1461, 1.442695
        %v1489 = vpow.pop %v1488
        %v1490 = vmul.f32 %v1462, 1.442695
        %v1491 = vpow.pop %v1490
        %v1492 = vmul.f32 %v1463, 1.442695
        %v1493 = vpow.pop %v1492
        %v1494 = vmul.f32 %v1464, 1.442695
        %v1495 = vpow.pop %v1494
        %v1496 = vmul.f32 %v1465, 1.442695
        %v1497 = vpow.pop %v1496
        %v1498 = vsel %vm1401, %v1467, 0.0
        %1499 = vadd.xlane.f32.xlu0 %v1498
        %v1500 = vpop.xlane.xlu0 %1499
        %v1501 = vsel %vm1401, %v1469, 0.0
        %1502 = vadd.xlane.f32.xlu0 %v1501
        %v1503 = vpop.xlane.xlu0 %1502
        %v1504 = vsel %vm1401, %v1471, 0.0
        %1505 = vadd.xlane.f32.xlu0 %v1504
        %v1506 = vpop.xlane.xlu0 %1505
        %v1507 = vsel %vm1401, %v1473, 0.0
        %1508 = vadd.xlane.f32.xlu0 %v1507
        %v1509 = vpop.xlane.xlu0 %1508
        %v1510 = vsel %vm1401, %v1475, 0.0
        %1511 = vadd.xlane.f32.xlu0 %v1510
        %v1512 = vpop.xlane.xlu0 %1511
        %v1513 = vsel %vm1401, %v1477, 0.0
        %1514 = vadd.xlane.f32.xlu0 %v1513
        %v1515 = vpop.xlane.xlu0 %1514
        %v1516 = vsel %vm1401, %v1479, 0.0
        %1517 = vadd.xlane.f32.xlu0 %v1516
        %v1518 = vpop.xlane.xlu0 %1517
        %v1519 = vsel %vm1401, %v1481, 0.0
        %1520 = vadd.xlane.f32.xlu0 %v1519
        %v1521 = vpop.xlane.xlu0 %1520
        %v1522 = vsel %vm1401, %v1483, 0.0
        %1523 = vadd.xlane.f32.xlu0 %v1522
        %v1524 = vpop.xlane.xlu0 %1523
        %v1525 = vsel %vm1401, %v1485, 0.0
        %1526 = vadd.xlane.f32.xlu0 %v1525
        %v1527 = vpop.xlane.xlu0 %1526
        %v1528 = vsel %vm1401, %v1487, 0.0
        %1529 = vadd.xlane.f32.xlu0 %v1528
        %v1530 = vpop.xlane.xlu0 %1529
        %v1531 = vsel %vm1401, %v1489, 0.0
        %1532 = vadd.xlane.f32.xlu0 %v1531
        %v1533 = vpop.xlane.xlu0 %1532
        %v1534 = vsel %vm1401, %v1491, 0.0
        %1535 = vadd.xlane.f32.xlu0 %v1534
        %v1536 = vpop.xlane.xlu0 %1535
        %v1537 = vsel %vm1401, %v1493, 0.0
        %1538 = vadd.xlane.f32.xlu0 %v1537
        %v1539 = vpop.xlane.xlu0 %1538
        %v1540 = vsel %vm1401, %v1495, 0.0
        %1541 = vadd.xlane.f32.xlu0 %v1540
        %v1542 = vpop.xlane.xlu0 %1541
        %v1543 = vsel %vm1401, %v1497, 0.0
        %1544 = vadd.xlane.f32.xlu0 %v1543
        %v1545 = vpop.xlane.xlu0 %1544
        %v1546 = vrcp.pop %v1500
        %v1547 = vrcp.pop %v1503
        %v1548 = vrcp.pop %v1506
        %v1549 = vrcp.pop %v1509
        %v1550 = vrcp.pop %v1512
        %v1551 = vrcp.pop %v1515
        %v1552 = vrcp.pop %v1518
        %v1553 = vrcp.pop %v1521
        %v1554 = vrcp.pop %v1524
        %v1555 = vrcp.pop %v1527
        %v1556 = vrcp.pop %v1530
        %v1557 = vrcp.pop %v1533
        %v1558 = vrcp.pop %v1536
        %v1559 = vrcp.pop %v1539
        %v1560 = vrcp.pop %v1542
        %v1561 = vrcp.pop %v1545
        %v1562 = vmul.f32 %v1467, %v1546
        %v1563 = vmul.f32 %v1469, %v1547
        %v1564 = vmul.f32 %v1471, %v1548
        %v1565 = vmul.f32 %v1473, %v1549
        %v1566 = vmul.f32 %v1475, %v1550
        %v1567 = vmul.f32 %v1477, %v1551
        %v1568 = vmul.f32 %v1479, %v1552
        %v1569 = vmul.f32 %v1481, %v1553
        %v1570 = vmul.f32 %v1483, %v1554
        %v1571 = vmul.f32 %v1485, %v1555
        %v1572 = vmul.f32 %v1487, %v1556
        %v1573 = vmul.f32 %v1489, %v1557
        %v1574 = vmul.f32 %v1491, %v1558
        %v1575 = vmul.f32 %v1493, %v1559
        %v1576 = vmul.f32 %v1495, %v1560
        %v1577 = vmul.f32 %v1497, %v1561
        %v1578 = vpack.c.bf16 %v1562, %v1562
        %v1579 = vpack.c.bf16 %v1563, %v1563
        %v1580 = vpack.c.bf16 %v1564, %v1564
        %v1581 = vpack.c.bf16 %v1565, %v1565
        %v1582 = vpack.c.bf16 %v1566, %v1566
        %v1583 = vpack.c.bf16 %v1567, %v1567
        %v1584 = vpack.c.bf16 %v1568, %v1568
        %v1585 = vpack.c.bf16 %v1569, %v1569
        %v1586 = vpack.c.bf16 %v1570, %v1570
        %v1587 = vpack.c.bf16 %v1571, %v1571
        %v1588 = vpack.c.bf16 %v1572, %v1572
        %v1589 = vpack.c.bf16 %v1573, %v1573
        %v1590 = vpack.c.bf16 %v1574, %v1574
        %v1591 = vpack.c.bf16 %v1575, %v1575
        %v1592 = vpack.c.bf16 %v1576, %v1576
        %v1593 = vpack.c.bf16 %v1577, %v1577
        %v1596 = vunpack.c.l.b16 %v1578
        %v1597 = vunpack.c.l.b16 %v1579
        %v1598 = vpack.c.b16 %v1597, %v1596
        %v1600 = vsel %vm1401, %v1598, 0
        %1602 = vmatpush.bf16.msra.mxu0 0
        %1603 = vmatpush.bf16.msra.mxu0 0
        %1604 = vmatpush.bf16.msra.mxu0 0
        %1605 = vmatpush.bf16.msra.mxu0 0
        %1606 = vmatpush.bf16.msra.mxu0 0
        %1607 = vmatpush.bf16.msra.mxu0 0
        %1608 = vmatpush.bf16.msra.mxu0 0
        %1609 = vmatpush.bf16.msra.mxu0 %v1173
        %1610 = vmatmul.bf16.gmra.mxu0 %v1600
        %v1611 = vpop.f32.mrf.mxu0
        %v1612 = vadd.f32 0.0, %v1611
        %v1613 = vpop.f32.mrf.mxu0
        %v1614 = vadd.f32 0.0, %v1613
        %1615 = vdwg.mxu0
        %v1618 = vunpack.c.l.b16 %v1580
        %v1619 = vunpack.c.l.b16 %v1581
        %v1620 = vpack.c.b16 %v1619, %v1618
        %1621 = vrot.lane.b32.xlu0 %v1173, 112
        %v1622 = vpop.permute.xlu0 %1621
        %v1625 = vsel %vm1401, %v1620, 0
        %1627 = vmatpush.bf16.msra.mxu0 0
        %1628 = vmatpush.bf16.msra.mxu0 0
        %1629 = vmatpush.bf16.msra.mxu0 0
        %1630 = vmatpush.bf16.msra.mxu0 0
        %1631 = vmatpush.bf16.msra.mxu0 0
        %1632 = vmatpush.bf16.msra.mxu0 0
        %1633 = vmatpush.bf16.msra.mxu0 0
        %1634 = vmatpush.bf16.msra.mxu0 %v1622
        %1635 = vmatmul.bf16.gmra.mxu0 %v1625
        %v1636 = vpop.f32.mrf.mxu0
        %v1637 = vadd.f32 0.0, %v1636
        %v1638 = vpop.f32.mrf.mxu0
        %v1639 = vadd.f32 0.0, %v1638
        %1640 = vdwg.mxu0
        %v1643 = vunpack.c.l.b16 %v1582
        %v1644 = vunpack.c.l.b16 %v1583
        %v1645 = vpack.c.b16 %v1644, %v1643
        %1646 = vrot.lane.b32.xlu0 %v1173, 96
        %v1647 = vpop.permute.xlu0 %1646
        %v1650 = vsel %vm1401, %v1645, 0
        %1652 = vmatpush.bf16.msra.mxu0 0
        %1653 = vmatpush.bf16.msra.mxu0 0
        %1654 = vmatpush.bf16.msra.mxu0 0
        %1655 = vmatpush.bf16.msra.mxu0 0
        %1656 = vmatpush.bf16.msra.mxu0 0
        %1657 = vmatpush.bf16.msra.mxu0 0
        %1658 = vmatpush.bf16.msra.mxu0 0
        %1659 = vmatpush.bf16.msra.mxu0 %v1647
        %1660 = vmatmul.bf16.gmra.mxu0 %v1650
        %v1661 = vpop.f32.mrf.mxu0
        %v1662 = vadd.f32 0.0, %v1661
        %v1663 = vpop.f32.mrf.mxu0
        %v1664 = vadd.f32 0.0, %v1663
        %1665 = vdwg.mxu0
        %v1668 = vunpack.c.l.b16 %v1584
        %v1669 = vunpack.c.l.b16 %v1585
        %v1670 = vpack.c.b16 %v1669, %v1668
        %1671 = vrot.lane.b32.xlu0 %v1173, 80
        %v1672 = vpop.permute.xlu0 %1671
        %v1675 = vsel %vm1401, %v1670, 0
        %1677 = vmatpush.bf16.msra.mxu0 0
        %1678 = vmatpush.bf16.msra.mxu0 0
        %1679 = vmatpush.bf16.msra.mxu0 0
        %1680 = vmatpush.bf16.msra.mxu0 0
        %1681 = vmatpush.bf16.msra.mxu0 0
        %1682 = vmatpush.bf16.msra.mxu0 0
        %1683 = vmatpush.bf16.msra.mxu0 0
        %1684 = vmatpush.bf16.msra.mxu0 %v1672
        %1685 = vmatmul.bf16.gmra.mxu0 %v1675
        %v1686 = vpop.f32.mrf.mxu0
        %v1687 = vadd.f32 0.0, %v1686
        %v1688 = vpop.f32.mrf.mxu0
        %v1689 = vadd.f32 0.0, %v1688
        %1690 = vdwg.mxu0
        %v1693 = vunpack.c.l.b16 %v1586
        %v1694 = vunpack.c.l.b16 %v1587
        %v1695 = vpack.c.b16 %v1694, %v1693
        %1696 = vrot.lane.b32.xlu0 %v1173, 64
        %v1697 = vpop.permute.xlu0 %1696
        %v1700 = vsel %vm1401, %v1695, 0
        %1702 = vmatpush.bf16.msra.mxu0 0
        %1703 = vmatpush.bf16.msra.mxu0 0
        %1704 = vmatpush.bf16.msra.mxu0 0
        %1705 = vmatpush.bf16.msra.mxu0 0
        %1706 = vmatpush.bf16.msra.mxu0 0
        %1707 = vmatpush.bf16.msra.mxu0 0
        %1708 = vmatpush.bf16.msra.mxu0 0
        %1709 = vmatpush.bf16.msra.mxu0 %v1697
        %1710 = vmatmul.bf16.gmra.mxu0 %v1700
        %v1711 = vpop.f32.mrf.mxu0
        %v1712 = vadd.f32 0.0, %v1711
        %v1713 = vpop.f32.mrf.mxu0
        %v1714 = vadd.f32 0.0, %v1713
        %1715 = vdwg.mxu0
        %v1718 = vunpack.c.l.b16 %v1588
        %v1719 = vunpack.c.l.b16 %v1589
        %v1720 = vpack.c.b16 %v1719, %v1718
        %1721 = vrot.lane.b32.xlu0 %v1173, 48
        %v1722 = vpop.permute.xlu0 %1721
        %v1725 = vsel %vm1401, %v1720, 0
        %1727 = vmatpush.bf16.msra.mxu0 0
        %1728 = vmatpush.bf16.msra.mxu0 0
        %1729 = vmatpush.bf16.msra.mxu0 0
        %1730 = vmatpush.bf16.msra.mxu0 0
        %1731 = vmatpush.bf16.msra.mxu0 0
        %1732 = vmatpush.bf16.msra.mxu0 0
        %1733 = vmatpush.bf16.msra.mxu0 0
        %1734 = vmatpush.bf16.msra.mxu0 %v1722
        %1735 = vmatmul.bf16.gmra.mxu0 %v1725
        %v1736 = vpop.f32.mrf.mxu0
        %v1737 = vadd.f32 0.0, %v1736
        %v1738 = vpop.f32.mrf.mxu0
        %v1739 = vadd.f32 0.0, %v1738
        %1740 = vdwg.mxu0
        %v1743 = vunpack.c.l.b16 %v1590
        %v1744 = vunpack.c.l.b16 %v1591
        %v1745 = vpack.c.b16 %v1744, %v1743
        %1746 = vrot.lane.b32.xlu0 %v1173, 32
        %v1747 = vpop.permute.xlu0 %1746
        %v1750 = vsel %vm1401, %v1745, 0
        %1752 = vmatpush.bf16.msra.mxu0 0
        %1753 = vmatpush.bf16.msra.mxu0 0
        %1754 = vmatpush.bf16.msra.mxu0 0
        %1755 = vmatpush.bf16.msra.mxu0 0
        %1756 = vmatpush.bf16.msra.mxu0 0
        %1757 = vmatpush.bf16.msra.mxu0 0
        %1758 = vmatpush.bf16.msra.mxu0 0
        %1759 = vmatpush.bf16.msra.mxu0 %v1747
        %1760 = vmatmul.bf16.gmra.mxu0 %v1750
        %v1761 = vpop.f32.mrf.mxu0
        %v1762 = vadd.f32 0.0, %v1761
        %v1763 = vpop.f32.mrf.mxu0
        %v1764 = vadd.f32 0.0, %v1763
        %1765 = vdwg.mxu0
        %v1768 = vunpack.c.l.b16 %v1592
        %v1769 = vunpack.c.l.b16 %v1593
        %v1770 = vpack.c.b16 %v1769, %v1768
        %1771 = vrot.lane.b32.xlu0 %v1173, 16
        %v1772 = vpop.permute.xlu0 %1771
        %v1775 = vsel %vm1401, %v1770, 0
        %1777 = vmatpush.bf16.msra.mxu0 0
        %1778 = vmatpush.bf16.msra.mxu0 0
        %1779 = vmatpush.bf16.msra.mxu0 0
        %1780 = vmatpush.bf16.msra.mxu0 0
        %1781 = vmatpush.bf16.msra.mxu0 0
        %1782 = vmatpush.bf16.msra.mxu0 0
        %1783 = vmatpush.bf16.msra.mxu0 0
        %1784 = vmatpush.bf16.msra.mxu0 %v1772
        %1785 = vmatmul.bf16.gmra.mxu0 %v1775
        %v1786 = vpop.f32.mrf.mxu0
        %v1787 = vadd.f32 0.0, %v1786
        %v1788 = vpop.f32.mrf.mxu0
        %v1789 = vadd.f32 0.0, %v1788
        %1790 = vdwg.mxu0
        %1793 = vrot.lane.b32.xlu0 %v1637, 16
        %v1794 = vpop.permute.xlu0 %1793
        %1795 = vrot.lane.b32.xlu0 %v1639, 16
        %v1796 = vpop.permute.xlu0 %1795
        %1801 = vrot.lane.b32.xlu0 %v1662, 32
        %v1802 = vpop.permute.xlu0 %1801
        %1803 = vrot.lane.b32.xlu0 %v1664, 32
        %v1804 = vpop.permute.xlu0 %1803
        %1809 = vrot.lane.b32.xlu0 %v1687, 48
        %v1810 = vpop.permute.xlu0 %1809
        %1811 = vrot.lane.b32.xlu0 %v1689, 48
        %v1812 = vpop.permute.xlu0 %1811
        %1817 = vrot.lane.b32.xlu0 %v1712, 64
        %v1818 = vpop.permute.xlu0 %1817
        %1819 = vrot.lane.b32.xlu0 %v1714, 64
        %v1820 = vpop.permute.xlu0 %1819
        %1825 = vrot.lane.b32.xlu0 %v1737, 80
        %v1826 = vpop.permute.xlu0 %1825
        %1827 = vrot.lane.b32.xlu0 %v1739, 80
        %v1828 = vpop.permute.xlu0 %1827
        %1833 = vrot.lane.b32.xlu0 %v1762, 96
        %v1834 = vpop.permute.xlu0 %1833
        %1835 = vrot.lane.b32.xlu0 %v1764, 96
        %v1836 = vpop.permute.xlu0 %1835
        %1841 = vrot.lane.b32.xlu0 %v1787, 112
        %v1842 = vpop.permute.xlu0 %1841
        %1843 = vrot.lane.b32.xlu0 %v1789, 112
        %v1844 = vpop.permute.xlu0 %1843
        %v1847 = vsel %vm1401, %v1612, %v1794
        %v1848 = vsel %vm1401, %v1614, %v1796
        %vm1849 = vcmask 261120
        %v1850 = vsel %vm1849, %v1847, %v1802
        %v1851 = vsel %vm1849, %v1848, %v1804
        %vm1852 = vcmask 392192
        %v1853 = vsel %vm1852, %v1850, %v1810
        %v1854 = vsel %vm1852, %v1851, %v1812
        %vm1855 = vcmask 523264
        %v1856 = vsel %vm1855, %v1853, %v1818
        %v1857 = vsel %vm1855, %v1854, %v1820
        %vm1858 = vcmask 654336
        %v1859 = vsel %vm1858, %v1856, %v1826
        %v1860 = vsel %vm1858, %v1857, %v1828
        %vm1861 = vcmask 785408
        %v1862 = vsel %vm1861, %v1859, %v1834
        %v1863 = vsel %vm1861, %v1860, %v1836
        %vm1864 = vcmask 916480
        %v1865 = vsel %vm1864, %v1862, %v1842
        %v1866 = vsel %vm1864, %v1863, %v1844
        %v1867 = vld [vmem:[%s1010] sm:$0x1]
        %v1869 = vperm.slane %v1867, 0
        %v1871 = vadd.f32 %v1865, %v1869
        %v1872 = vadd.f32 %v1866, %v1869
        %v1873 = vadd.f32 %v1078, %v1871
        %v1874 = vadd.f32 %v1079, %v1872
        %v1875 = vld [vmem:[%s1013] sm:$0x1]
        %v1876 = vld [vmem:[%s1016] sm:$0x1]
        %v1877 = vadd.f32 %v1873, %v1874
        %v1878 = vrot.slane %v1877, 4
        %v1879 = vadd.f32 %v1877, %v1878
        %v1880 = vrot.slane %v1879, 2
        %v1881 = vadd.f32 %v1879, %v1880
        %v1882 = vrot.slane %v1881, 1
        %v1883 = vadd.f32 %v1881, %v1882
        %v1884 = vrcp.pop 16.0
        %v1885 = vmul.f32 16.0, %v1884
        %v1886 = vsub.f32 1.0, %v1885
        %v1887 = vmul.f32 %v1884, %v1886
        %v1888 = vadd.f32 %v1884, %v1887
        %vm1889 = vweird.f32 %v1884
        %v1890 = vsel %vm1889, %v1884, %v1888
        %v1891 = vmul.f32 %v1883, %v1890
        %v1892 = vsub.f32 %v1873, %v1891
        %v1893 = vsub.f32 %v1874, %v1891
        %v1894 = vmul.f32 %v1892, %v1892
        %v1895 = vmul.f32 %v1893, %v1893
        %v1896 = vadd.f32 %v1894, %v1895
        %v1897 = vrot.slane %v1896, 4
        %v1898 = vadd.f32 %v1896, %v1897
        %v1899 = vrot.slane %v1898, 2
        %v1900 = vadd.f32 %v1898, %v1899
        %v1901 = vrot.slane %v1900, 1
        %v1902 = vadd.f32 %v1900, %v1901
        %v1903 = vmul.f32 %v1902, %v1890
        %v1905 = vperm.slane %v1875, 0
        %v1907 = vmul.f32 %v1905, %v1892
        %v1908 = vmul.f32 %v1905, %v1893
        %v1909 = vadd.f32 %v1903, 1e-05
        %v1910 = vrsqrt.pop %v1909
        %v1911 = vmul.f32 %v1910, %v1909
        %v1912 = vmul.f32 %v1911, %v1910
        %v1913 = vmul.f32 0.5, %v1912
        %v1914 = vsub.f32 1.5, %v1913
        %v1915 = vmul.f32 %v1910, %v1914
        %vm1916 = vweird.f32 %v1909
        %vm1917 = vweird.f32 %v1910
        %vm1918 = vmor %vm1916, %vm1917
        %v1919 = vsel %vm1918, %v1910, %v1915
        %v1920 = vmul.f32 %v1907, %v1919
        %v1921 = vmul.f32 %v1908, %v1919
        %v1923 = vperm.slane %v1876, 0
        %v1925 = vadd.f32 %v1920, %v1923
        %v1926 = vadd.f32 %v1921, %v1923
        %v1927 = vpack.c.bf16 %v1926, %v1925
        %v1928 = vld [vmem:[%s889] sm:$0xff]
        %v1929 = vld [vmem:[%s889 + $0x8] sm:$0xff]
        %v1930 = vld [vmem:[%s889 + $0x10] sm:$0xff]
        %v1931 = vld [vmem:[%s889 + $0x18] sm:$0xff]
        %v1932 = vld [vmem:[%s889 + $0x20] sm:$0xff]
        %v1933 = vld [vmem:[%s889 + $0x28] sm:$0xff]
        %v1934 = vld [vmem:[%s889 + $0x30] sm:$0xff]
        %v1935 = vld [vmem:[%s889 + $0x38] sm:$0xff]
        %v1936 = vld [vmem:[%s889 + $0x40] sm:$0xff]
        %v1937 = vld [vmem:[%s889 + $0x48] sm:$0xff]
        %v1938 = vld [vmem:[%s889 + $0x50] sm:$0xff]
        %v1939 = vld [vmem:[%s889 + $0x58] sm:$0xff]
        %v1940 = vld [vmem:[%s889 + $0x60] sm:$0xff]
        %v1941 = vld [vmem:[%s889 + $0x68] sm:$0xff]
        %v1942 = vld [vmem:[%s889 + $0x70] sm:$0xff]
        %v1943 = vld [vmem:[%s889 + $0x78] sm:$0xff]
        %v1944 = vld [vmem:[%s889 + $0x80] sm:$0xff]
        %v1945 = vld [vmem:[%s889 + $0x88] sm:$0xff]
        %v1946 = vld [vmem:[%s889 + $0x90] sm:$0xff]
        %v1947 = vld [vmem:[%s889 + $0x98] sm:$0xff]
        %v1948 = vld [vmem:[%s889 + $0xa0] sm:$0xff]
        %v1949 = vld [vmem:[%s889 + $0xa8] sm:$0xff]
        %v1950 = vld [vmem:[%s889 + $0xb0] sm:$0xff]
        %v1951 = vld [vmem:[%s889 + $0xb8] sm:$0xff]
        %v1952 = vld [vmem:[%s889 + $0xc0] sm:$0xff]
        %v1953 = vld [vmem:[%s889 + $0xc8] sm:$0xff]
        %v1954 = vld [vmem:[%s889 + $0xd0] sm:$0xff]
        %v1955 = vld [vmem:[%s889 + $0xd8] sm:$0xff]
        %v1956 = vld [vmem:[%s889 + $0xe0] sm:$0xff]
        %v1957 = vld [vmem:[%s889 + $0xe8] sm:$0xff]
        %v1958 = vld [vmem:[%s889 + $0xf0] sm:$0xff]
        %v1959 = vld [vmem:[%s889 + $0xf8] sm:$0xff]
        %v1960 = vld [vmem:[%s1020] sm:$0xf]
        %v1962 = vperm.slane %v1960, 0
        %v1963 = vperm.slane %v1960, 1
        %v1964 = vperm.slane %v1960, 2
        %v1965 = vperm.slane %v1960, 3
        %v2002 = vunpack.c.l.b16 %v1928
        %v2003 = vunpack.c.h.b16 %v1928
        %v2004 = vunpack.c.l.b16 %v1929
        %v2005 = vunpack.c.h.b16 %v1929
        %v2006 = vunpack.c.l.b16 %v1930
        %v2007 = vunpack.c.h.b16 %v1930
        %v2008 = vunpack.c.l.b16 %v1931
        %v2009 = vunpack.c.h.b16 %v1931
        %v2010 = vunpack.c.l.b16 %v1932
        %v2011 = vunpack.c.h.b16 %v1932
        %v2012 = vunpack.c.l.b16 %v1933
        %v2013 = vunpack.c.h.b16 %v1933
        %v2014 = vunpack.c.l.b16 %v1934
        %v2015 = vunpack.c.h.b16 %v1934
        %v2016 = vunpack.c.l.b16 %v1935
        %v2017 = vunpack.c.h.b16 %v1935
        %v2018 = vunpack.c.l.b16 %v1936
        %v2019 = vunpack.c.h.b16 %v1936
        %v2020 = vunpack.c.l.b16 %v1937
        %v2021 = vunpack.c.h.b16 %v1937
        %v2022 = vunpack.c.l.b16 %v1938
        %v2023 = vunpack.c.h.b16 %v1938
        %v2024 = vunpack.c.l.b16 %v1939
        %v2025 = vunpack.c.h.b16 %v1939
        %v2026 = vunpack.c.l.b16 %v1940
        %v2027 = vunpack.c.h.b16 %v1940
        %v2028 = vunpack.c.l.b16 %v1941
        %v2029 = vunpack.c.h.b16 %v1941
        %v2030 = vunpack.c.l.b16 %v1942
        %v2031 = vunpack.c.h.b16 %v1942
        %v2032 = vunpack.c.l.b16 %v1943
        %v2033 = vunpack.c.h.b16 %v1943
        %v2034 = vunpack.c.l.b16 %v1944
        %v2035 = vunpack.c.h.b16 %v1944
        %v2036 = vunpack.c.l.b16 %v1945
        %v2037 = vunpack.c.h.b16 %v1945
        %v2038 = vunpack.c.l.b16 %v1946
        %v2039 = vunpack.c.h.b16 %v1946
        %v2040 = vunpack.c.l.b16 %v1947
        %v2041 = vunpack.c.h.b16 %v1947
        %v2042 = vunpack.c.l.b16 %v1948
        %v2043 = vunpack.c.h.b16 %v1948
        %v2044 = vunpack.c.l.b16 %v1949
        %v2045 = vunpack.c.h.b16 %v1949
        %v2046 = vunpack.c.l.b16 %v1950
        %v2047 = vunpack.c.h.b16 %v1950
        %v2048 = vunpack.c.l.b16 %v1951
        %v2049 = vunpack.c.h.b16 %v1951
        %v2050 = vunpack.c.l.b16 %v1952
        %v2051 = vunpack.c.h.b16 %v1952
        %v2052 = vunpack.c.l.b16 %v1953
        %v2053 = vunpack.c.h.b16 %v1953
        %v2054 = vunpack.c.l.b16 %v1954
        %v2055 = vunpack.c.h.b16 %v1954
        %v2056 = vunpack.c.l.b16 %v1955
        %v2057 = vunpack.c.h.b16 %v1955
        %v2058 = vunpack.c.l.b16 %v1956
        %v2059 = vunpack.c.h.b16 %v1956
        %v2060 = vunpack.c.l.b16 %v1957
        %v2061 = vunpack.c.h.b16 %v1957
        %v2062 = vunpack.c.l.b16 %v1958
        %v2063 = vunpack.c.h.b16 %v1958
        %v2064 = vunpack.c.l.b16 %v1959
        %v2065 = vunpack.c.h.b16 %v1959
        %v2066 = vpack.c.b16 %v2006, %v2002
        %v2067 = vpack.c.b16 %v2007, %v2003
        %v2068 = vpack.c.b16 %v2008, %v2004
        %v2069 = vpack.c.b16 %v2009, %v2005
        %v2070 = vpack.c.b16 %v2014, %v2010
        %v2071 = vpack.c.b16 %v2015, %v2011
        %v2072 = vpack.c.b16 %v2016, %v2012
        %v2073 = vpack.c.b16 %v2017, %v2013
        %v2074 = vpack.c.b16 %v2022, %v2018
        %v2075 = vpack.c.b16 %v2023, %v2019
        %v2076 = vpack.c.b16 %v2024, %v2020
        %v2077 = vpack.c.b16 %v2025, %v2021
        %v2078 = vpack.c.b16 %v2030, %v2026
        %v2079 = vpack.c.b16 %v2031, %v2027
        %v2080 = vpack.c.b16 %v2032, %v2028
        %v2081 = vpack.c.b16 %v2033, %v2029
        %v2082 = vpack.c.b16 %v2038, %v2034
        %v2083 = vpack.c.b16 %v2039, %v2035
        %v2084 = vpack.c.b16 %v2040, %v2036
        %v2085 = vpack.c.b16 %v2041, %v2037
        %v2086 = vpack.c.b16 %v2046, %v2042
        %v2087 = vpack.c.b16 %v2047, %v2043
        %v2088 = vpack.c.b16 %v2048, %v2044
        %v2089 = vpack.c.b16 %v2049, %v2045
        %v2090 = vpack.c.b16 %v2054, %v2050
        %v2091 = vpack.c.b16 %v2055, %v2051
        %v2092 = vpack.c.b16 %v2056, %v2052
        %v2093 = vpack.c.b16 %v2057, %v2053
        %v2094 = vpack.c.b16 %v2062, %v2058
        %v2095 = vpack.c.b16 %v2063, %v2059
        %v2096 = vpack.c.b16 %v2064, %v2060
        %v2097 = vpack.c.b16 %v2065, %v2061
        %2130 = vmatpush.bf16.msra.mxu0 %v2094
        %2131 = vmatpush.bf16.msra.mxu0 %v2090
        %2132 = vmatpush.bf16.msra.mxu0 %v2086
        %2133 = vmatpush.bf16.msra.mxu0 %v2082
        %2134 = vmatpush.bf16.msra.mxu0 %v2078
        %2135 = vmatpush.bf16.msra.mxu0 %v2074
        %2136 = vmatpush.bf16.msra.mxu0 %v2070
        %2137 = vmatpush.bf16.msra.mxu0 %v2066
        %2138 = vmatmul.bf16.gmra.mxu0 %v1927
        %v2139 = vpop.f32.mrf.mxu0
        %v2140 = vadd.f32 %v1962, %v2139
        %v2141 = vpop.f32.mrf.mxu0
        %v2142 = vadd.f32 %v1962, %v2141
        %2143 = vdwg.mxu0
        %2144 = vmatpush.bf16.msra.mxu0 %v2095
        %2145 = vmatpush.bf16.msra.mxu0 %v2091
        %2146 = vmatpush.bf16.msra.mxu0 %v2087
        %2147 = vmatpush.bf16.msra.mxu0 %v2083
        %2148 = vmatpush.bf16.msra.mxu0 %v2079
        %2149 = vmatpush.bf16.msra.mxu0 %v2075
        %2150 = vmatpush.bf16.msra.mxu0 %v2071
        %2151 = vmatpush.bf16.msra.mxu0 %v2067
        %2152 = vmatmul.bf16.gmra.mxu0 %v1927
        %v2153 = vpop.f32.mrf.mxu0
        %v2154 = vadd.f32 %v1963, %v2153
        %v2155 = vpop.f32.mrf.mxu0
        %v2156 = vadd.f32 %v1963, %v2155
        %2157 = vdwg.mxu0
        %2158 = vmatpush.bf16.msra.mxu0 %v2096
        %2159 = vmatpush.bf16.msra.mxu0 %v2092
        %2160 = vmatpush.bf16.msra.mxu0 %v2088
        %2161 = vmatpush.bf16.msra.mxu0 %v2084
        %2162 = vmatpush.bf16.msra.mxu0 %v2080
        %2163 = vmatpush.bf16.msra.mxu0 %v2076
        %2164 = vmatpush.bf16.msra.mxu0 %v2072
        %2165 = vmatpush.bf16.msra.mxu0 %v2068
        %2166 = vmatmul.bf16.gmra.mxu0 %v1927
        %v2167 = vpop.f32.mrf.mxu0
        %v2168 = vadd.f32 %v1964, %v2167
        %v2169 = vpop.f32.mrf.mxu0
        %v2170 = vadd.f32 %v1964, %v2169
        %2171 = vdwg.mxu0
        %2172 = vmatpush.bf16.msra.mxu0 %v2097
        %2173 = vmatpush.bf16.msra.mxu0 %v2093
        %2174 = vmatpush.bf16.msra.mxu0 %v2089
        %2175 = vmatpush.bf16.msra.mxu0 %v2085
        %2176 = vmatpush.bf16.msra.mxu0 %v2081
        %2177 = vmatpush.bf16.msra.mxu0 %v2077
        %2178 = vmatpush.bf16.msra.mxu0 %v2073
        %2179 = vmatpush.bf16.msra.mxu0 %v2069
        %2180 = vmatmul.bf16.gmra.mxu0 %v1927
        %v2181 = vpop.f32.mrf.mxu0
        %v2182 = vadd.f32 %v1965, %v2181
        %v2183 = vpop.f32.mrf.mxu0
        %v2184 = vadd.f32 %v1965, %v2183
        %2185 = vdwg.mxu0
        %v2186 = vmax.f32 %v2140, 0.0
        %v2187 = vmax.f32 %v2154, 0.0
        %v2188 = vmax.f32 %v2168, 0.0
        %v2189 = vmax.f32 %v2182, 0.0
        %v2190 = vmax.f32 %v2142, 0.0
        %v2191 = vmax.f32 %v2156, 0.0
        %v2192 = vmax.f32 %v2170, 0.0
        %v2193 = vmax.f32 %v2184, 0.0
        %v2194 = vpack.c.bf16 %v2190, %v2186
        %v2195 = vpack.c.bf16 %v2191, %v2187
        %v2196 = vpack.c.bf16 %v2192, %v2188
        %v2197 = vpack.c.bf16 %v2193, %v2189
        %v2198 = vld [vmem:[%s899] sm:$0xf]
        %v2199 = vld [vmem:[%s899 + $0x4] sm:$0xf]
        %v2200 = vld [vmem:[%s899 + $0x8] sm:$0xf]
        %v2201 = vld [vmem:[%s899 + $0xc] sm:$0xf]
        %v2202 = vld [vmem:[%s899 + $0x10] sm:$0xf]
        %v2203 = vld [vmem:[%s899 + $0x14] sm:$0xf]
        %v2204 = vld [vmem:[%s899 + $0x18] sm:$0xf]
        %v2205 = vld [vmem:[%s899 + $0x1c] sm:$0xf]
        %v2206 = vld [vmem:[%s899 + $0x20] sm:$0xf]
        %v2207 = vld [vmem:[%s899 + $0x24] sm:$0xf]
        %v2208 = vld [vmem:[%s899 + $0x28] sm:$0xf]
        %v2209 = vld [vmem:[%s899 + $0x2c] sm:$0xf]
        %v2210 = vld [vmem:[%s899 + $0x30] sm:$0xf]
        %v2211 = vld [vmem:[%s899 + $0x34] sm:$0xf]
        %v2212 = vld [vmem:[%s899 + $0x38] sm:$0xf]
        %v2213 = vld [vmem:[%s899 + $0x3c] sm:$0xf]
        %v2214 = vld [vmem:[%s899 + $0x40] sm:$0xf]
        %v2215 = vld [vmem:[%s899 + $0x44] sm:$0xf]
        %v2216 = vld [vmem:[%s899 + $0x48] sm:$0xf]
        %v2217 = vld [vmem:[%s899 + $0x4c] sm:$0xf]
        %v2218 = vld [vmem:[%s899 + $0x50] sm:$0xf]
        %v2219 = vld [vmem:[%s899 + $0x54] sm:$0xf]
        %v2220 = vld [vmem:[%s899 + $0x58] sm:$0xf]
        %v2221 = vld [vmem:[%s899 + $0x5c] sm:$0xf]
        %v2222 = vld [vmem:[%s899 + $0x60] sm:$0xf]
        %v2223 = vld [vmem:[%s899 + $0x64] sm:$0xf]
        %v2224 = vld [vmem:[%s899 + $0x68] sm:$0xf]
        %v2225 = vld [vmem:[%s899 + $0x6c] sm:$0xf]
        %v2226 = vld [vmem:[%s899 + $0x70] sm:$0xf]
        %v2227 = vld [vmem:[%s899 + $0x74] sm:$0xf]
        %v2228 = vld [vmem:[%s899 + $0x78] sm:$0xf]
        %v2229 = vld [vmem:[%s899 + $0x7c] sm:$0xf]
        %v2230 = vld [vmem:[%s899 + $0x80] sm:$0xf]
        %v2231 = vld [vmem:[%s899 + $0x84] sm:$0xf]
        %v2232 = vld [vmem:[%s899 + $0x88] sm:$0xf]
        %v2233 = vld [vmem:[%s899 + $0x8c] sm:$0xf]
        %v2234 = vld [vmem:[%s899 + $0x90] sm:$0xf]
        %v2235 = vld [vmem:[%s899 + $0x94] sm:$0xf]
        %v2236 = vld [vmem:[%s899 + $0x98] sm:$0xf]
        %v2237 = vld [vmem:[%s899 + $0x9c] sm:$0xf]
        %v2238 = vld [vmem:[%s899 + $0xa0] sm:$0xf]
        %v2239 = vld [vmem:[%s899 + $0xa4] sm:$0xf]
        %v2240 = vld [vmem:[%s899 + $0xa8] sm:$0xf]
        %v2241 = vld [vmem:[%s899 + $0xac] sm:$0xf]
        %v2242 = vld [vmem:[%s899 + $0xb0] sm:$0xf]
        %v2243 = vld [vmem:[%s899 + $0xb4] sm:$0xf]
        %v2244 = vld [vmem:[%s899 + $0xb8] sm:$0xf]
        %v2245 = vld [vmem:[%s899 + $0xbc] sm:$0xf]
        %v2246 = vld [vmem:[%s899 + $0xc0] sm:$0xf]
        %v2247 = vld [vmem:[%s899 + $0xc4] sm:$0xf]
        %v2248 = vld [vmem:[%s899 + $0xc8] sm:$0xf]
        %v2249 = vld [vmem:[%s899 + $0xcc] sm:$0xf]
        %v2250 = vld [vmem:[%s899 + $0xd0] sm:$0xf]
        %v2251 = vld [vmem:[%s899 + $0xd4] sm:$0xf]
        %v2252 = vld [vmem:[%s899 + $0xd8] sm:$0xf]
        %v2253 = vld [vmem:[%s899 + $0xdc] sm:$0xf]
        %v2254 = vld [vmem:[%s899 + $0xe0] sm:$0xf]
        %v2255 = vld [vmem:[%s899 + $0xe4] sm:$0xf]
        %v2256 = vld [vmem:[%s899 + $0xe8] sm:$0xf]
        %v2257 = vld [vmem:[%s899 + $0xec] sm:$0xf]
        %v2258 = vld [vmem:[%s899 + $0xf0] sm:$0xf]
        %v2259 = vld [vmem:[%s899 + $0xf4] sm:$0xf]
        %v2260 = vld [vmem:[%s899 + $0xf8] sm:$0xf]
        %v2261 = vld [vmem:[%s899 + $0xfc] sm:$0xf]
        %v2262 = vld [vmem:[%s1023] sm:$0x1]
        %v2264 = vperm.slane %v2262, 0
        %v2330 = vunpack.c.l.b16 %v2198
        %v2331 = vunpack.c.l.b16 %v2199
        %v2332 = vunpack.c.l.b16 %v2200
        %v2333 = vunpack.c.l.b16 %v2201
        %v2334 = vunpack.c.l.b16 %v2202
        %v2335 = vunpack.c.l.b16 %v2203
        %v2336 = vunpack.c.l.b16 %v2204
        %v2337 = vunpack.c.l.b16 %v2205
        %v2338 = vunpack.c.l.b16 %v2206
        %v2339 = vunpack.c.l.b16 %v2207
        %v2340 = vunpack.c.l.b16 %v2208
        %v2341 = vunpack.c.l.b16 %v2209
        %v2342 = vunpack.c.l.b16 %v2210
        %v2343 = vunpack.c.l.b16 %v2211
        %v2344 = vunpack.c.l.b16 %v2212
        %v2345 = vunpack.c.l.b16 %v2213
        %v2346 = vunpack.c.l.b16 %v2214
        %v2347 = vunpack.c.l.b16 %v2215
        %v2348 = vunpack.c.l.b16 %v2216
        %v2349 = vunpack.c.l.b16 %v2217
        %v2350 = vunpack.c.l.b16 %v2218
        %v2351 = vunpack.c.l.b16 %v2219
        %v2352 = vunpack.c.l.b16 %v2220
        %v2353 = vunpack.c.l.b16 %v2221
        %v2354 = vunpack.c.l.b16 %v2222
        %v2355 = vunpack.c.l.b16 %v2223
        %v2356 = vunpack.c.l.b16 %v2224
        %v2357 = vunpack.c.l.b16 %v2225
        %v2358 = vunpack.c.l.b16 %v2226
        %v2359 = vunpack.c.l.b16 %v2227
        %v2360 = vunpack.c.l.b16 %v2228
        %v2361 = vunpack.c.l.b16 %v2229
        %v2362 = vunpack.c.l.b16 %v2230
        %v2363 = vunpack.c.l.b16 %v2231
        %v2364 = vunpack.c.l.b16 %v2232
        %v2365 = vunpack.c.l.b16 %v2233
        %v2366 = vunpack.c.l.b16 %v2234
        %v2367 = vunpack.c.l.b16 %v2235
        %v2368 = vunpack.c.l.b16 %v2236
        %v2369 = vunpack.c.l.b16 %v2237
        %v2370 = vunpack.c.l.b16 %v2238
        %v2371 = vunpack.c.l.b16 %v2239
        %v2372 = vunpack.c.l.b16 %v2240
        %v2373 = vunpack.c.l.b16 %v2241
        %v2374 = vunpack.c.l.b16 %v2242
        %v2375 = vunpack.c.l.b16 %v2243
        %v2376 = vunpack.c.l.b16 %v2244
        %v2377 = vunpack.c.l.b16 %v2245
        %v2378 = vunpack.c.l.b16 %v2246
        %v2379 = vunpack.c.l.b16 %v2247
        %v2380 = vunpack.c.l.b16 %v2248
        %v2381 = vunpack.c.l.b16 %v2249
        %v2382 = vunpack.c.l.b16 %v2250
        %v2383 = vunpack.c.l.b16 %v2251
        %v2384 = vunpack.c.l.b16 %v2252
        %v2385 = vunpack.c.l.b16 %v2253
        %v2386 = vunpack.c.l.b16 %v2254
        %v2387 = vunpack.c.l.b16 %v2255
        %v2388 = vunpack.c.l.b16 %v2256
        %v2389 = vunpack.c.l.b16 %v2257
        %v2390 = vunpack.c.l.b16 %v2258
        %v2391 = vunpack.c.l.b16 %v2259
        %v2392 = vunpack.c.l.b16 %v2260
        %v2393 = vunpack.c.l.b16 %v2261
        %v2394 = vpack.c.b16 %v2331, %v2330
        %v2395 = vpack.c.b16 %v2333, %v2332
        %v2396 = vpack.c.b16 %v2335, %v2334
        %v2397 = vpack.c.b16 %v2337, %v2336
        %v2398 = vpack.c.b16 %v2339, %v2338
        %v2399 = vpack.c.b16 %v2341, %v2340
        %v2400 = vpack.c.b16 %v2343, %v2342
        %v2401 = vpack.c.b16 %v2345, %v2344
        %v2402 = vpack.c.b16 %v2347, %v2346
        %v2403 = vpack.c.b16 %v2349, %v2348
        %v2404 = vpack.c.b16 %v2351, %v2350
        %v2405 = vpack.c.b16 %v2353, %v2352
        %v2406 = vpack.c.b16 %v2355, %v2354
        %v2407 = vpack.c.b16 %v2357, %v2356
        %v2408 = vpack.c.b16 %v2359, %v2358
        %v2409 = vpack.c.b16 %v2361, %v2360
        %v2410 = vpack.c.b16 %v2363, %v2362
        %v2411 = vpack.c.b16 %v2365, %v2364
        %v2412 = vpack.c.b16 %v2367, %v2366
        %v2413 = vpack.c.b16 %v2369, %v2368
        %v2414 = vpack.c.b16 %v2371, %v2370
        %v2415 = vpack.c.b16 %v2373, %v2372
        %v2416 = vpack.c.b16 %v2375, %v2374
        %v2417 = vpack.c.b16 %v2377, %v2376
        %v2418 = vpack.c.b16 %v2379, %v2378
        %v2419 = vpack.c.b16 %v2381, %v2380
        %v2420 = vpack.c.b16 %v2383, %v2382
        %v2421 = vpack.c.b16 %v2385, %v2384
        %v2422 = vpack.c.b16 %v2387, %v2386
        %v2423 = vpack.c.b16 %v2389, %v2388
        %v2424 = vpack.c.b16 %v2391, %v2390
        %v2425 = vpack.c.b16 %v2393, %v2392
        %2458 = vmatpush.bf16.msra.mxu0 %v2401
        %2459 = vmatpush.bf16.msra.mxu0 %v2400
        %2460 = vmatpush.bf16.msra.mxu0 %v2399
        %2461 = vmatpush.bf16.msra.mxu0 %v2398
        %2462 = vmatpush.bf16.msra.mxu0 %v2397
        %2463 = vmatpush.bf16.msra.mxu0 %v2396
        %2464 = vmatpush.bf16.msra.mxu0 %v2395
        %2465 = vmatpush.bf16.msra.mxu0 %v2394
        %2466 = vmatmul.bf16.gmra.mxu0 %v2194
        %v2467 = vpop.f32.mrf.mxu0
        %v2468 = vadd.f32 %v2264, %v2467
        %v2469 = vpop.f32.mrf.mxu0
        %v2470 = vadd.f32 %v2264, %v2469
        %2471 = vdwg.mxu0
        %2472 = vmatpush.bf16.msra.mxu0 %v2409
        %2473 = vmatpush.bf16.msra.mxu0 %v2408
        %2474 = vmatpush.bf16.msra.mxu0 %v2407
        %2475 = vmatpush.bf16.msra.mxu0 %v2406
        %2476 = vmatpush.bf16.msra.mxu0 %v2405
        %2477 = vmatpush.bf16.msra.mxu0 %v2404
        %2478 = vmatpush.bf16.msra.mxu0 %v2403
        %2479 = vmatpush.bf16.msra.mxu0 %v2402
        %2480 = vmatmul.bf16.gmra.mxu0 %v2195
        %v2481 = vpop.f32.mrf.mxu0
        %v2482 = vadd.f32 %v2468, %v2481
        %v2483 = vpop.f32.mrf.mxu0
        %v2484 = vadd.f32 %v2470, %v2483
        %2485 = vdwg.mxu0
        %2486 = vmatpush.bf16.msra.mxu0 %v2417
        %2487 = vmatpush.bf16.msra.mxu0 %v2416
        %2488 = vmatpush.bf16.msra.mxu0 %v2415
        %2489 = vmatpush.bf16.msra.mxu0 %v2414
        %2490 = vmatpush.bf16.msra.mxu0 %v2413
        %2491 = vmatpush.bf16.msra.mxu0 %v2412
        %2492 = vmatpush.bf16.msra.mxu0 %v2411
        %2493 = vmatpush.bf16.msra.mxu0 %v2410
        %2494 = vmatmul.bf16.gmra.mxu0 %v2196
        %v2495 = vpop.f32.mrf.mxu0
        %v2496 = vadd.f32 %v2482, %v2495
        %v2497 = vpop.f32.mrf.mxu0
        %v2498 = vadd.f32 %v2484, %v2497
        %2499 = vdwg.mxu0
        %2500 = vmatpush.bf16.msra.mxu0 %v2425
        %2501 = vmatpush.bf16.msra.mxu0 %v2424
        %2502 = vmatpush.bf16.msra.mxu0 %v2423
        %2503 = vmatpush.bf16.msra.mxu0 %v2422
        %2504 = vmatpush.bf16.msra.mxu0 %v2421
        %2505 = vmatpush.bf16.msra.mxu0 %v2420
        %2506 = vmatpush.bf16.msra.mxu0 %v2419
        %2507 = vmatpush.bf16.msra.mxu0 %v2418
        %2508 = vmatmul.bf16.gmra.mxu0 %v2197
        %v2509 = vpop.f32.mrf.mxu0
        %v2510 = vadd.f32 %v2496, %v2509
        %v2511 = vpop.f32.mrf.mxu0
        %v2512 = vadd.f32 %v2498, %v2511
        %2513 = vdwg.mxu0
        %v2514 = vadd.f32 %v1925, %v2510
        %v2515 = vadd.f32 %v1926, %v2512
        %v2516 = vld [vmem:[%s1026] sm:$0x1]
        %v2517 = vld [vmem:[%s1029] sm:$0x1]
        %v2518 = vadd.f32 %v2514, %v2515
        %v2519 = vrot.slane %v2518, 4
        %v2520 = vadd.f32 %v2518, %v2519
        %v2521 = vrot.slane %v2520, 2
        %v2522 = vadd.f32 %v2520, %v2521
        %v2523 = vrot.slane %v2522, 1
        %v2524 = vadd.f32 %v2522, %v2523
        %v2525 = vmul.f32 %v2524, %v1890
        %v2526 = vsub.f32 %v2514, %v2525
        %v2527 = vsub.f32 %v2515, %v2525
        %v2528 = vmul.f32 %v2526, %v2526
        %v2529 = vmul.f32 %v2527, %v2527
        %v2530 = vadd.f32 %v2528, %v2529
        %v2531 = vrot.slane %v2530, 4
        %v2532 = vadd.f32 %v2530, %v2531
        %v2533 = vrot.slane %v2532, 2
        %v2534 = vadd.f32 %v2532, %v2533
        %v2535 = vrot.slane %v2534, 1
        %v2536 = vadd.f32 %v2534, %v2535
        %v2537 = vmul.f32 %v2536, %v1890
        %v2539 = vperm.slane %v2516, 0
        %v2541 = vmul.f32 %v2539, %v2526
        %v2542 = vmul.f32 %v2539, %v2527
        %v2543 = vadd.f32 %v2537, 1e-05
        %v2544 = vrsqrt.pop %v2543
        %v2545 = vmul.f32 %v2544, %v2543
        %v2546 = vmul.f32 %v2545, %v2544
        %v2547 = vmul.f32 0.5, %v2546
        %v2548 = vsub.f32 1.5, %v2547
        %v2549 = vmul.f32 %v2544, %v2548
        %vm2550 = vweird.f32 %v2543
        %vm2551 = vweird.f32 %v2544
        %vm2552 = vmor %vm2550, %vm2551
        %v2553 = vsel %vm2552, %v2544, %v2549
        %v2554 = vmul.f32 %v2541, %v2553
        %v2555 = vmul.f32 %v2542, %v2553
        %v2557 = vperm.slane %v2517, 0
        %v2559 = vadd.f32 %v2554, %v2557
        %v2560 = vadd.f32 %v2555, %v2557
        %2561 = vst [vmem:[#allocation2] sm:$0xff] %v2559
        %2562 = vst [vmem:[#allocation2 + $0x8] sm:$0xff] %v2560
        %p2563 = scmp.eq.s32.totalorder %s46, 2
        // Predicated region
        $region145: #{network_forward.1} parent=127 // pred_check
          %p2564 = pneg %p2563
        $region146: #{network_forward.1} parent=127 // pred_check_branch
          %2566 = sbr.rel (%p2564) target = $region148
        $region147: #{network_forward.1} parent=127 // pred_region
          %v2567 = vld [vmem:[%s15] sm:$0x1]
          %v2568 = vld [vmem:[%s16] sm:$0x1]
          %v2569 = vadd.f32 %v2559, %v2560
          %v2570 = vrot.slane %v2569, 4
          %v2571 = vadd.f32 %v2569, %v2570
          %v2572 = vrot.slane %v2571, 2
          %v2573 = vadd.f32 %v2571, %v2572
          %v2574 = vrot.slane %v2573, 1
          %v2575 = vadd.f32 %v2573, %v2574
          %v2576 = vmul.f32 %v2575, %v1890
          %v2577 = vsub.f32 %v2559, %v2576
          %v2578 = vsub.f32 %v2560, %v2576
          %v2579 = vmul.f32 %v2577, %v2577
          %v2580 = vmul.f32 %v2578, %v2578
          %v2581 = vadd.f32 %v2579, %v2580
          %v2582 = vrot.slane %v2581, 4
          %v2583 = vadd.f32 %v2581, %v2582
          %v2584 = vrot.slane %v2583, 2
          %v2585 = vadd.f32 %v2583, %v2584
          %v2586 = vrot.slane %v2585, 1
          %v2587 = vadd.f32 %v2585, %v2586
          %v2588 = vmul.f32 %v2587, %v1890
          %v2590 = vperm.slane %v2567, 0
          %v2592 = vmul.f32 %v2590, %v2577
          %v2593 = vmul.f32 %v2590, %v2578
          %v2594 = vadd.f32 %v2588, 1e-05
          %v2595 = vrsqrt.pop %v2594
          %v2596 = vmul.f32 %v2595, %v2594
          %v2597 = vmul.f32 %v2596, %v2595
          %v2598 = vmul.f32 0.5, %v2597
          %v2599 = vsub.f32 1.5, %v2598
          %v2600 = vmul.f32 %v2595, %v2599
          %vm2601 = vweird.f32 %v2594
          %vm2602 = vweird.f32 %v2595
          %vm2603 = vmor %vm2601, %vm2602
          %v2604 = vsel %vm2603, %v2595, %v2600
          %v2605 = vmul.f32 %v2592, %v2604
          %v2606 = vmul.f32 %v2593, %v2604
          %v2608 = vperm.slane %v2568, 0
          %v2610 = vadd.f32 %v2605, %v2608
          %v2611 = vadd.f32 %v2606, %v2608
          %v2612 = vpack.c.bf16 %v2611, %v2610
          %v2613 = vld [vmem:[%s17] sm:$0xf]
          %v2614 = vld [vmem:[%s17 + $0x4] sm:$0xf]
          %v2615 = vld [vmem:[%s17 + $0x8] sm:$0xf]
          %v2616 = vld [vmem:[%s17 + $0xc] sm:$0xf]
          %v2617 = vld [vmem:[%s17 + $0x10] sm:$0xf]
          %v2618 = vld [vmem:[%s17 + $0x14] sm:$0xf]
          %v2619 = vld [vmem:[%s17 + $0x18] sm:$0xf]
          %v2620 = vld [vmem:[%s17 + $0x1c] sm:$0xf]
          %v2621 = vld [vmem:[%s17 + $0x20] sm:$0xf]
          %v2622 = vld [vmem:[%s17 + $0x24] sm:$0xf]
          %v2623 = vld [vmem:[%s17 + $0x28] sm:$0xf]
          %v2624 = vld [vmem:[%s17 + $0x2c] sm:$0xf]
          %v2625 = vld [vmem:[%s17 + $0x30] sm:$0xf]
          %v2626 = vld [vmem:[%s17 + $0x34] sm:$0xf]
          %v2627 = vld [vmem:[%s17 + $0x38] sm:$0xf]
          %v2628 = vld [vmem:[%s17 + $0x3c] sm:$0xf]
          %v2629 = vld [vmem:[%s18] sm:$0x1]
          %v2631 = vperm.slane %v2629, 0
          %v2649 = vunpack.c.l.b16 %v2613
          %v2650 = vunpack.c.l.b16 %v2614
          %v2651 = vunpack.c.l.b16 %v2615
          %v2652 = vunpack.c.l.b16 %v2616
          %v2653 = vunpack.c.l.b16 %v2617
          %v2654 = vunpack.c.l.b16 %v2618
          %v2655 = vunpack.c.l.b16 %v2619
          %v2656 = vunpack.c.l.b16 %v2620
          %v2657 = vunpack.c.l.b16 %v2621
          %v2658 = vunpack.c.l.b16 %v2622
          %v2659 = vunpack.c.l.b16 %v2623
          %v2660 = vunpack.c.l.b16 %v2624
          %v2661 = vunpack.c.l.b16 %v2625
          %v2662 = vunpack.c.l.b16 %v2626
          %v2663 = vunpack.c.l.b16 %v2627
          %v2664 = vunpack.c.l.b16 %v2628
          %v2665 = vpack.c.b16 %v2650, %v2649
          %v2666 = vpack.c.b16 %v2652, %v2651
          %v2667 = vpack.c.b16 %v2654, %v2653
          %v2668 = vpack.c.b16 %v2656, %v2655
          %v2669 = vpack.c.b16 %v2658, %v2657
          %v2670 = vpack.c.b16 %v2660, %v2659
          %v2671 = vpack.c.b16 %v2662, %v2661
          %v2672 = vpack.c.b16 %v2664, %v2663
          %2681 = vmatpush.bf16.msra.mxu0 %v2672
          %2682 = vmatpush.bf16.msra.mxu0 %v2671
          %2683 = vmatpush.bf16.msra.mxu0 %v2670
          %2684 = vmatpush.bf16.msra.mxu0 %v2669
          %2685 = vmatpush.bf16.msra.mxu0 %v2668
          %2686 = vmatpush.bf16.msra.mxu0 %v2667
          %2687 = vmatpush.bf16.msra.mxu0 %v2666
          %2688 = vmatpush.bf16.msra.mxu0 %v2665
          %2689 = vmatmul.bf16.gmra.mxu0 %v2612
          %v2690 = vpop.f32.mrf.mxu0
          %v2691 = vadd.f32 %v2631, %v2690
          %v2692 = vpop.f32.mrf.mxu0
          %v2693 = vadd.f32 %v2631, %v2692
          %2694 = vdwg.mxu0
          %v2695 = vmax.f32 %v2691, 0.0
          %v2696 = vmax.f32 %v2693, 0.0
          %v2697 = vld [vmem:[%s19] sm:$0x1]
          %v2698 = vld [vmem:[%s20] sm:$0x1]
          %v2699 = vsel %vm1855, %v2695, 0.0
          %v2700 = vsel %vm1855, %v2696, 0.0
          %v2701 = vadd.f32 %v2699, %v2700
          %v2702 = vrot.slane %v2701, 4
          %v2703 = vadd.f32 %v2701, %v2702
          %v2704 = vrot.slane %v2703, 2
          %v2705 = vadd.f32 %v2703, %v2704
          %v2706 = vrot.slane %v2705, 1
          %v2707 = vadd.f32 %v2705, %v2706
          %v2708 = vmul.f32 %v2707, %v1890
          %v2709 = vsub.f32 %v2695, %v2708
          %v2710 = vsub.f32 %v2696, %v2708
          %v2711 = vmul.f32 %v2709, %v2709
          %v2712 = vmul.f32 %v2710, %v2710
          %v2713 = vsel %vm1855, %v2711, 0.0
          %v2714 = vsel %vm1855, %v2712, 0.0
          %v2715 = vadd.f32 %v2713, %v2714
          %v2716 = vrot.slane %v2715, 4
          %v2717 = vadd.f32 %v2715, %v2716
          %v2718 = vrot.slane %v2717, 2
          %v2719 = vadd.f32 %v2717, %v2718
          %v2720 = vrot.slane %v2719, 1
          %v2721 = vadd.f32 %v2719, %v2720
          %v2722 = vmul.f32 %v2721, %v1890
          %v2724 = vperm.slane %v2697, 0
          %v2726 = vmul.f32 %v2724, %v2709
          %v2727 = vmul.f32 %v2724, %v2710
          %v2728 = vadd.f32 %v2722, 1e-05
          %v2729 = vrsqrt.pop %v2728
          %v2730 = vmul.f32 %v2729, %v2728
          %v2731 = vmul.f32 %v2730, %v2729
          %v2732 = vmul.f32 0.5, %v2731
          %v2733 = vsub.f32 1.5, %v2732
          %v2734 = vmul.f32 %v2729, %v2733
          %vm2735 = vweird.f32 %v2728
          %vm2736 = vweird.f32 %v2729
          %vm2737 = vmor %vm2735, %vm2736
          %v2738 = vsel %vm2737, %v2729, %v2734
          %v2739 = vmul.f32 %v2726, %v2738
          %v2740 = vmul.f32 %v2727, %v2738
          %v2742 = vperm.slane %v2698, 0
          %v2744 = vadd.f32 %v2739, %v2742
          %v2745 = vadd.f32 %v2740, %v2742
          %v2746 = vpack.c.bf16 %v2745, %v2744
          %v2747 = vld [vmem:[%s21] sm:$0xf]
          %v2748 = vld [vmem:[%s21 + $0x4] sm:$0xf]
          %v2749 = vld [vmem:[%s21 + $0x8] sm:$0xf]
          %v2750 = vld [vmem:[%s21 + $0xc] sm:$0xf]
          %v2751 = vld [vmem:[%s21 + $0x10] sm:$0xf]
          %v2752 = vld [vmem:[%s21 + $0x14] sm:$0xf]
          %v2753 = vld [vmem:[%s21 + $0x18] sm:$0xf]
          %v2754 = vld [vmem:[%s21 + $0x1c] sm:$0xf]
          %v2755 = vld [vmem:[%s22] sm:$0x1]
          %v2757 = vperm.slane %v2755, 0
          %v2767 = vunpack.c.l.b16 %v2747
          %v2768 = vunpack.c.l.b16 %v2748
          %v2769 = vunpack.c.l.b16 %v2749
          %v2770 = vunpack.c.l.b16 %v2750
          %v2771 = vunpack.c.l.b16 %v2751
          %v2772 = vunpack.c.l.b16 %v2752
          %v2773 = vunpack.c.l.b16 %v2753
          %v2774 = vunpack.c.l.b16 %v2754
          %v2775 = vpack.c.b16 %v2768, %v2767
          %v2776 = vpack.c.b16 %v2770, %v2769
          %v2777 = vpack.c.b16 %v2772, %v2771
          %v2778 = vpack.c.b16 %v2774, %v2773
          %v2784 = vsel %vm1855, %v2746, 0
          %2786 = vmatpush.bf16.msra.mxu0 0
          %2787 = vmatpush.bf16.msra.mxu0 0
          %2788 = vmatpush.bf16.msra.mxu0 0
          %2789 = vmatpush.bf16.msra.mxu0 0
          %2790 = vmatpush.bf16.msra.mxu0 %v2778
          %2791 = vmatpush.bf16.msra.mxu0 %v2777
          %2792 = vmatpush.bf16.msra.mxu0 %v2776
          %2793 = vmatpush.bf16.msra.mxu0 %v2775
          %2794 = vmatmul.bf16.gmra.mxu0 %v2784
          %v2795 = vpop.f32.mrf.mxu0
          %v2796 = vadd.f32 %v2757, %v2795
          %v2797 = vpop.f32.mrf.mxu0
          %v2798 = vadd.f32 %v2757, %v2797
          %2799 = vdwg.mxu0
          %v2800 = vmax.f32 %v2796, 0.0
          %v2801 = vmax.f32 %v2798, 0.0
          %v2802 = vld [vmem:[%s23] sm:$0x1]
          %v2803 = vld [vmem:[%s24] sm:$0x1]
          %v2804 = vsel %vm1849, %v2800, 0.0
          %v2805 = vsel %vm1849, %v2801, 0.0
          %v2806 = vadd.f32 %v2804, %v2805
          %v2807 = vrot.slane %v2806, 4
          %v2808 = vadd.f32 %v2806, %v2807
          %v2809 = vrot.slane %v2808, 2
          %v2810 = vadd.f32 %v2808, %v2809
          %v2811 = vrot.slane %v2810, 1
          %v2812 = vadd.f32 %v2810, %v2811
          %v2813 = vmul.f32 %v2812, %v1890
          %v2814 = vsub.f32 %v2800, %v2813
          %v2815 = vsub.f32 %v2801, %v2813
          %v2816 = vmul.f32 %v2814, %v2814
          %v2817 = vmul.f32 %v2815, %v2815
          %v2818 = vsel %vm1849, %v2816, 0.0
          %v2819 = vsel %vm1849, %v2817, 0.0
          %v2820 = vadd.f32 %v2818, %v2819
          %v2821 = vrot.slane %v2820, 4
          %v2822 = vadd.f32 %v2820, %v2821
          %v2823 = vrot.slane %v2822, 2
          %v2824 = vadd.f32 %v2822, %v2823
          %v2825 = vrot.slane %v2824, 1
          %v2826 = vadd.f32 %v2824, %v2825
          %v2827 = vmul.f32 %v2826, %v1890
          %v2829 = vperm.slane %v2802, 0
          %v2831 = vmul.f32 %v2829, %v2814
          %v2832 = vmul.f32 %v2829, %v2815
          %v2833 = vadd.f32 %v2827, 1e-05
          %v2834 = vrsqrt.pop %v2833
          %v2835 = vmul.f32 %v2834, %v2833
          %v2836 = vmul.f32 %v2835, %v2834
          %v2837 = vmul.f32 0.5, %v2836
          %v2838 = vsub.f32 1.5, %v2837
          %v2839 = vmul.f32 %v2834, %v2838
          %vm2840 = vweird.f32 %v2833
          %vm2841 = vweird.f32 %v2834
          %vm2842 = vmor %vm2840, %vm2841
          %v2843 = vsel %vm2842, %v2834, %v2839
          %v2844 = vmul.f32 %v2831, %v2843
          %v2845 = vmul.f32 %v2832, %v2843
          %v2847 = vperm.slane %v2803, 0
          %v2849 = vadd.f32 %v2844, %v2847
          %v2850 = vadd.f32 %v2845, %v2847
          %v2851 = vld [vmem:[%s25] sm:$0x1]
          %v2853 = vperm.slane %v2851, 0
          %v2855 = vmul.f32 %v2849, %v2853
          %v2856 = vmul.f32 %v2850, %v2853
          %v2857 = vsel %vm1849, %v2855, 0.0
          %2858 = vadd.xlane.f32.xlu0 %v2857
          %v2859 = vpop.xlane.xlu0 %2858
          %v2860 = vsel %vm1849, %v2856, 0.0
          %2861 = vadd.xlane.f32.xlu0 %v2860
          %v2862 = vpop.xlane.xlu0 %2861
          %v2863 = vld [vmem:[#allocation3] sm:$0x1]
          %v2865 = vperm.slane %v2863, 0
          %v2867 = vadd.f32 %v2859, %v2865
          %v2868 = vadd.f32 %v2862, %v2865
          %v2869 = vsub.f32 0.0, %v2867
          %v2870 = vsub.f32 0.0, %v2868
          %v2871 = vmul.f32 %v2869, 1.442695
          %v2872 = vpow.pop %v2871
          %v2873 = vmul.f32 %v2870, 1.442695
          %v2874 = vpow.pop %v2873
          %v2875 = vadd.f32 %v2872, 1.0
          %v2876 = vadd.f32 %v2874, 1.0
          %v2877 = vrcp.pop %v2875
          %v2878 = vmul.f32 %v2875, %v2877
          %v2879 = vsub.f32 1.0, %v2878
          %v2880 = vmul.f32 %v2877, %v2879
          %v2881 = vadd.f32 %v2877, %v2880
          %vm2882 = vweird.f32 %v2875
          %vm2883 = vweird.f32 %v2877
          %vm2884 = vmor %vm2882, %vm2883
          %v2885 = vsel %vm2884, %v2877, %v2881
          %v2886 = vand.u32 2147483647, %v2875
          %vm2887 = vcmp.eq.f32.partialorder %v2886, 8.507059e+37
          %v2888 = vand.u32 %v2875, 2147483648
          %v2889 = vor.u32 1.1754944e-38, %v2888
          %v2890 = vsel %vm2887, %v2889, %v2885
          %v2891 = vmul.f32 1.0, %v2890
          %v2892 = vrcp.pop %v2876
          %v2893 = vmul.f32 %v2876, %v2892
          %v2894 = vsub.f32 1.0, %v2893
          %v2895 = vmul.f32 %v2892, %v2894
          %v2896 = vadd.f32 %v2892, %v2895
          %vm2897 = vweird.f32 %v2876
          %vm2898 = vweird.f32 %v2892
          %vm2899 = vmor %vm2897, %vm2898
          %v2900 = vsel %vm2899, %v2892, %v2896
          %v2901 = vand.u32 2147483647, %v2876
          %vm2902 = vcmp.eq.f32.partialorder %v2901, 8.507059e+37
          %v2903 = vand.u32 %v2876, 2147483648
          %v2904 = vor.u32 1.1754944e-38, %v2903
          %v2905 = vsel %vm2902, %v2904, %v2900
          %v2906 = vmul.f32 1.0, %v2905
          %vm2907 = vcmask 7168
          %2908 = vst.msk [vmem:[%s27] sm:$0xff] %vm2907, %v2891
          %2909 = vst.msk [vmem:[%s27 + $0x8] sm:$0xff] %vm2907, %v2906
        $region148: #{network_forward.1} parent=127 // pred_fallthru
          _
        // Predicated region
        $region149: #{network_forward.1} parent=127 // pred_check
          %p2910 = pneg %p681
        $region150: #{network_forward.1} parent=127 // pred_check_branch
          %2912 = sbr.rel (%p2910) target = $region152
        $region151: #{network_forward.1} parent=127 // pred_region
          _
        $region152: #{network_forward.1} parent=127 // pred_fallthru
          _
        // Predicated region
        $region153: #{network_forward.1} parent=127 // pred_check
          %p2913 = pneg %p681
        $region154: #{network_forward.1} parent=127 // pred_check_branch
          %2915 = sbr.rel (%p2913) target = $region156
        $region155: #{network_forward.1} parent=127 // pred_region
          _
        $region156: #{network_forward.1} parent=127 // pred_fallthru
          _
      $region128: #{network_forward.1} parent=5 // pred_fallthru
        _
      %p2916 = scmp.le.s32.totalorder 2, %s41
      // Predicated region
      $region157: #{network_forward.1} parent=5 // pred_check
        %p2917 = pneg %p2916
      $region158: #{network_forward.1} parent=5 // pred_check_branch
        %2919 = sbr.rel (%p2917) target = $region160
      $region159: #{network_forward.1} parent=5 // pred_region
        %s2920 = ssub.s32 %s41, 2
      $region160: #{network_forward.1} parent=5 // pred_fallthru
        _
    $region6: #{network_forward.1} parent=1 // loop_footer
      %s45 = sadd.s32 1, %s41
    $region7: #{network_forward.1} parent=1 // loop_footer_branch
      %40 = sbr.rel target = $region3
    $region8: #{network_forward.1} parent=1 // loop_exit
      _
    %2921 = vsyncpa [#allocation5], 1
    %s2922 = scalar_lea.sflag [#allocation5], 1
    %2923 = vsyncpa %s2922, 1
    %2924 = vsyncpa [#allocation7], 1
    %s2925 = scalar_lea.sflag [#allocation7], 1
    %2926 = vsyncpa %s2925, 1

</llo_original>
